<compile_context>
chip_gen: v7x
topology: tpu7x:2x2x1
jax: 0.10.0
libtpu: 0.0.40
codegen_flags: <defaults>
</compile_context>

<pallas_src>
import functools

import jax
import jax.numpy as jnp
from jax.experimental import pallas as pl
from jax.experimental.pallas import tpu as pltpu


# ----------------------------------------------------------------------------
# Helpers (XLA-side glue)
# ----------------------------------------------------------------------------
def _pick_tm(m):
    """Row tile: half of M (two parallel blocks -> both v7x cores) when cleanly
    divisible, otherwise the full M (single block, no per-step grid overhead).
    Multiples of 16 keep bf16 sublane packing aligned."""
    if m % 2 == 0 and (m // 2) % 16 == 0:
        return m // 2
    return m


def im2col(x_nhwc, k, pad):
    """x: (N, H, W, C) -> (N*H*W, k*k*C), stride 1, symmetric pad."""
    N, H, W, C = x_nhwc.shape
    xp = jnp.pad(x_nhwc, ((0, 0), (pad, pad), (pad, pad), (0, 0)))
    patches = []
    for di in range(k):
        for dj in range(k):
            patches.append(xp[:, di:di + H, dj:dj + W, :])
    p = jnp.stack(patches, axis=3)           # (N, H, W, k*k, C)
    return p.reshape(N * H * W, k * k * C)


def conv_w_to_mat(w_oikk):
    """PyTorch conv weight (O, I, kh, kw) -> GEMM weight (kh*kw*I, O)."""
    O, I, kh, kw = w_oikk.shape
    return jnp.transpose(w_oikk, (2, 3, 1, 0)).reshape(kh * kw * I, O)


# ----------------------------------------------------------------------------
# Kernel A: fused CNN + ConvRNN recurrence + fin_conv/BN/Tanh - thresh3
# ----------------------------------------------------------------------------
def _cnn_rnn_fin_kernel(cols_ref, cnn_w_ref, cnn_b_ref, rnn_w_ref, rnn_b_ref,
                        wq_ref, s_ref, y_ref, sh_ref, *, feat_dim):
    t = pl.program_id(1)

    @pl.when(t == 0)
    def _():
        sh_ref[...] = jnp.zeros_like(sh_ref)        # h_0 = 0

    # --- CNN: 3x3 conv as one im2col GEMM for this timestep (+bias, ReLU) ----
    feat = jnp.dot(cols_ref[0], cnn_w_ref[...],
                   preferred_element_type=jnp.float32)
    feat = jnp.maximum(feat + cnn_b_ref[...], 0.0)
    sh_ref[:, :feat_dim] = feat                     # left half of [feat | h]

    # --- ConvRNN cell: single MXU op, [feat | h_prev] @ [Wxh; Whh] -----------
    acc = jnp.dot(sh_ref[...].astype(jnp.bfloat16), rnn_w_ref[...],
                  preferred_element_type=jnp.float32)
    h_new = jnp.tanh(acc + rnn_b_ref[...])
    sh_ref[:, feat_dim:] = h_new                    # carry hidden state in VMEM

    # --- last timestep: quantized fin_conv + BatchNorm(eval) + Tanh - thresh3
    @pl.when(t == pl.num_programs(1) - 1)
    def _():
        v = jnp.dot(h_new.astype(jnp.bfloat16), wq_ref[...],
                    preferred_element_type=jnp.float32)
        y_ref[...] = jnp.tanh(v * s_ref[0] + s_ref[1]) - s_ref[2]


def cnn_rnn_fin(cols, cnn_w, cnn_b, rnn_w, rnn_b, w_q, s, *, M):
    TS, _, K1 = cols.shape
    F = cnn_w.shape[1]
    R = rnn_w.shape[1]
    tm = _pick_tm(M)
    return pl.pallas_call(
        functools.partial(_cnn_rnn_fin_kernel, feat_dim=F),
        out_shape=jax.ShapeDtypeStruct((M, 1), jnp.float32),
        grid_spec=pltpu.PrefetchScalarGridSpec(
            num_scalar_prefetch=0,
            grid=(M // tm, TS),
            in_specs=[
                pl.BlockSpec((1, tm, K1), lambda i, t: (t, i, 0)),
                pl.BlockSpec((K1, F), lambda i, t: (0, 0)),
                pl.BlockSpec((1, F), lambda i, t: (0, 0)),
                pl.BlockSpec((F + R, R), lambda i, t: (0, 0)),
                pl.BlockSpec((1, R), lambda i, t: (0, 0)),
                pl.BlockSpec((R, 1), lambda i, t: (0, 0)),
                pl.BlockSpec(memory_space=pltpu.MemorySpace.SMEM),
            ],
            out_specs=pl.BlockSpec((tm, 1), lambda i, t: (i, 0)),
            scratch_shapes=[pltpu.VMEM((tm, F + R), jnp.float32)]),
        compiler_params=pltpu.CompilerParams(
            dimension_semantics=("parallel", "arbitrary"),
            vmem_limit_bytes=32 * 1024 * 1024),
    )(cols, cnn_w, cnn_b, rnn_w, rnn_b, w_q, s)


# ----------------------------------------------------------------------------
# Kernel B: generic GEMM + bias + ReLU (used for post_conv1)
# ----------------------------------------------------------------------------
def _gemm_bias_relu_kernel(x_ref, w_ref, b_ref, o_ref):
    acc = jnp.dot(x_ref[...], w_ref[...], preferred_element_type=jnp.float32)
    o_ref[...] = jnp.maximum(acc + b_ref[...], 0.0).astype(o_ref.dtype)


def gemm_bias_relu(x, w, b, out_dtype=jnp.bfloat16):
    M, K = x.shape
    _, N = w.shape
    tm = _pick_tm(M)
    return pl.pallas_call(
        _gemm_bias_relu_kernel,
        out_shape=jax.ShapeDtypeStruct((M, N), out_dtype),
        grid_spec=pltpu.PrefetchScalarGridSpec(
            num_scalar_prefetch=0,
            grid=(M // tm,),
            in_specs=[pl.BlockSpec((tm, K), lambda i: (i, 0)),
                      pl.BlockSpec((K, N), lambda i: (0, 0)),
                      pl.BlockSpec((1, N), lambda i: (0, 0))],
            out_specs=pl.BlockSpec((tm, N), lambda i: (i, 0))),
        compiler_params=pltpu.CompilerParams(
            dimension_semantics=("parallel",)),
    )(x, w, b)


# ----------------------------------------------------------------------------
# Kernel C: post_conv2 (5x5, 16->1) + ReLU fused with the final Linear layer
# ----------------------------------------------------------------------------
def _pc2_fc_kernel(cols_ref, w2_ref, b2_ref, fcw_ref, fcb_ref, o_ref):
    # post_conv2 as im2col GEMM; the (HW, 1) result never leaves VMEM.
    y2 = jnp.dot(cols_ref[0], w2_ref[...], preferred_element_type=jnp.float32)
    y2 = jnp.maximum(y2 + b2_ref[...], 0.0)                       # (HW, 1)
    # fc: logits = y2_flat @ fc_w.T + fc_b  (broadcast-mult + sublane reduce).
    logits = jnp.sum(y2 * fcw_ref[...], axis=0, keepdims=True) + fcb_ref[...]
    o_ref[0] = logits


def pc2_fc(cols2, w2, b2, fc_wT, fc_b):
    B, HW, K2 = cols2.shape
    NC = fc_wT.shape[1]
    out = pl.pallas_call(
        _pc2_fc_kernel,
        out_shape=jax.ShapeDtypeStruct((B, 1, NC), jnp.float32),
        grid_spec=pltpu.PrefetchScalarGridSpec(
            num_scalar_prefetch=0,
            grid=(B,),
            in_specs=[pl.BlockSpec((1, HW, K2), lambda b: (b, 0, 0)),
                      pl.BlockSpec((K2, 1), lambda b: (0, 0)),
                      pl.BlockSpec((1, 1), lambda b: (0, 0)),
                      pl.BlockSpec((HW, NC), lambda b: (0, 0)),
                      pl.BlockSpec((1, NC), lambda b: (0, 0))],
            out_specs=pl.BlockSpec((1, 1, NC), lambda b: (b, 0, 0))),
        compiler_params=pltpu.CompilerParams(
            dimension_semantics=("parallel",)),
    )(cols2, w2, b2, fc_wT, fc_b)
    return out.reshape(B, NC)


# ----------------------------------------------------------------------------
# Model: deterministic parameter init + forward
# ----------------------------------------------------------------------------
def init_params(key, c_in, cnn_ch, rnn_hidden, hw, num_classes):
    ks = jax.random.split(key, 12)
    n = lambda k, shp, s=0.1: s * jax.random.normal(k, shp, jnp.float32)
    return {
        # synthetic cnn_model: Conv2d(c_in, cnn_ch, 3, pad=1) + ReLU
        "cnn_w": n(ks[0], (cnn_ch, c_in, 3, 3)),
        "cnn_b": n(ks[1], (cnn_ch,)),
        # synthetic rnn_model: ConvRNN cell with 1x1 convs
        "wxh": n(ks[2], (rnn_hidden, cnn_ch, 1, 1)),
        "whh": n(ks[3], (rnn_hidden, rnn_hidden, 1, 1)),
        "rnn_b": n(ks[4], (rnn_hidden,)),
        # fin_conv: Conv2d(rnn_hidden, 1, 1, bias=False)
        "fin_w": n(ks[5], (1, rnn_hidden, 1, 1)),
        # BatchNorm2d(1) (eval-mode) + thresh3
        "bn_gamma": jnp.ones((1,), jnp.float32),
        "bn_beta": jnp.zeros((1,), jnp.float32),
        "bn_mean": jnp.zeros((1,), jnp.float32),
        "bn_var": jnp.ones((1,), jnp.float32),
        "thresh3": jnp.zeros((1,), jnp.float32),
        # post_conv1: Conv2d(1, 16, 5, pad=2) ; post_conv2: Conv2d(16, 1, 5, pad=2)
        "pc1_w": n(ks[6], (16, 1, 5, 5)),
        "pc1_b": n(ks[7], (16,)),
        "pc2_w": n(ks[8], (1, 16, 5, 5)),
        "pc2_b": n(ks[9], (1,)),
        # fc: Linear(H*W, num_classes)   (im_out_size**2 with 1 output channel)
        "fc_w": n(ks[10], (num_classes, hw * hw)),
        "fc_b": n(ks[11], (num_classes,)),
    }


def forward(params, x_btchw):
    """x: (B, TS, C, H, W) float32 -> (B, num_classes)."""
    B, TS, C, H, W = x_btchw.shape
    M = B * H * W
    F = params["cnn_w"].shape[0]
    R = params["whh"].shape[0]
    NC = params["fc_w"].shape[0]

    # ---- weight prep (trace-time XLA; bf16 MXU operands, f32 epilogue) -------
    cnn_w = conv_w_to_mat(params["cnn_w"]).astype(jnp.bfloat16)          # (9C, F)
    cnn_b = params["cnn_b"].reshape(1, F).astype(jnp.float32)
    rnn_w = jnp.concatenate([conv_w_to_mat(params["wxh"]),
                             conv_w_to_mat(params["whh"])],
                            axis=0).astype(jnp.bfloat16)                 # (F+R, R)
    rnn_b = params["rnn_b"].reshape(1, R).astype(jnp.float32)
    # TODO(synk): sign() stands in for the external `final_conv_method`
    #             quantizer; note sign(0) = 0 whereas some binarizers map 0->+1.
    w_q = jnp.sign(conv_w_to_mat(params["fin_w"])).astype(jnp.bfloat16)  # (R, 1)
    eps = 1e-5
    bn_scale = params["bn_gamma"] / jnp.sqrt(params["bn_var"] + eps)
    bn_shift = params["bn_beta"] - params["bn_mean"] * bn_scale
    s = jnp.concatenate([bn_scale.reshape(1), bn_shift.reshape(1),
                         params["thresh3"].reshape(1)]).astype(jnp.float32)

    # ---- Kernel A: CNN + ConvRNN recurrence + fin_conv/BN/Tanh - thresh3 -----
    # The 3x3-conv im2col is built once for ALL timesteps (time-independent);
    # only the true recurrence stays serial (TS grid axis inside one kernel).
    xt = jnp.transpose(x_btchw, (1, 0, 3, 4, 2)).reshape(TS * B, H, W, C)
    cols = im2col(xt, 3, 1).reshape(TS, M, 9 * C).astype(jnp.bfloat16)
    y = cnn_rnn_fin(cols, cnn_w, cnn_b, rnn_w, rnn_b, w_q, s, M=M)       # (M, 1)

    # ---- Kernel B: post_conv1 (5x5, 1->16) + ReLU ----------------------------
    cols1 = im2col(y.reshape(B, H, W, 1), 5, 2).astype(jnp.bfloat16)     # (M, 25)
    w1 = conv_w_to_mat(params["pc1_w"]).astype(jnp.bfloat16)             # (25, 16)
    b1 = params["pc1_b"].reshape(1, -1).astype(jnp.float32)
    y1 = gemm_bias_relu(cols1, w1, b1)                                   # (M, 16) bf16

    # ---- Kernel C: post_conv2 (5x5, 16->1) + ReLU + fc (fused) ---------------
    C1 = params["pc1_w"].shape[0]
    cols2 = im2col(y1.reshape(B, H, W, C1), 5, 2).reshape(
        B, H * W, 25 * C1).astype(jnp.bfloat16)                          # (B, HW, 400)
    w2 = conv_w_to_mat(params["pc2_w"]).astype(jnp.bfloat16)             # (400, 1)
    b2 = params["pc2_b"].reshape(1, 1).astype(jnp.float32)
    fc_wT = params["fc_w"].T.astype(jnp.float32)                         # (HW, NC)
    fc_b = params["fc_b"].reshape(1, NC).astype(jnp.float32)
    return pc2_fc(cols2, w2, b2, fc_wT, fc_b)                            # (B, NC)


# ----------------------------------------------------------------------------
if __name__ == "__main__":
    B, TS, C, H, W = 2, 3, 1, 16, 16
    CNN_CH, RNN_HIDDEN, NUM_CLASSES = 8, 8, 10

    key = jax.random.PRNGKey(0)
    kp, kx = jax.random.split(key)
    params = init_params(kp, C, CNN_CH, RNN_HIDDEN, H, NUM_CLASSES)
    x = jax.random.normal(kx, (B, TS, C, H, W), jnp.float32)

    out = jax.jit(forward)(params, x)
    out = jax.block_until_ready(out)
    assert out.shape == (B, NUM_CLASSES)
    assert bool(jnp.all(jnp.isfinite(out)))
    print("KERNEL_OK")
</pallas_src>

<mosaic_0001>
module attributes {stable_mosaic.version = 11 : i64} {
  func.func @_cnn_rnn_fin_kernel(%arg0: i32, %arg1: i32, %arg2: memref<1x256x9xbf16, #tpu.memory_space<vmem>>, %arg3: memref<9x8xbf16, #tpu.memory_space<vmem>>, %arg4: memref<1x8xf32, #tpu.memory_space<vmem>>, %arg5: memref<16x8xbf16, #tpu.memory_space<vmem>>, %arg6: memref<1x8xf32, #tpu.memory_space<vmem>>, %arg7: memref<8x1xbf16, #tpu.memory_space<vmem>>, %arg8: memref<3xf32, #tpu.memory_space<smem>>, %arg9: memref<256x1xf32, #tpu.memory_space<vmem>>, %arg10: memref<256x16xf32, #tpu.memory_space<vmem>>) attributes {dimension_semantics = [#tpu.dimension_semantics<parallel>, #tpu.dimension_semantics<arbitrary>], iteration_bounds = array<i64: 2, 3>, scalar_prefetch = 0 : i64, scratch_operands = 1 : i64, tpu.core_type = #tpu.core_type<tc>, window_params = [{transform_indices = @transform_0, window_bounds = array<i64: 1, 256, 9>}, {pipeline_mode = #tpu.pipeline_mode<synchronous>, transform_indices = @transform_1, window_bounds = array<i64: 9, 8>}, {pipeline_mode = #tpu.pipeline_mode<synchronous>, transform_indices = @transform_2, window_bounds = array<i64: 1, 8>}, {pipeline_mode = #tpu.pipeline_mode<synchronous>, transform_indices = @transform_3, window_bounds = array<i64: 16, 8>}, {pipeline_mode = #tpu.pipeline_mode<synchronous>, transform_indices = @transform_4, window_bounds = array<i64: 1, 8>}, {pipeline_mode = #tpu.pipeline_mode<synchronous>, transform_indices = @transform_5, window_bounds = array<i64: 8, 1>}, {transform_indices = @transform_6, window_bounds = array<i64: 3>}, {transform_indices = @transform_7, window_bounds = array<i64: 256, 1>}]} {
    %c0_i32 = arith.constant 0 : i32
    %0 = arith.cmpi eq, %arg1, %c0_i32 : i32
    %1 = arith.extui %0 : i1 to i32
    %c0_i32_0 = arith.constant 0 : i32
    %2 = arith.cmpi ne, %1, %c0_i32_0 : i32
    scf.if %2 {
      %cst_19 = arith.constant 0.000000e+00 : f32
      %25 = vector.broadcast %cst_19 : f32 to vector<256x16xf32>
      %c0_20 = arith.constant 0 : index
      %c0_21 = arith.constant 0 : index
      %26 = vector.load %arg10[%c0_20, %c0_21] : memref<256x16xf32, #tpu.memory_space<vmem>>, vector<256x16xf32>
      tpu.vector_store %arg10[%c0_20, %c0_21], %25 {strides = array<i32>} : memref<256x16xf32, #tpu.memory_space<vmem>>, vector<256x16xf32>,
    } else {
    }
    %c0 = arith.constant 0 : index
    %c0_1 = arith.constant 0 : index
    %c0_2 = arith.constant 0 : index
    %3 = vector.load %arg2[%c0, %c0_1, %c0_2] : memref<1x256x9xbf16, #tpu.memory_space<vmem>>, vector<1x256x9xbf16>
    %4 = vector.shape_cast %3 : vector<1x256x9xbf16> to vector<256x9xbf16>
    %c0_3 = arith.constant 0 : index
    %c0_4 = arith.constant 0 : index
    %5 = vector.load %arg3[%c0_3, %c0_4] : memref<9x8xbf16, #tpu.memory_space<vmem>>, vector<9x8xbf16>
    %cst = arith.constant dense<0.000000e+00> : vector<256x8xf32>
    %6 = tpu.matmul %4, %5, %cst {dimension_numbers = #tpu.dot_dimension_numbers<[1], [0], [0], [1], [0, 0, 1, 1], [], []>} : vector<256x9xbf16>, vector<9x8xbf16>, vector<256x8xf32> -> vector<256x8xf32>
    %c0_5 = arith.constant 0 : index
    %c0_6 = arith.constant 0 : index
    %7 = vector.load %arg4[%c0_5, %c0_6] : memref<1x8xf32, #tpu.memory_space<vmem>>, vector<1x8xf32>
    %8 = vector.broadcast %7 : vector<1x8xf32> to vector<256x8xf32>
    %9 = arith.addf %6, %8 : vector<256x8xf32>
    %cst_7 = arith.constant 0.000000e+00 : f32
    %10 = vector.broadcast %cst_7 : f32 to vector<256x8xf32>
    %11 = arith.maximumf %9, %10 : vector<256x8xf32>
    %c0_8 = arith.constant 0 : index
    %c0_9 = arith.constant 0 : index
    %12 = vector.load %arg10[%c0_8, %c0_9] : memref<256x16xf32, #tpu.memory_space<vmem>>, vector<256x8xf32>
    tpu.vector_store %arg10[%c0_8, %c0_9], %11 {strides = array<i32>} : memref<256x16xf32, #tpu.memory_space<vmem>>, vector<256x8xf32>,
    %c0_10 = arith.constant 0 : index
    %c0_11 = arith.constant 0 : index
    %13 = vector.load %arg10[%c0_10, %c0_11] : memref<256x16xf32, #tpu.memory_space<vmem>>, vector<256x16xf32>
    %14 = arith.truncf %13 : vector<256x16xf32> to vector<256x16xbf16>
    %c0_12 = arith.constant 0 : index
    %c0_13 = arith.constant 0 : index
    %15 = vector.load %arg5[%c0_12, %c0_13] : memref<16x8xbf16, #tpu.memory_space<vmem>>, vector<16x8xbf16>
    %cst_14 = arith.constant dense<0.000000e+00> : vector<256x8xf32>
    %16 = tpu.matmul %14, %15, %cst_14 {dimension_numbers = #tpu.dot_dimension_numbers<[1], [0], [0], [1], [0, 0, 1, 1], [], []>} : vector<256x16xbf16>, vector<16x8xbf16>, vector<256x8xf32> -> vector<256x8xf32>
    %c0_15 = arith.constant 0 : index
    %c0_16 = arith.constant 0 : index
    %17 = vector.load %arg6[%c0_15, %c0_16] : memref<1x8xf32, #tpu.memory_space<vmem>>, vector<1x8xf32>
    %18 = vector.broadcast %17 : vector<1x8xf32> to vector<256x8xf32>
    %19 = arith.addf %16, %18 : vector<256x8xf32>
    %20 = math.tanh %19 : vector<256x8xf32>
    %c0_17 = arith.constant 0 : index
    %c8 = arith.constant 8 : index
    %21 = vector.load %arg10[%c0_17, %c8] : memref<256x16xf32, #tpu.memory_space<vmem>>, vector<256x8xf32>
    tpu.vector_store %arg10[%c0_17, %c8], %20 {strides = array<i32>} : memref<256x16xf32, #tpu.memory_space<vmem>>, vector<256x8xf32>,
    %c2_i32 = arith.constant 2 : i32
    %22 = arith.cmpi eq, %arg1, %c2_i32 : i32
    %23 = arith.extui %22 : i1 to i32
    %c0_i32_18 = arith.constant 0 : i32
    %24 = arith.cmpi ne, %23, %c0_i32_18 : i32
    scf.if %24 {
      %25 = arith.truncf %20 : vector<256x8xf32> to vector<256x8xbf16>
      %c0_19 = arith.constant 0 : index
      %c0_20 = arith.constant 0 : index
      %26 = vector.load %arg7[%c0_19, %c0_20] : memref<8x1xbf16, #tpu.memory_space<vmem>>, vector<8x1xbf16>
      %cst_21 = arith.constant dense<0.000000e+00> : vector<256x1xf32>
      %27 = tpu.matmul %25, %26, %cst_21 {dimension_numbers = #tpu.dot_dimension_numbers<[1], [0], [0], [1], [0, 0, 1, 1], [], []>} : vector<256x8xbf16>, vector<8x1xbf16>, vector<256x1xf32> -> vector<256x1xf32>
      %c0_22 = arith.constant 0 : index
      %28 = memref.load %arg8[%c0_22] : memref<3xf32, #tpu.memory_space<smem>>
      %29 = vector.broadcast %28 : f32 to vector<256x1xf32>
      %30 = arith.mulf %27, %29 : vector<256x1xf32>
      %c1 = arith.constant 1 : index
      %31 = memref.load %arg8[%c1] : memref<3xf32, #tpu.memory_space<smem>>
      %32 = vector.broadcast %31 : f32 to vector<256x1xf32>
      %33 = arith.addf %30, %32 : vector<256x1xf32>
      %34 = math.tanh %33 : vector<256x1xf32>
      %c2 = arith.constant 2 : index
      %35 = memref.load %arg8[%c2] : memref<3xf32, #tpu.memory_space<smem>>
      %36 = vector.broadcast %35 : f32 to vector<256x1xf32>
      %37 = arith.subf %34, %36 : vector<256x1xf32>
      %c0_23 = arith.constant 0 : index
      %c0_24 = arith.constant 0 : index
      %38 = vector.load %arg9[%c0_23, %c0_24] : memref<256x1xf32, #tpu.memory_space<vmem>>, vector<256x1xf32>
      tpu.vector_store %arg9[%c0_23, %c0_24], %37 {strides = array<i32>} : memref<256x1xf32, #tpu.memory_space<vmem>>, vector<256x1xf32>,
    } else {
    }
    return
  }
  func.func @transform_0(%arg0: i32, %arg1: i32) -> (i32, i32, i32) {
    %c0_i32 = arith.constant 0 : i32
    %c0_i32_0 = arith.constant 0 : i32
    return %arg1, %arg0, %c0_i32 : i32, i32, i32
  }
  func.func @transform_1(%arg0: i32, %arg1: i32) -> (i32, i32) {
    %c0_i32 = arith.constant 0 : i32
    %c0_i32_0 = arith.constant 0 : i32
    %c0_i32_1 = arith.constant 0 : i32
    return %c0_i32, %c0_i32_0 : i32, i32
  }
  func.func @transform_2(%arg0: i32, %arg1: i32) -> (i32, i32) {
    %c0_i32 = arith.constant 0 : i32
    %c0_i32_0 = arith.constant 0 : i32
    %c0_i32_1 = arith.constant 0 : i32
    return %c0_i32, %c0_i32_0 : i32, i32
  }
  func.func @transform_3(%arg0: i32, %arg1: i32) -> (i32, i32) {
    %c0_i32 = arith.constant 0 : i32
    %c0_i32_0 = arith.constant 0 : i32
    %c0_i32_1 = arith.constant 0 : i32
    return %c0_i32, %c0_i32_0 : i32, i32
  }
  func.func @transform_4(%arg0: i32, %arg1: i32) -> (i32, i32) {
    %c0_i32 = arith.constant 0 : i32
    %c0_i32_0 = arith.constant 0 : i32
    %c0_i32_1 = arith.constant 0 : i32
    return %c0_i32, %c0_i32_0 : i32, i32
  }
  func.func @transform_5(%arg0: i32, %arg1: i32) -> (i32, i32) {
    %c0_i32 = arith.constant 0 : i32
    %c0_i32_0 = arith.constant 0 : i32
    %c0_i32_1 = arith.constant 0 : i32
    return %c0_i32, %c0_i32_0 : i32, i32
  }
  func.func @transform_6(%arg0: i32, %arg1: i32) -> i32 {
    %c0_i32 = arith.constant 0 : i32
    %c0_i32_0 = arith.constant 0 : i32
    return %c0_i32 : i32
  }
  func.func @transform_7(%arg0: i32, %arg1: i32) -> (i32, i32) {
    %c0_i32 = arith.constant 0 : i32
    %c0_i32_0 = arith.constant 0 : i32
    return %arg0, %c0_i32 : i32, i32
  }
}

module attributes {stable_mosaic.version = 11 : i64} {
  func.func @_gemm_bias_relu_kernel(%arg0: i32, %arg1: memref<256x25xbf16, #tpu.memory_space<vmem>>, %arg2: memref<25x16xbf16, #tpu.memory_space<vmem>>, %arg3: memref<1x16xf32, #tpu.memory_space<vmem>>, %arg4: memref<256x16xbf16, #tpu.memory_space<vmem>>) attributes {dimension_semantics = [#tpu.dimension_semantics<parallel>], iteration_bounds = array<i64: 2>, scalar_prefetch = 0 : i64, scratch_operands = 0 : i64, tpu.core_type = #tpu.core_type<tc>, window_params = [{transform_indices = @transform_0, window_bounds = array<i64: 256, 25>}, {pipeline_mode = #tpu.pipeline_mode<synchronous>, transform_indices = @transform_1, window_bounds = array<i64: 25, 16>}, {pipeline_mode = #tpu.pipeline_mode<synchronous>, transform_indices = @transform_2, window_bounds = array<i64: 1, 16>}, {transform_indices = @transform_3, window_bounds = array<i64: 256, 16>}]} {
    %c0 = arith.constant 0 : index
    %c0_0 = arith.constant 0 : index
    %0 = vector.load %arg1[%c0, %c0_0] : memref<256x25xbf16, #tpu.memory_space<vmem>>, vector<256x25xbf16>
    %c0_1 = arith.constant 0 : index
    %c0_2 = arith.constant 0 : index
    %1 = vector.load %arg2[%c0_1, %c0_2] : memref<25x16xbf16, #tpu.memory_space<vmem>>, vector<25x16xbf16>
    %cst = arith.constant dense<0.000000e+00> : vector<256x16xf32>
    %2 = tpu.matmul %0, %1, %cst {dimension_numbers = #tpu.dot_dimension_numbers<[1], [0], [0], [1], [0, 0, 1, 1], [], []>} : vector<256x25xbf16>, vector<25x16xbf16>, vector<256x16xf32> -> vector<256x16xf32>
    %c0_3 = arith.constant 0 : index
    %c0_4 = arith.constant 0 : index
    %3 = vector.load %arg3[%c0_3, %c0_4] : memref<1x16xf32, #tpu.memory_space<vmem>>, vector<1x16xf32>
    %4 = vector.broadcast %3 : vector<1x16xf32> to vector<256x16xf32>
    %5 = arith.addf %2, %4 : vector<256x16xf32>
    %cst_5 = arith.constant 0.000000e+00 : f32
    %6 = vector.broadcast %cst_5 : f32 to vector<256x16xf32>
    %7 = arith.maximumf %5, %6 : vector<256x16xf32>
    %8 = arith.truncf %7 : vector<256x16xf32> to vector<256x16xbf16>
    %c0_6 = arith.constant 0 : index
    %c0_7 = arith.constant 0 : index
    %9 = vector.load %arg4[%c0_6, %c0_7] : memref<256x16xbf16, #tpu.memory_space<vmem>>, vector<256x16xbf16>
    tpu.vector_store %arg4[%c0_6, %c0_7], %8 {strides = array<i32>} : memref<256x16xbf16, #tpu.memory_space<vmem>>, vector<256x16xbf16>,
    return
  }
  func.func @transform_0(%arg0: i32) -> (i32, i32) {
    %c0_i32 = arith.constant 0 : i32
    %c0_i32_0 = arith.constant 0 : i32
    return %arg0, %c0_i32 : i32, i32
  }
  func.func @transform_1(%arg0: i32) -> (i32, i32) {
    %c0_i32 = arith.constant 0 : i32
    %c0_i32_0 = arith.constant 0 : i32
    %c0_i32_1 = arith.constant 0 : i32
    return %c0_i32, %c0_i32_0 : i32, i32
  }
  func.func @transform_2(%arg0: i32) -> (i32, i32) {
    %c0_i32 = arith.constant 0 : i32
    %c0_i32_0 = arith.constant 0 : i32
    %c0_i32_1 = arith.constant 0 : i32
    return %c0_i32, %c0_i32_0 : i32, i32
  }
  func.func @transform_3(%arg0: i32) -> (i32, i32) {
    %c0_i32 = arith.constant 0 : i32
    %c0_i32_0 = arith.constant 0 : i32
    return %arg0, %c0_i32 : i32, i32
  }
}

module attributes {stable_mosaic.version = 11 : i64} {
  func.func @_pc2_fc_kernel(%arg0: i32, %arg1: memref<1x256x400xbf16, #tpu.memory_space<vmem>>, %arg2: memref<400x1xbf16, #tpu.memory_space<vmem>>, %arg3: memref<1x1xf32, #tpu.memory_space<vmem>>, %arg4: memref<256x10xf32, #tpu.memory_space<vmem>>, %arg5: memref<1x10xf32, #tpu.memory_space<vmem>>, %arg6: memref<1x1x10xf32, #tpu.memory_space<vmem>>) attributes {dimension_semantics = [#tpu.dimension_semantics<parallel>], iteration_bounds = array<i64: 2>, scalar_prefetch = 0 : i64, scratch_operands = 0 : i64, tpu.core_type = #tpu.core_type<tc>, window_params = [{transform_indices = @transform_0, window_bounds = array<i64: 1, 256, 400>}, {pipeline_mode = #tpu.pipeline_mode<synchronous>, transform_indices = @transform_1, window_bounds = array<i64: 400, 1>}, {pipeline_mode = #tpu.pipeline_mode<synchronous>, transform_indices = @transform_2, window_bounds = array<i64: 1, 1>}, {pipeline_mode = #tpu.pipeline_mode<synchronous>, transform_indices = @transform_3, window_bounds = array<i64: 256, 10>}, {pipeline_mode = #tpu.pipeline_mode<synchronous>, transform_indices = @transform_4, window_bounds = array<i64: 1, 10>}, {transform_indices = @transform_5, window_bounds = array<i64: 1, 1, 10>}]} {
    %c0 = arith.constant 0 : index
    %c0_0 = arith.constant 0 : index
    %c0_1 = arith.constant 0 : index
    %0 = vector.load %arg1[%c0, %c0_0, %c0_1] : memref<1x256x400xbf16, #tpu.memory_space<vmem>>, vector<1x256x400xbf16>
    %1 = vector.shape_cast %0 : vector<1x256x400xbf16> to vector<256x400xbf16>
    %c0_2 = arith.constant 0 : index
    %c0_3 = arith.constant 0 : index
    %2 = vector.load %arg2[%c0_2, %c0_3] : memref<400x1xbf16, #tpu.memory_space<vmem>>, vector<400x1xbf16>
    %cst = arith.constant dense<0.000000e+00> : vector<256x1xf32>
    %3 = tpu.matmul %1, %2, %cst {dimension_numbers = #tpu.dot_dimension_numbers<[1], [0], [0], [1], [0, 0, 1, 1], [], []>} : vector<256x400xbf16>, vector<400x1xbf16>, vector<256x1xf32> -> vector<256x1xf32>
    %c0_4 = arith.constant 0 : index
    %c0_5 = arith.constant 0 : index
    %4 = vector.load %arg3[%c0_4, %c0_5] : memref<1x1xf32, #tpu.memory_space<vmem>>, vector<1x1xf32>
    %5 = vector.broadcast %4 : vector<1x1xf32> to vector<256x1xf32>
    %6 = arith.addf %3, %5 : vector<256x1xf32>
    %cst_6 = arith.constant 0.000000e+00 : f32
    %7 = vector.broadcast %cst_6 : f32 to vector<256x1xf32>
    %8 = arith.maximumf %6, %7 : vector<256x1xf32>
    %c0_7 = arith.constant 0 : index
    %c0_8 = arith.constant 0 : index
    %9 = vector.load %arg4[%c0_7, %c0_8] : memref<256x10xf32, #tpu.memory_space<vmem>>, vector<256x10xf32>
    %10 = vector.broadcast %8 : vector<256x1xf32> to vector<256x10xf32>
    %11 = arith.mulf %10, %9 : vector<256x10xf32>
    %cst_9 = arith.constant dense<0.000000e+00> : vector<10xf32>
    %12 = vector.multi_reduction <add>, %11, %cst_9 [0] : vector<256x10xf32> to vector<10xf32>
    %13 = vector.shape_cast %12 : vector<10xf32> to vector<1x10xf32>
    %c0_10 = arith.constant 0 : index
    %c0_11 = arith.constant 0 : index
    %14 = vector.load %arg5[%c0_10, %c0_11] : memref<1x10xf32, #tpu.memory_space<vmem>>, vector<1x10xf32>
    %15 = arith.addf %13, %14 : vector<1x10xf32>
    %c0_12 = arith.constant 0 : index
    %c0_13 = arith.constant 0 : index
    %c0_14 = arith.constant 0 : index
    %16 = vector.load %arg6[%c0_12, %c0_13, %c0_14] : memref<1x1x10xf32, #tpu.memory_space<vmem>>, vector<1x1x10xf32>
    %17 = vector.shape_cast %16 : vector<1x1x10xf32> to vector<1x10xf32>
    %18 = vector.shape_cast %15 : vector<1x10xf32> to vector<1x1x10xf32>
    tpu.vector_store %arg6[%c0_12, %c0_13, %c0_14], %18 {strides = array<i32>} : memref<1x1x10xf32, #tpu.memory_space<vmem>>, vector<1x1x10xf32>,
    return
  }
  func.func @transform_0(%arg0: i32) -> (i32, i32, i32) {
    %c0_i32 = arith.constant 0 : i32
    %c0_i32_0 = arith.constant 0 : i32
    %c0_i32_1 = arith.constant 0 : i32
    return %arg0, %c0_i32, %c0_i32_0 : i32, i32, i32
  }
  func.func @transform_1(%arg0: i32) -> (i32, i32) {
    %c0_i32 = arith.constant 0 : i32
    %c0_i32_0 = arith.constant 0 : i32
    %c0_i32_1 = arith.constant 0 : i32
    return %c0_i32, %c0_i32_0 : i32, i32
  }
  func.func @transform_2(%arg0: i32) -> (i32, i32) {
    %c0_i32 = arith.constant 0 : i32
    %c0_i32_0 = arith.constant 0 : i32
    %c0_i32_1 = arith.constant 0 : i32
    return %c0_i32, %c0_i32_0 : i32, i32
  }
  func.func @transform_3(%arg0: i32) -> (i32, i32) {
    %c0_i32 = arith.constant 0 : i32
    %c0_i32_0 = arith.constant 0 : i32
    %c0_i32_1 = arith.constant 0 : i32
    return %c0_i32, %c0_i32_0 : i32, i32
  }
  func.func @transform_4(%arg0: i32) -> (i32, i32) {
    %c0_i32 = arith.constant 0 : i32
    %c0_i32_0 = arith.constant 0 : i32
    %c0_i32_1 = arith.constant 0 : i32
    return %c0_i32, %c0_i32_0 : i32, i32
  }
  func.func @transform_5(%arg0: i32) -> (i32, i32, i32) {
    %c0_i32 = arith.constant 0 : i32
    %c0_i32_0 = arith.constant 0 : i32
    %c0_i32_1 = arith.constant 0 : i32
    return %arg0, %c0_i32, %c0_i32_0 : i32, i32, i32
  }
}

</mosaic_0001>

<llo_original>
// kernel: forward.3
$region0: #{forward.3}
  #allocation0 [shape = 'u32[]', space=smem, size = 0x4, offset = 0x4, fixed_abs, tag = 'smem constant byte address 0x4 - core index']
  #allocation1 [shape = 'u32[144,128]{1,0:T(1,128)}', space=vmem, size = 0x12000, scoped, tag = 'internal scratch']
  #allocation2 [shape = 'f32[256,16]{1,0:T(8,128)}', space=vmem, size = 0x20000, scoped, tag = 'scratch operand']
  %s0 = inlined_call_operand.vmem [shape: bf16[3,512,9], index: 0, kind: input, shape index: {}]
  %s1 = inlined_call_operand.vmem [shape: bf16[9,8], index: 1, kind: input, shape index: {}]
  %s2 = inlined_call_operand.hbm [shape: f32[1,8], index: 2, kind: input, shape index: {}]
  %s3 = inlined_call_operand.vmem [shape: bf16[16,8], index: 3, kind: input, shape index: {}]
  %s4 = inlined_call_operand.hbm [shape: f32[1,8], index: 4, kind: input, shape index: {}]
  %s5 = inlined_call_operand.vmem [shape: bf16[8,1], index: 5, kind: input, shape index: {}]
  %s6 = inlined_call_operand.vmem [shape: f32[3], index: 6, kind: input, shape index: {}]
  %s7 = inlined_call_operand.vmem [shape: f32[512,1], index: 7, kind: output, shape index: {}]
  %s8 = sld [smem:[#allocation0]]
  $region81: #{forward.3} parent=0
    _
  %s10 = ssub.s32 1, %s8
  %s11 = scalar_select 0, %s10, %s8
  $region1: #{forward.3} parent=0
    #allocation3 [shape = 'u8[512]{0}', space=vmem, size = 0x400, scoped, tag = 'input window, operand 2, single buffered']
    #allocation4 [shape = 's32[2]{0}', space=sflag, size = 0x8, scoped, tag = 'scoped memory for forward.3']
    #allocation5 [shape = 's32[2]{0}', space=sflag, size = 0x8, scoped, tag = 'scoped memory for forward.3']
    #allocation6 [shape = 'u8[512]{0}', space=vmem, size = 0x400, scoped, tag = 'input window, operand 4, single buffered']
    #allocation7 [shape = 's32[1]{0}', space=sflag, size = 0x4, scoped, tag = 'scoped memory for forward.3']
    #allocation8 [shape = 'u8[512]{0}', space=smem, size = 0x200, scoped, tag = 'input window, operand 6, single buffered']
    %12 = vsyncpa [#allocation4], 0
    %13 = vsyncpa [#allocation7], 0
    %14 = vsyncpa [#allocation5], 0
    loop: start=0, step=1, limit=8
    $region2: #{forward.3} parent=1 // loop_pre_header
      _
    $region3: #{forward.3} parent=1 // loop_header
      %s16 = sphi 0, %s20
      %p17 = scmp.ge.s32.totalorder %s16, 8
      %s23 = sphi 0, %s35
      %s24 = sphi 0, %s31
      %s25 = sphi 0, %s23
      %s26 = sphi 0, %s24
      %s27 = sphi 0, %s25
      %s28 = sphi 0, %s26
      %s40 = sphi 0, %s42
      %s43 = sphi 0, %s40
      %s44 = sphi 0, %s43
      %s60 = sphi 0, %s44
      %s64 = sphi 0, %s64
      %s66 = sphi 0, %s64
      %s67 = sphi 0, %s66
      %s81 = sphi 0, %s67
      %s85 = sphi 0, %s85
      %s87 = sphi 0, %s85
      %s88 = sphi 0, %s87
      %s102 = sphi 0, %s88
      %s106 = sphi 0, %s106
      %s108 = sphi 0, %s106
      %s109 = sphi 0, %s108
      %s123 = sphi 0, %s109
      %s127 = sphi 0, %s127
      %s129 = sphi 0, %s127
      %s130 = sphi 0, %s129
      %s144 = sphi 0, %s130
      %s148 = sphi 0, %s148
      %s150 = sphi 0, %s148
      %s151 = sphi 0, %s150
      %s165 = sphi 0, %s151
      %s169 = sphi 0, %s169
      %s171 = sphi 0, %s169
      %s172 = sphi 0, %s171
      %s186 = sphi 0, %s172
      %s192 = sphi 0, %s194
      %s195 = sphi 0, %s192
      %s196 = sphi 0, %s195
      %s212 = sphi 0, %s196
    $region4: #{forward.3} parent=1 // loop_header_branch
      %19 = sbr.rel (%p17) target = $region8
    $region5: #{forward.3} parent=1 // loop_body
      %s21 = ssub.s32 %s16, 1
      %s22 = ssub.s32 %s16, 2
      %s29 = sadd.s32 1, %s24
      %p30 = scmp.ge.s32.totalorder %s29, 3
      %s31 = scalar_select %p30, 0, %s29
      %s32 = sadd.s32 1, %s23
      %s33 = scalar_select %p30, %s32, %s23
      %p34 = scmp.ge.s32.totalorder %s33, 2
      %s35 = scalar_select %p34, 0, %s33
      %s36 = ssub.s32 %s24, %s31
      %s37 = ssub.s32 %s23, %s35
      %s38 = sor.u32 %s36, %s37
      %p39 = scmp.eq.s32.totalorder %s38, 0
      %s41 = sadd.s32 %s40, 1
      %s42 = scalar_select %p39, %s40, %s41
      %p45 = pneg %p39
      %p46 = scmp.eq.s32.totalorder %s16, 5
      %p47 = por %p45, %p46
      %p48 = scmp.ne.s32.totalorder %s40, %s43
      %p49 = scmp.eq.s32.totalorder %s16, 0
      %p50 = por %p48, %p49
      %p51 = scmp.ne.s32.totalorder %s40, %s43
      %p52 = scmp.eq.s32.totalorder %s21, 5
      %p53 = por %p51, %p52
      %p54 = scmp.ne.s32.totalorder %s43, %s44
      %p55 = scmp.eq.s32.totalorder %s21, 0
      %p56 = por %p54, %p55
      %p57 = scmp.ne.s32.totalorder %s43, %s44
      %p58 = scmp.eq.s32.totalorder %s22, 5
      %p59 = por %p57, %p58
      %p61 = scmp.ne.s32.totalorder %s44, %s60
      %p62 = scmp.eq.s32.totalorder %s22, 0
      %p63 = por %p61, %p62
      %s65 = sadd.s32 %s64, 1
      %p68 = scmp.eq.s32.totalorder %s16, 5
      %p69 = scmp.ne.s32.totalorder %s64, %s66
      %p70 = scmp.eq.s32.totalorder %s16, 0
      %p71 = por %p69, %p70
      %p72 = scmp.ne.s32.totalorder %s64, %s66
      %p73 = scmp.eq.s32.totalorder %s21, 5
      %p74 = por %p72, %p73
      %p75 = scmp.ne.s32.totalorder %s66, %s67
      %p76 = scmp.eq.s32.totalorder %s21, 0
      %p77 = por %p75, %p76
      %p78 = scmp.ne.s32.totalorder %s66, %s67
      %p79 = scmp.eq.s32.totalorder %s22, 5
      %p80 = por %p78, %p79
      %p82 = scmp.ne.s32.totalorder %s67, %s81
      %p83 = scmp.eq.s32.totalorder %s22, 0
      %p84 = por %p82, %p83
      %s86 = sadd.s32 %s85, 1
      %p89 = scmp.eq.s32.totalorder %s16, 5
      %p90 = scmp.ne.s32.totalorder %s85, %s87
      %p91 = scmp.eq.s32.totalorder %s16, 0
      %p92 = por %p90, %p91
      %p93 = scmp.ne.s32.totalorder %s85, %s87
      %p94 = scmp.eq.s32.totalorder %s21, 5
      %p95 = por %p93, %p94
      %p96 = scmp.ne.s32.totalorder %s87, %s88
      %p97 = scmp.eq.s32.totalorder %s21, 0
      %p98 = por %p96, %p97
      %p99 = scmp.ne.s32.totalorder %s87, %s88
      %p100 = scmp.eq.s32.totalorder %s22, 5
      %p101 = por %p99, %p100
      %p103 = scmp.ne.s32.totalorder %s88, %s102
      %p104 = scmp.eq.s32.totalorder %s22, 0
      %p105 = por %p103, %p104
      %s107 = sadd.s32 %s106, 1
      %p110 = scmp.eq.s32.totalorder %s16, 5
      %p111 = scmp.ne.s32.totalorder %s106, %s108
      %p112 = scmp.eq.s32.totalorder %s16, 0
      %p113 = por %p111, %p112
      %p114 = scmp.ne.s32.totalorder %s106, %s108
      %p115 = scmp.eq.s32.totalorder %s21, 5
      %p116 = por %p114, %p115
      %p117 = scmp.ne.s32.totalorder %s108, %s109
      %p118 = scmp.eq.s32.totalorder %s21, 0
      %p119 = por %p117, %p118
      %p120 = scmp.ne.s32.totalorder %s108, %s109
      %p121 = scmp.eq.s32.totalorder %s22, 5
      %p122 = por %p120, %p121
      %p124 = scmp.ne.s32.totalorder %s109, %s123
      %p125 = scmp.eq.s32.totalorder %s22, 0
      %p126 = por %p124, %p125
      %s128 = sadd.s32 %s127, 1
      %p131 = scmp.eq.s32.totalorder %s16, 5
      %p132 = scmp.ne.s32.totalorder %s127, %s129
      %p133 = scmp.eq.s32.totalorder %s16, 0
      %p134 = por %p132, %p133
      %p135 = scmp.ne.s32.totalorder %s127, %s129
      %p136 = scmp.eq.s32.totalorder %s21, 5
      %p137 = por %p135, %p136
      %p138 = scmp.ne.s32.totalorder %s129, %s130
      %p139 = scmp.eq.s32.totalorder %s21, 0
      %p140 = por %p138, %p139
      %p141 = scmp.ne.s32.totalorder %s129, %s130
      %p142 = scmp.eq.s32.totalorder %s22, 5
      %p143 = por %p141, %p142
      %p145 = scmp.ne.s32.totalorder %s130, %s144
      %p146 = scmp.eq.s32.totalorder %s22, 0
      %p147 = por %p145, %p146
      %s149 = sadd.s32 %s148, 1
      %p152 = scmp.eq.s32.totalorder %s16, 5
      %p153 = scmp.ne.s32.totalorder %s148, %s150
      %p154 = scmp.eq.s32.totalorder %s16, 0
      %p155 = por %p153, %p154
      %p156 = scmp.ne.s32.totalorder %s148, %s150
      %p157 = scmp.eq.s32.totalorder %s21, 5
      %p158 = por %p156, %p157
      %p159 = scmp.ne.s32.totalorder %s150, %s151
      %p160 = scmp.eq.s32.totalorder %s21, 0
      %p161 = por %p159, %p160
      %p162 = scmp.ne.s32.totalorder %s150, %s151
      %p163 = scmp.eq.s32.totalorder %s22, 5
      %p164 = por %p162, %p163
      %p166 = scmp.ne.s32.totalorder %s151, %s165
      %p167 = scmp.eq.s32.totalorder %s22, 0
      %p168 = por %p166, %p167
      %s170 = sadd.s32 %s169, 1
      %p173 = scmp.eq.s32.totalorder %s16, 5
      %p174 = scmp.ne.s32.totalorder %s169, %s171
      %p175 = scmp.eq.s32.totalorder %s16, 0
      %p176 = por %p174, %p175
      %p177 = scmp.ne.s32.totalorder %s169, %s171
      %p178 = scmp.eq.s32.totalorder %s21, 5
      %p179 = por %p177, %p178
      %p180 = scmp.ne.s32.totalorder %s171, %s172
      %p181 = scmp.eq.s32.totalorder %s21, 0
      %p182 = por %p180, %p181
      %p183 = scmp.ne.s32.totalorder %s171, %s172
      %p184 = scmp.eq.s32.totalorder %s22, 5
      %p185 = por %p183, %p184
      %p187 = scmp.ne.s32.totalorder %s172, %s186
      %p188 = scmp.eq.s32.totalorder %s22, 0
      %p189 = por %p187, %p188
      %s190 = ssub.s32 %s23, %s35
      %p191 = scmp.eq.s32.totalorder %s190, 0
      %s193 = sadd.s32 %s192, 1
      %s194 = scalar_select %p191, %s192, %s193
      %p197 = pneg %p191
      %p198 = scmp.eq.s32.totalorder %s16, 5
      %p199 = por %p197, %p198
      %p200 = scmp.ne.s32.totalorder %s192, %s195
      %p201 = scmp.eq.s32.totalorder %s16, 0
      %p202 = por %p200, %p201
      %p203 = scmp.ne.s32.totalorder %s192, %s195
      %p204 = scmp.eq.s32.totalorder %s21, 5
      %p205 = por %p203, %p204
      %p206 = scmp.ne.s32.totalorder %s195, %s196
      %p207 = scmp.eq.s32.totalorder %s21, 0
      %p208 = por %p206, %p207
      %p209 = scmp.ne.s32.totalorder %s195, %s196
      %p210 = scmp.eq.s32.totalorder %s22, 5
      %p211 = por %p209, %p210
      %p213 = scmp.ne.s32.totalorder %s196, %s212
      %p214 = scmp.eq.s32.totalorder %s22, 0
      %p215 = por %p213, %p214
      %p216 = scmp.le.s32.totalorder 1, %s16
      %p217 = scmp.lt.s32.totalorder %s16, 7
      %p218 = pnand %p216, %p217
      %p219 = pneg %p218
      // Predicated region
      $region9: #{forward.3} parent=5 // pred_check
        _
      $region10: #{forward.3} parent=5 // pred_check_branch
        %221 = sbr.rel (%p218) target = $region12
      $region11: #{forward.3} parent=5 // pred_region
        %s222 = ssub.s32 %s16, 1
        // Predicated region
        $region13: #{forward.3} parent=11 // pred_check
          %p223 = pneg %p77
        $region14: #{forward.3} parent=11 // pred_check_branch
          %225 = sbr.rel (%p223) target = $region16
        $region15: #{forward.3} parent=11 // pred_region
          _
        $region16: #{forward.3} parent=11 // pred_fallthru
          _
        // Predicated region
        $region17: #{forward.3} parent=11 // pred_check
          %p226 = pneg %p98
        $region18: #{forward.3} parent=11 // pred_check_branch
          %228 = sbr.rel (%p226) target = $region20
        $region19: #{forward.3} parent=11 // pred_region
          %s230 = ssub.s32 16, 16
          %231 = vsyncadd [#allocation4], %s230
          %s233 = sshll.u32 [#allocation3], 4
          %s234 = int_to_ptr.vmem [resolvable:$true] %s233
          %236 = dma.hbm_to_vmem [thread:$0]  %s2, 16, %s234, [#allocation4]
        $region20: #{forward.3} parent=11 // pred_fallthru
          _
        // Predicated region
        $region21: #{forward.3} parent=11 // pred_check
          %p237 = pneg %p119
        $region22: #{forward.3} parent=11 // pred_check_branch
          %239 = sbr.rel (%p237) target = $region24
        $region23: #{forward.3} parent=11 // pred_region
          _
        $region24: #{forward.3} parent=11 // pred_fallthru
          _
        // Predicated region
        $region25: #{forward.3} parent=11 // pred_check
          %p240 = pneg %p140
        $region26: #{forward.3} parent=11 // pred_check_branch
          %242 = sbr.rel (%p240) target = $region28
        $region27: #{forward.3} parent=11 // pred_region
          %s244 = ssub.s32 16, 16
          %245 = vsyncadd [#allocation7], %s244
          %s247 = sshll.u32 [#allocation6], 4
          %s248 = int_to_ptr.vmem [resolvable:$true] %s247
          %250 = dma.hbm_to_vmem [thread:$0]  %s4, 16, %s248, [#allocation7]
        $region28: #{forward.3} parent=11 // pred_fallthru
          _
        // Predicated region
        $region29: #{forward.3} parent=11 // pred_check
          %p251 = pneg %p161
        $region30: #{forward.3} parent=11 // pred_check_branch
          %253 = sbr.rel (%p251) target = $region32
        $region31: #{forward.3} parent=11 // pred_region
          _
        $region32: #{forward.3} parent=11 // pred_fallthru
          _
        // Predicated region
        $region33: #{forward.3} parent=11 // pred_check
          %p254 = pneg %p182
        $region34: #{forward.3} parent=11 // pred_check_branch
          %256 = sbr.rel (%p254) target = $region36
        $region35: #{forward.3} parent=11 // pred_region
          %s258 = ssub.s32 16, 16
          %259 = vsyncadd [#allocation5], %s258
          %s261 = sshll.u32 %s6, 4
          %s262 = int_to_ptr.vmem [resolvable:$true] %s261
          %264 = dma.vmem_to_smem %s262, 16, [#allocation8], [#allocation5]
        $region36: #{forward.3} parent=11 // pred_fallthru
          _
      $region12: #{forward.3} parent=5 // pred_fallthru
        _
      %p265 = scmp.lt.s32.totalorder %s16, 6
      // Predicated region
      $region37: #{forward.3} parent=5 // pred_check
        %p266 = pneg %p265
      $region38: #{forward.3} parent=5 // pred_check_branch
        %268 = sbr.rel (%p266) target = $region40
      $region39: #{forward.3} parent=5 // pred_region
        // Predicated region
        $region41: #{forward.3} parent=39 // pred_check
          %p269 = pneg %p50
        $region42: #{forward.3} parent=39 // pred_check_branch
          %271 = sbr.rel (%p269) target = $region44
        $region43: #{forward.3} parent=39 // pred_region
          %s272 = smul.u32 32, %s23
          %p273 = scmp.lt.s32.totalorder %s24, 2
          %s274 = scalar_select %p273, %s24, 2
          %p275 = scmp.lt.s32.totalorder %s272, 63
          %s276 = scalar_select %p275, %s272, 63
          %s277 = smul.addr %s274, 64
          %s278 = sadd.s32 %s276, %s277
          %s279 = smul.addr %s278, 4
          %s280 = scalar_lea.vmem %s0, %s279
          %s281 = smul.u32 32, %s23
        $region44: #{forward.3} parent=39 // pred_fallthru
          _
      $region40: #{forward.3} parent=5 // pred_fallthru
        _
      %p282 = scmp.le.s32.totalorder 1, %s16
      %p283 = scmp.lt.s32.totalorder %s16, 7
      %p284 = pnand %p282, %p283
      %p285 = pneg %p284
      // Predicated region
      $region45: #{forward.3} parent=5 // pred_check
        _
      $region46: #{forward.3} parent=5 // pred_check_branch
        %287 = sbr.rel (%p284) target = $region48
      $region47: #{forward.3} parent=5 // pred_region
        %s288 = ssub.s32 %s16, 1
        // Predicated region
        $region49: #{forward.3} parent=47 // pred_check
          %p289 = pneg %p98
        $region50: #{forward.3} parent=47 // pred_check_branch
          %291 = sbr.rel (%p289) target = $region52
        $region51: #{forward.3} parent=47 // pred_region
          %292 = dma.done [#allocation4], 16
        $region52: #{forward.3} parent=47 // pred_fallthru
          _
        // Predicated region
        $region53: #{forward.3} parent=47 // pred_check
          %p293 = pneg %p140
        $region54: #{forward.3} parent=47 // pred_check_branch
          %295 = sbr.rel (%p293) target = $region56
        $region55: #{forward.3} parent=47 // pred_region
          %296 = dma.done [#allocation7], 16
        $region56: #{forward.3} parent=47 // pred_fallthru
          _
        // Predicated region
        $region57: #{forward.3} parent=47 // pred_check
          %p297 = pneg %p182
        $region58: #{forward.3} parent=47 // pred_check_branch
          %299 = sbr.rel (%p297) target = $region60
        $region59: #{forward.3} parent=47 // pred_region
          %300 = dma.done [#allocation5], 16
        $region60: #{forward.3} parent=47 // pred_fallthru
          _
        %301 = sfence
        %s302 = smul.u32 32, %s25
        %p303 = scmp.lt.s32.totalorder %s26, 2
        %s304 = scalar_select %p303, %s26, 2
        %p305 = scmp.lt.s32.totalorder %s302, 63
        %s306 = scalar_select %p305, %s302, 63
        %s307 = smul.addr %s304, 64
        %s308 = sadd.s32 %s306, %s307
        %s309 = smul.addr %s308, 4
        %s310 = scalar_lea.vmem %s0, %s309
        %p311 = pneg %p56
        %p312 = pneg %p53
        %p313 = pneg %p77
        %p314 = pneg %p74
        %p315 = pneg %p98
        %p316 = pneg %p95
        %p317 = pneg %p119
        %p318 = pneg %p116
        %p319 = pneg %p140
        %p320 = pneg %p137
        %p321 = pneg %p161
        %p322 = pneg %p158
        %p323 = pneg %p182
        %p324 = pneg %p179
        %p325 = pneg %p208
        %p326 = pneg %p205
        %s327 = smul.u32 32, %s25
        %p328 = scmp.lt.s32.totalorder %s327, 63
        %s329 = scalar_select %p328, %s327, 63
        %s330 = smul.addr %s329, 8
        %s331 = scalar_lea.vmem %s7, %s330
        %s332 = smul.u32 32, %s25
        %p333 = scmp.lt.s32.totalorder %s26, 2
        %s334 = scalar_select %p333, %s26, 2
        %p335 = scmp.lt.s32.totalorder %s332, 63
        %s336 = scalar_select %p335, %s332, 63
        %s337 = smul.addr %s334, 64
        %s338 = sadd.s32 %s336, %s337
        %s339 = smul.addr %s338, 4
        %s340 = scalar_lea.vmem %s0, %s339
        %s341 = smul.u32 32, %s25
        %s342 = smul.u32 32, %s25
        %p343 = scmp.lt.s32.totalorder %s342, 63
        %s344 = scalar_select %p343, %s342, 63
        %s345 = smul.addr %s344, 8
        %s346 = scalar_lea.vmem %s7, %s345
        %s347 = smul.u32 32, %s25
        %p349 = scmp.eq.s32.totalorder %s26, 0
        // Predicated region
        $region61: #{forward.3} parent=47 // pred_check
          %p350 = pneg %p349
        $region62: #{forward.3} parent=47 // pred_check_branch
          %352 = sbr.rel (%p350) target = $region64
        $region63: #{forward.3} parent=47 // pred_region
          %vm353 = vcmask 130048
          %354 = vst.msk [vmem:[#allocation2] sm:$0xff] %vm353, 0.0
          %355 = vst.msk [vmem:[#allocation2 + $0x8] sm:$0xff] %vm353, 0.0
          %356 = vst.msk [vmem:[#allocation2 + $0x10] sm:$0xff] %vm353, 0.0
          %357 = vst.msk [vmem:[#allocation2 + $0x18] sm:$0xff] %vm353, 0.0
          %358 = vst.msk [vmem:[#allocation2 + $0x20] sm:$0xff] %vm353, 0.0
          %359 = vst.msk [vmem:[#allocation2 + $0x28] sm:$0xff] %vm353, 0.0
          %360 = vst.msk [vmem:[#allocation2 + $0x30] sm:$0xff] %vm353, 0.0
          %361 = vst.msk [vmem:[#allocation2 + $0x38] sm:$0xff] %vm353, 0.0
          %362 = vst.msk [vmem:[#allocation2 + $0x40] sm:$0xff] %vm353, 0.0
          %363 = vst.msk [vmem:[#allocation2 + $0x48] sm:$0xff] %vm353, 0.0
          %364 = vst.msk [vmem:[#allocation2 + $0x50] sm:$0xff] %vm353, 0.0
          %365 = vst.msk [vmem:[#allocation2 + $0x58] sm:$0xff] %vm353, 0.0
          %366 = vst.msk [vmem:[#allocation2 + $0x60] sm:$0xff] %vm353, 0.0
          %367 = vst.msk [vmem:[#allocation2 + $0x68] sm:$0xff] %vm353, 0.0
          %368 = vst.msk [vmem:[#allocation2 + $0x70] sm:$0xff] %vm353, 0.0
          %369 = vst.msk [vmem:[#allocation2 + $0x78] sm:$0xff] %vm353, 0.0
          %370 = vst.msk [vmem:[#allocation2 + $0x80] sm:$0xff] %vm353, 0.0
          %371 = vst.msk [vmem:[#allocation2 + $0x88] sm:$0xff] %vm353, 0.0
          %372 = vst.msk [vmem:[#allocation2 + $0x90] sm:$0xff] %vm353, 0.0
          %373 = vst.msk [vmem:[#allocation2 + $0x98] sm:$0xff] %vm353, 0.0
          %374 = vst.msk [vmem:[#allocation2 + $0xa0] sm:$0xff] %vm353, 0.0
          %375 = vst.msk [vmem:[#allocation2 + $0xa8] sm:$0xff] %vm353, 0.0
          %376 = vst.msk [vmem:[#allocation2 + $0xb0] sm:$0xff] %vm353, 0.0
          %377 = vst.msk [vmem:[#allocation2 + $0xb8] sm:$0xff] %vm353, 0.0
          %378 = vst.msk [vmem:[#allocation2 + $0xc0] sm:$0xff] %vm353, 0.0
          %379 = vst.msk [vmem:[#allocation2 + $0xc8] sm:$0xff] %vm353, 0.0
          %380 = vst.msk [vmem:[#allocation2 + $0xd0] sm:$0xff] %vm353, 0.0
          %381 = vst.msk [vmem:[#allocation2 + $0xd8] sm:$0xff] %vm353, 0.0
          %382 = vst.msk [vmem:[#allocation2 + $0xe0] sm:$0xff] %vm353, 0.0
          %383 = vst.msk [vmem:[#allocation2 + $0xe8] sm:$0xff] %vm353, 0.0
          %384 = vst.msk [vmem:[#allocation2 + $0xf0] sm:$0xff] %vm353, 0.0
          %385 = vst.msk [vmem:[#allocation2 + $0xf8] sm:$0xff] %vm353, 0.0
        $region64: #{forward.3} parent=47 // pred_fallthru
          _
        %v386 = vld [vmem:[%s340] sm:$0xf]
        %v387 = vld [vmem:[%s340 + $0x4] sm:$0xf]
        %v388 = vld [vmem:[%s340 + $0x8] sm:$0xf]
        %v389 = vld [vmem:[%s340 + $0xc] sm:$0xf]
        %v390 = vld [vmem:[%s340 + $0x10] sm:$0xf]
        %v391 = vld [vmem:[%s340 + $0x14] sm:$0xf]
        %v392 = vld [vmem:[%s340 + $0x18] sm:$0xf]
        %v393 = vld [vmem:[%s340 + $0x1c] sm:$0xf]
        %v394 = vld [vmem:[%s340 + $0x20] sm:$0xf]
        %v395 = vld [vmem:[%s340 + $0x24] sm:$0xf]
        %v396 = vld [vmem:[%s340 + $0x28] sm:$0xf]
        %v397 = vld [vmem:[%s340 + $0x2c] sm:$0xf]
        %v398 = vld [vmem:[%s340 + $0x30] sm:$0xf]
        %v399 = vld [vmem:[%s340 + $0x34] sm:$0xf]
        %v400 = vld [vmem:[%s340 + $0x38] sm:$0xf]
        %v401 = vld [vmem:[%s340 + $0x3c] sm:$0xf]
        %v402 = vld [vmem:[%s340 + $0x40] sm:$0xf]
        %v403 = vld [vmem:[%s340 + $0x44] sm:$0xf]
        %v404 = vld [vmem:[%s340 + $0x48] sm:$0xf]
        %v405 = vld [vmem:[%s340 + $0x4c] sm:$0xf]
        %v406 = vld [vmem:[%s340 + $0x50] sm:$0xf]
        %v407 = vld [vmem:[%s340 + $0x54] sm:$0xf]
        %v408 = vld [vmem:[%s340 + $0x58] sm:$0xf]
        %v409 = vld [vmem:[%s340 + $0x5c] sm:$0xf]
        %v410 = vld [vmem:[%s340 + $0x60] sm:$0xf]
        %v411 = vld [vmem:[%s340 + $0x64] sm:$0xf]
        %v412 = vld [vmem:[%s340 + $0x68] sm:$0xf]
        %v413 = vld [vmem:[%s340 + $0x6c] sm:$0xf]
        %v414 = vld [vmem:[%s340 + $0x70] sm:$0xf]
        %v415 = vld [vmem:[%s340 + $0x74] sm:$0xf]
        %v416 = vld [vmem:[%s340 + $0x78] sm:$0xf]
        %v417 = vld [vmem:[%s340 + $0x7c] sm:$0xf]
        %v418 = vld [vmem:[%s1] sm:$0xf]
        %v419 = vld [vmem:[%s1 + $0x4] sm:$0x1]
        %v420 = vld [vmem:[#allocation3] sm:$0x1]
        %v422 = vlaneseq
        %v423 = vshrl.u32 %v422, 7
        %v424 = vsub.s32 0, %v423
        %v425 = vrot.slane %v420, %v424
        %v459 = vunpack.c.l.b16 %v386
        %v460 = vunpack.c.l.b16 %v387
        %v461 = vunpack.c.l.b16 %v388
        %v462 = vunpack.c.l.b16 %v389
        %v463 = vunpack.c.l.b16 %v390
        %v464 = vunpack.c.l.b16 %v391
        %v465 = vunpack.c.l.b16 %v392
        %v466 = vunpack.c.l.b16 %v393
        %v467 = vunpack.c.l.b16 %v394
        %v468 = vunpack.c.l.b16 %v395
        %v469 = vunpack.c.l.b16 %v396
        %v470 = vunpack.c.l.b16 %v397
        %v471 = vunpack.c.l.b16 %v398
        %v472 = vunpack.c.l.b16 %v399
        %v473 = vunpack.c.l.b16 %v400
        %v474 = vunpack.c.l.b16 %v401
        %v475 = vunpack.c.l.b16 %v402
        %v476 = vunpack.c.l.b16 %v403
        %v477 = vunpack.c.l.b16 %v404
        %v478 = vunpack.c.l.b16 %v405
        %v479 = vunpack.c.l.b16 %v406
        %v480 = vunpack.c.l.b16 %v407
        %v481 = vunpack.c.l.b16 %v408
        %v482 = vunpack.c.l.b16 %v409
        %v483 = vunpack.c.l.b16 %v410
        %v484 = vunpack.c.l.b16 %v411
        %v485 = vunpack.c.l.b16 %v412
        %v486 = vunpack.c.l.b16 %v413
        %v487 = vunpack.c.l.b16 %v414
        %v488 = vunpack.c.l.b16 %v415
        %v489 = vunpack.c.l.b16 %v416
        %v490 = vunpack.c.l.b16 %v417
        %v491 = vpack.c.b16 %v460, %v459
        %v492 = vpack.c.b16 %v462, %v461
        %v493 = vpack.c.b16 %v464, %v463
        %v494 = vpack.c.b16 %v466, %v465
        %v495 = vpack.c.b16 %v468, %v467
        %v496 = vpack.c.b16 %v470, %v469
        %v497 = vpack.c.b16 %v472, %v471
        %v498 = vpack.c.b16 %v474, %v473
        %v499 = vpack.c.b16 %v476, %v475
        %v500 = vpack.c.b16 %v478, %v477
        %v501 = vpack.c.b16 %v480, %v479
        %v502 = vpack.c.b16 %v482, %v481
        %v503 = vpack.c.b16 %v484, %v483
        %v504 = vpack.c.b16 %v486, %v485
        %v505 = vpack.c.b16 %v488, %v487
        %v506 = vpack.c.b16 %v490, %v489
        %v509 = vunpack.c.l.b16 %v418
        %v510 = vunpack.c.l.b16 %v419
        %v511 = vpack.c.b16 %v510, %v509
        %vm512 = vcmask 72704
        %v514 = vsel %vm512, %v491, 0
        %v517 = vsel %vm512, %v492, 0
        %v520 = vsel %vm512, %v493, 0
        %v523 = vsel %vm512, %v494, 0
        %v526 = vsel %vm512, %v495, 0
        %v529 = vsel %vm512, %v496, 0
        %v532 = vsel %vm512, %v497, 0
        %v535 = vsel %vm512, %v498, 0
        %v538 = vsel %vm512, %v499, 0
        %v541 = vsel %vm512, %v500, 0
        %v544 = vsel %vm512, %v501, 0
        %v547 = vsel %vm512, %v502, 0
        %v550 = vsel %vm512, %v503, 0
        %v553 = vsel %vm512, %v504, 0
        %v556 = vsel %vm512, %v505, 0
        %v559 = vsel %vm512, %v506, 0
        %vm561 = vcmask 1043456
        %vm562 = vcmask 1044480
        %v563 = vsel %vm561, 4294967295, 65535
        %v564 = vsel %vm562, %v563, 0
        %v566 = vand.u32 %v511, %v564
        %568 = vmatprep.subr.bf16.mxu0 0
        %569 = vmatpush1.bf16.msra.mxu0 %v566
        %570 = vmatprep.subr.bf16.mxu0 0
        %571 = vmatpush1.bf16.msra.mxu0 0
        %572 = vmatprep.subr.bf16.mxu0 0
        %573 = vmatpush1.bf16.msra.mxu0 0
        %574 = vmatprep.subr.bf16.mxu0 0
        %575 = vmatpush1.bf16.msra.mxu0 0
        %576 = vmatprep.subr.bf16.mxu0 0
        %577 = vmatpush1.bf16.msra.mxu0 0
        %578 = vmatprep.subr.bf16.mxu0 0
        %579 = vmatpush1.bf16.msra.mxu0 0
        %580 = vmatprep.subr.bf16.mxu0 0
        %581 = vmatpush1.bf16.msra.mxu0 0
        %582 = vmatprep.subr.bf16.mxu0 0
        %583 = vmatpush1.bf16.msra.mxu0 0
        %584 = vmatprep.subr.bf16.mxu0 0
        %585 = vmatpush1.bf16.msra.mxu0 0
        %586 = vmatprep.subr.bf16.mxu0 0
        %587 = vmatpush1.bf16.msra.mxu0 0
        %588 = vmatprep.subr.bf16.mxu0 0
        %589 = vmatpush1.bf16.msra.mxu0 0
        %590 = vmatprep.subr.bf16.mxu0 0
        %591 = vmatpush1.bf16.msra.mxu0 0
        %592 = vmatprep.subr.bf16.mxu0 0
        %593 = vmatpush1.bf16.msra.mxu0 0
        %594 = vmatprep.subr.bf16.mxu0 0
        %595 = vmatpush1.bf16.msra.mxu0 0
        %596 = vmatprep.subr.bf16.mxu0 0
        %597 = vmatpush1.bf16.msra.mxu0 0
        %598 = vmatprep.subr.bf16.mxu0 0
        %599 = vmatpush1.bf16.msra.mxu0 0
        %600 = vmatprep.mubr.bf16.mxu0 0
        %601 = vmatmul.mubr.bf16.gmra.mrb[0].mxu0 %v514
        %v602 = vpop.f32.mrb[0].mxu0
        %v603 = vadd.f32 %v425, %v602
        %v604 = vpop.f32.mrb[0].mxu0
        %v605 = vpop.f32.mrb[0].mxu0
        %v606 = vadd.f32 %v425, %v605
        %v607 = vpop.f32.mrb[0].mxu0
        %608 = vmatprep.mubr.bf16.mxu0 0
        %609 = vmatmul.mubr.bf16.gmra.mrb[0].mxu0 %v517
        %v610 = vpop.f32.mrb[0].mxu0
        %v611 = vadd.f32 %v425, %v610
        %v612 = vpop.f32.mrb[0].mxu0
        %v613 = vpop.f32.mrb[0].mxu0
        %v614 = vadd.f32 %v425, %v613
        %v615 = vpop.f32.mrb[0].mxu0
        %616 = vmatprep.mubr.bf16.mxu0 0
        %617 = vmatmul.mubr.bf16.gmra.mrb[0].mxu0 %v520
        %v618 = vpop.f32.mrb[0].mxu0
        %v619 = vadd.f32 %v425, %v618
        %v620 = vpop.f32.mrb[0].mxu0
        %v621 = vpop.f32.mrb[0].mxu0
        %v622 = vadd.f32 %v425, %v621
        %v623 = vpop.f32.mrb[0].mxu0
        %624 = vmatprep.mubr.bf16.mxu0 0
        %625 = vmatmul.mubr.bf16.gmra.mrb[0].mxu0 %v523
        %v626 = vpop.f32.mrb[0].mxu0
        %v627 = vadd.f32 %v425, %v626
        %v628 = vpop.f32.mrb[0].mxu0
        %v629 = vpop.f32.mrb[0].mxu0
        %v630 = vadd.f32 %v425, %v629
        %v631 = vpop.f32.mrb[0].mxu0
        %632 = vmatprep.mubr.bf16.mxu0 0
        %633 = vmatmul.mubr.bf16.gmra.mrb[0].mxu0 %v526
        %v634 = vpop.f32.mrb[0].mxu0
        %v635 = vadd.f32 %v425, %v634
        %v636 = vpop.f32.mrb[0].mxu0
        %v637 = vpop.f32.mrb[0].mxu0
        %v638 = vadd.f32 %v425, %v637
        %v639 = vpop.f32.mrb[0].mxu0
        %640 = vmatprep.mubr.bf16.mxu0 0
        %641 = vmatmul.mubr.bf16.gmra.mrb[0].mxu0 %v529
        %v642 = vpop.f32.mrb[0].mxu0
        %v643 = vadd.f32 %v425, %v642
        %v644 = vpop.f32.mrb[0].mxu0
        %v645 = vpop.f32.mrb[0].mxu0
        %v646 = vadd.f32 %v425, %v645
        %v647 = vpop.f32.mrb[0].mxu0
        %648 = vmatprep.mubr.bf16.mxu0 0
        %649 = vmatmul.mubr.bf16.gmra.mrb[0].mxu0 %v532
        %v650 = vpop.f32.mrb[0].mxu0
        %v651 = vadd.f32 %v425, %v650
        %v652 = vpop.f32.mrb[0].mxu0
        %v653 = vpop.f32.mrb[0].mxu0
        %v654 = vadd.f32 %v425, %v653
        %v655 = vpop.f32.mrb[0].mxu0
        %656 = vmatprep.mubr.bf16.mxu0 0
        %657 = vmatmul.mubr.bf16.gmra.mrb[0].mxu0 %v535
        %v658 = vpop.f32.mrb[0].mxu0
        %v659 = vadd.f32 %v425, %v658
        %v660 = vpop.f32.mrb[0].mxu0
        %v661 = vpop.f32.mrb[0].mxu0
        %v662 = vadd.f32 %v425, %v661
        %v663 = vpop.f32.mrb[0].mxu0
        %664 = vmatprep.mubr.bf16.mxu0 0
        %665 = vmatmul.mubr.bf16.gmra.mrb[0].mxu0 %v538
        %v666 = vpop.f32.mrb[0].mxu0
        %v667 = vadd.f32 %v425, %v666
        %v668 = vpop.f32.mrb[0].mxu0
        %v669 = vpop.f32.mrb[0].mxu0
        %v670 = vadd.f32 %v425, %v669
        %v671 = vpop.f32.mrb[0].mxu0
        %672 = vmatprep.mubr.bf16.mxu0 0
        %673 = vmatmul.mubr.bf16.gmra.mrb[0].mxu0 %v541
        %v674 = vpop.f32.mrb[0].mxu0
        %v675 = vadd.f32 %v425, %v674
        %v676 = vpop.f32.mrb[0].mxu0
        %v677 = vpop.f32.mrb[0].mxu0
        %v678 = vadd.f32 %v425, %v677
        %v679 = vpop.f32.mrb[0].mxu0
        %680 = vmatprep.mubr.bf16.mxu0 0
        %681 = vmatmul.mubr.bf16.gmra.mrb[0].mxu0 %v544
        %v682 = vpop.f32.mrb[0].mxu0
        %v683 = vadd.f32 %v425, %v682
        %v684 = vpop.f32.mrb[0].mxu0
        %v685 = vpop.f32.mrb[0].mxu0
        %v686 = vadd.f32 %v425, %v685
        %v687 = vpop.f32.mrb[0].mxu0
        %688 = vmatprep.mubr.bf16.mxu0 0
        %689 = vmatmul.mubr.bf16.gmra.mrb[0].mxu0 %v547
        %v690 = vpop.f32.mrb[0].mxu0
        %v691 = vadd.f32 %v425, %v690
        %v692 = vpop.f32.mrb[0].mxu0
        %v693 = vpop.f32.mrb[0].mxu0
        %v694 = vadd.f32 %v425, %v693
        %v695 = vpop.f32.mrb[0].mxu0
        %696 = vmatprep.mubr.bf16.mxu0 0
        %697 = vmatmul.mubr.bf16.gmra.mrb[0].mxu0 %v550
        %v698 = vpop.f32.mrb[0].mxu0
        %v699 = vadd.f32 %v425, %v698
        %v700 = vpop.f32.mrb[0].mxu0
        %v701 = vpop.f32.mrb[0].mxu0
        %v702 = vadd.f32 %v425, %v701
        %v703 = vpop.f32.mrb[0].mxu0
        %704 = vmatprep.mubr.bf16.mxu0 0
        %705 = vmatmul.mubr.bf16.gmra.mrb[0].mxu0 %v553
        %v706 = vpop.f32.mrb[0].mxu0
        %v707 = vadd.f32 %v425, %v706
        %v708 = vpop.f32.mrb[0].mxu0
        %v709 = vpop.f32.mrb[0].mxu0
        %v710 = vadd.f32 %v425, %v709
        %v711 = vpop.f32.mrb[0].mxu0
        %712 = vmatprep.mubr.bf16.mxu0 0
        %713 = vmatmul.mubr.bf16.gmra.mrb[0].mxu0 %v556
        %v714 = vpop.f32.mrb[0].mxu0
        %v715 = vadd.f32 %v425, %v714
        %v716 = vpop.f32.mrb[0].mxu0
        %v717 = vpop.f32.mrb[0].mxu0
        %v718 = vadd.f32 %v425, %v717
        %v719 = vpop.f32.mrb[0].mxu0
        %720 = vmatprep.mubr.bf16.mxu0 0
        %721 = vmatmul.mubr.bf16.gmra.mrb[0].mxu0 %v559
        %v722 = vpop.f32.mrb[0].mxu0
        %v723 = vadd.f32 %v425, %v722
        %v724 = vpop.f32.mrb[0].mxu0
        %v725 = vpop.f32.mrb[0].mxu0
        %v726 = vadd.f32 %v425, %v725
        %v727 = vpop.f32.mrb[0].mxu0
        %728 = vdwg.mxu0
        %v729 = vmax.f32 %v603, 0.0
        %v730 = vmax.f32 %v606, 0.0
        %v731 = vmax.f32 %v611, 0.0
        %v732 = vmax.f32 %v614, 0.0
        %v733 = vmax.f32 %v619, 0.0
        %v734 = vmax.f32 %v622, 0.0
        %v735 = vmax.f32 %v627, 0.0
        %v736 = vmax.f32 %v630, 0.0
        %v737 = vmax.f32 %v635, 0.0
        %v738 = vmax.f32 %v638, 0.0
        %v739 = vmax.f32 %v643, 0.0
        %v740 = vmax.f32 %v646, 0.0
        %v741 = vmax.f32 %v651, 0.0
        %v742 = vmax.f32 %v654, 0.0
        %v743 = vmax.f32 %v659, 0.0
        %v744 = vmax.f32 %v662, 0.0
        %v745 = vmax.f32 %v667, 0.0
        %v746 = vmax.f32 %v670, 0.0
        %v747 = vmax.f32 %v675, 0.0
        %v748 = vmax.f32 %v678, 0.0
        %v749 = vmax.f32 %v683, 0.0
        %v750 = vmax.f32 %v686, 0.0
        %v751 = vmax.f32 %v691, 0.0
        %v752 = vmax.f32 %v694, 0.0
        %v753 = vmax.f32 %v699, 0.0
        %v754 = vmax.f32 %v702, 0.0
        %v755 = vmax.f32 %v707, 0.0
        %v756 = vmax.f32 %v710, 0.0
        %v757 = vmax.f32 %v715, 0.0
        %v758 = vmax.f32 %v718, 0.0
        %v759 = vmax.f32 %v723, 0.0
        %v760 = vmax.f32 %v726, 0.0
        %vm761 = vcmask 64512
        %762 = vst.msk [vmem:[#allocation2] sm:$0xff] %vm761, %v729
        %763 = vst.msk [vmem:[#allocation2 + $0x8] sm:$0xff] %vm761, %v730
        %764 = vst.msk [vmem:[#allocation2 + $0x10] sm:$0xff] %vm761, %v731
        %765 = vst.msk [vmem:[#allocation2 + $0x18] sm:$0xff] %vm761, %v732
        %766 = vst.msk [vmem:[#allocation2 + $0x20] sm:$0xff] %vm761, %v733
        %767 = vst.msk [vmem:[#allocation2 + $0x28] sm:$0xff] %vm761, %v734
        %768 = vst.msk [vmem:[#allocation2 + $0x30] sm:$0xff] %vm761, %v735
        %769 = vst.msk [vmem:[#allocation2 + $0x38] sm:$0xff] %vm761, %v736
        %770 = vst.msk [vmem:[#allocation2 + $0x40] sm:$0xff] %vm761, %v737
        %771 = vst.msk [vmem:[#allocation2 + $0x48] sm:$0xff] %vm761, %v738
        %772 = vst.msk [vmem:[#allocation2 + $0x50] sm:$0xff] %vm761, %v739
        %773 = vst.msk [vmem:[#allocation2 + $0x58] sm:$0xff] %vm761, %v740
        %774 = vst.msk [vmem:[#allocation2 + $0x60] sm:$0xff] %vm761, %v741
        %775 = vst.msk [vmem:[#allocation2 + $0x68] sm:$0xff] %vm761, %v742
        %776 = vst.msk [vmem:[#allocation2 + $0x70] sm:$0xff] %vm761, %v743
        %777 = vst.msk [vmem:[#allocation2 + $0x78] sm:$0xff] %vm761, %v744
        %778 = vst.msk [vmem:[#allocation2 + $0x80] sm:$0xff] %vm761, %v745
        %779 = vst.msk [vmem:[#allocation2 + $0x88] sm:$0xff] %vm761, %v746
        %780 = vst.msk [vmem:[#allocation2 + $0x90] sm:$0xff] %vm761, %v747
        %781 = vst.msk [vmem:[#allocation2 + $0x98] sm:$0xff] %vm761, %v748
        %782 = vst.msk [vmem:[#allocation2 + $0xa0] sm:$0xff] %vm761, %v749
        %783 = vst.msk [vmem:[#allocation2 + $0xa8] sm:$0xff] %vm761, %v750
        %784 = vst.msk [vmem:[#allocation2 + $0xb0] sm:$0xff] %vm761, %v751
        %785 = vst.msk [vmem:[#allocation2 + $0xb8] sm:$0xff] %vm761, %v752
        %786 = vst.msk [vmem:[#allocation2 + $0xc0] sm:$0xff] %vm761, %v753
        %787 = vst.msk [vmem:[#allocation2 + $0xc8] sm:$0xff] %vm761, %v754
        %788 = vst.msk [vmem:[#allocation2 + $0xd0] sm:$0xff] %vm761, %v755
        %789 = vst.msk [vmem:[#allocation2 + $0xd8] sm:$0xff] %vm761, %v756
        %790 = vst.msk [vmem:[#allocation2 + $0xe0] sm:$0xff] %vm761, %v757
        %791 = vst.msk [vmem:[#allocation2 + $0xe8] sm:$0xff] %vm761, %v758
        %792 = vst.msk [vmem:[#allocation2 + $0xf0] sm:$0xff] %vm761, %v759
        %793 = vst.msk [vmem:[#allocation2 + $0xf8] sm:$0xff] %vm761, %v760
        %v794 = vld [vmem:[#allocation2] sm:$0xff]
        %v795 = vld [vmem:[#allocation2 + $0x8] sm:$0xff]
        %v796 = vld [vmem:[#allocation2 + $0x10] sm:$0xff]
        %v797 = vld [vmem:[#allocation2 + $0x18] sm:$0xff]
        %v798 = vld [vmem:[#allocation2 + $0x20] sm:$0xff]
        %v799 = vld [vmem:[#allocation2 + $0x28] sm:$0xff]
        %v800 = vld [vmem:[#allocation2 + $0x30] sm:$0xff]
        %v801 = vld [vmem:[#allocation2 + $0x38] sm:$0xff]
        %v802 = vld [vmem:[#allocation2 + $0x40] sm:$0xff]
        %v803 = vld [vmem:[#allocation2 + $0x48] sm:$0xff]
        %v804 = vld [vmem:[#allocation2 + $0x50] sm:$0xff]
        %v805 = vld [vmem:[#allocation2 + $0x58] sm:$0xff]
        %v806 = vld [vmem:[#allocation2 + $0x60] sm:$0xff]
        %v807 = vld [vmem:[#allocation2 + $0x68] sm:$0xff]
        %v808 = vld [vmem:[#allocation2 + $0x70] sm:$0xff]
        %v809 = vld [vmem:[#allocation2 + $0x78] sm:$0xff]
        %v810 = vld [vmem:[#allocation2 + $0x80] sm:$0xff]
        %v811 = vld [vmem:[#allocation2 + $0x88] sm:$0xff]
        %v812 = vld [vmem:[#allocation2 + $0x90] sm:$0xff]
        %v813 = vld [vmem:[#allocation2 + $0x98] sm:$0xff]
        %v814 = vld [vmem:[#allocation2 + $0xa0] sm:$0xff]
        %v815 = vld [vmem:[#allocation2 + $0xa8] sm:$0xff]
        %v816 = vld [vmem:[#allocation2 + $0xb0] sm:$0xff]
        %v817 = vld [vmem:[#allocation2 + $0xb8] sm:$0xff]
        %v818 = vld [vmem:[#allocation2 + $0xc0] sm:$0xff]
        %v819 = vld [vmem:[#allocation2 + $0xc8] sm:$0xff]
        %v820 = vld [vmem:[#allocation2 + $0xd0] sm:$0xff]
        %v821 = vld [vmem:[#allocation2 + $0xd8] sm:$0xff]
        %v822 = vld [vmem:[#allocation2 + $0xe0] sm:$0xff]
        %v823 = vld [vmem:[#allocation2 + $0xe8] sm:$0xff]
        %v824 = vld [vmem:[#allocation2 + $0xf0] sm:$0xff]
        %v825 = vld [vmem:[#allocation2 + $0xf8] sm:$0xff]
        %v826 = vpack.c.bf16 %v795, %v794
        %v827 = vpack.c.bf16 %v797, %v796
        %v828 = vpack.c.bf16 %v799, %v798
        %v829 = vpack.c.bf16 %v801, %v800
        %v830 = vpack.c.bf16 %v803, %v802
        %v831 = vpack.c.bf16 %v805, %v804
        %v832 = vpack.c.bf16 %v807, %v806
        %v833 = vpack.c.bf16 %v809, %v808
        %v834 = vpack.c.bf16 %v811, %v810
        %v835 = vpack.c.bf16 %v813, %v812
        %v836 = vpack.c.bf16 %v815, %v814
        %v837 = vpack.c.bf16 %v817, %v816
        %v838 = vpack.c.bf16 %v819, %v818
        %v839 = vpack.c.bf16 %v821, %v820
        %v840 = vpack.c.bf16 %v823, %v822
        %v841 = vpack.c.bf16 %v825, %v824
        %v842 = vld [vmem:[%s3] sm:$0xf]
        %v843 = vld [vmem:[%s3 + $0x4] sm:$0xf]
        %v844 = vld [vmem:[#allocation6] sm:$0x1]
        %v846 = vlaneseq
        %v847 = vshrl.u32 %v846, 7
        %v848 = vsub.s32 0, %v847
        %v849 = vrot.slane %v844, %v848
        %v853 = vunpack.c.l.b16 %v842
        %v854 = vunpack.c.l.b16 %v843
        %v855 = vpack.c.b16 %v854, %v853
        %vm857 = vcmask 130048
        %v859 = vsel %vm857, %v826, 0
        %v862 = vsel %vm857, %v827, 0
        %v865 = vsel %vm857, %v828, 0
        %v868 = vsel %vm857, %v829, 0
        %v871 = vsel %vm857, %v830, 0
        %v874 = vsel %vm857, %v831, 0
        %v877 = vsel %vm857, %v832, 0
        %v880 = vsel %vm857, %v833, 0
        %v883 = vsel %vm857, %v834, 0
        %v886 = vsel %vm857, %v835, 0
        %v889 = vsel %vm857, %v836, 0
        %v892 = vsel %vm857, %v837, 0
        %v895 = vsel %vm857, %v838, 0
        %v898 = vsel %vm857, %v839, 0
        %v901 = vsel %vm857, %v840, 0
        %v904 = vsel %vm857, %v841, 0
        %906 = vmatprep.subr.bf16.mxu0 0
        %907 = vmatpush1.bf16.msra.mxu0 %v855
        %908 = vmatprep.subr.bf16.mxu0 0
        %909 = vmatpush1.bf16.msra.mxu0 0
        %910 = vmatprep.subr.bf16.mxu0 0
        %911 = vmatpush1.bf16.msra.mxu0 0
        %912 = vmatprep.subr.bf16.mxu0 0
        %913 = vmatpush1.bf16.msra.mxu0 0
        %914 = vmatprep.subr.bf16.mxu0 0
        %915 = vmatpush1.bf16.msra.mxu0 0
        %916 = vmatprep.subr.bf16.mxu0 0
        %917 = vmatpush1.bf16.msra.mxu0 0
        %918 = vmatprep.subr.bf16.mxu0 0
        %919 = vmatpush1.bf16.msra.mxu0 0
        %920 = vmatprep.subr.bf16.mxu0 0
        %921 = vmatpush1.bf16.msra.mxu0 0
        %922 = vmatprep.subr.bf16.mxu0 0
        %923 = vmatpush1.bf16.msra.mxu0 0
        %924 = vmatprep.subr.bf16.mxu0 0
        %925 = vmatpush1.bf16.msra.mxu0 0
        %926 = vmatprep.subr.bf16.mxu0 0
        %927 = vmatpush1.bf16.msra.mxu0 0
        %928 = vmatprep.subr.bf16.mxu0 0
        %929 = vmatpush1.bf16.msra.mxu0 0
        %930 = vmatprep.subr.bf16.mxu0 0
        %931 = vmatpush1.bf16.msra.mxu0 0
        %932 = vmatprep.subr.bf16.mxu0 0
        %933 = vmatpush1.bf16.msra.mxu0 0
        %934 = vmatprep.subr.bf16.mxu0 0
        %935 = vmatpush1.bf16.msra.mxu0 0
        %936 = vmatprep.subr.bf16.mxu0 0
        %937 = vmatpush1.bf16.msra.mxu0 0
        %938 = vmatprep.mubr.bf16.mxu0 0
        %939 = vmatmul.mubr.bf16.gmra.mrb[0].mxu0 %v859
        %v940 = vpop.f32.mrb[0].mxu0
        %v941 = vadd.f32 %v849, %v940
        %v942 = vpop.f32.mrb[0].mxu0
        %v943 = vpop.f32.mrb[0].mxu0
        %v944 = vadd.f32 %v849, %v943
        %v945 = vpop.f32.mrb[0].mxu0
        %946 = vmatprep.mubr.bf16.mxu0 0
        %947 = vmatmul.mubr.bf16.gmra.mrb[0].mxu0 %v862
        %v948 = vpop.f32.mrb[0].mxu0
        %v949 = vadd.f32 %v849, %v948
        %v950 = vpop.f32.mrb[0].mxu0
        %v951 = vpop.f32.mrb[0].mxu0
        %v952 = vadd.f32 %v849, %v951
        %v953 = vpop.f32.mrb[0].mxu0
        %954 = vmatprep.mubr.bf16.mxu0 0
        %955 = vmatmul.mubr.bf16.gmra.mrb[0].mxu0 %v865
        %v956 = vpop.f32.mrb[0].mxu0
        %v957 = vadd.f32 %v849, %v956
        %v958 = vpop.f32.mrb[0].mxu0
        %v959 = vpop.f32.mrb[0].mxu0
        %v960 = vadd.f32 %v849, %v959
        %v961 = vpop.f32.mrb[0].mxu0
        %962 = vmatprep.mubr.bf16.mxu0 0
        %963 = vmatmul.mubr.bf16.gmra.mrb[0].mxu0 %v868
        %v964 = vpop.f32.mrb[0].mxu0
        %v965 = vadd.f32 %v849, %v964
        %v966 = vpop.f32.mrb[0].mxu0
        %v967 = vpop.f32.mrb[0].mxu0
        %v968 = vadd.f32 %v849, %v967
        %v969 = vpop.f32.mrb[0].mxu0
        %970 = vmatprep.mubr.bf16.mxu0 0
        %971 = vmatmul.mubr.bf16.gmra.mrb[0].mxu0 %v871
        %v972 = vpop.f32.mrb[0].mxu0
        %v973 = vadd.f32 %v849, %v972
        %v974 = vpop.f32.mrb[0].mxu0
        %v975 = vpop.f32.mrb[0].mxu0
        %v976 = vadd.f32 %v849, %v975
        %v977 = vpop.f32.mrb[0].mxu0
        %978 = vmatprep.mubr.bf16.mxu0 0
        %979 = vmatmul.mubr.bf16.gmra.mrb[0].mxu0 %v874
        %v980 = vpop.f32.mrb[0].mxu0
        %v981 = vadd.f32 %v849, %v980
        %v982 = vpop.f32.mrb[0].mxu0
        %v983 = vpop.f32.mrb[0].mxu0
        %v984 = vadd.f32 %v849, %v983
        %v985 = vpop.f32.mrb[0].mxu0
        %986 = vmatprep.mubr.bf16.mxu0 0
        %987 = vmatmul.mubr.bf16.gmra.mrb[0].mxu0 %v877
        %v988 = vpop.f32.mrb[0].mxu0
        %v989 = vadd.f32 %v849, %v988
        %v990 = vpop.f32.mrb[0].mxu0
        %v991 = vpop.f32.mrb[0].mxu0
        %v992 = vadd.f32 %v849, %v991
        %v993 = vpop.f32.mrb[0].mxu0
        %994 = vmatprep.mubr.bf16.mxu0 0
        %995 = vmatmul.mubr.bf16.gmra.mrb[0].mxu0 %v880
        %v996 = vpop.f32.mrb[0].mxu0
        %v997 = vadd.f32 %v849, %v996
        %v998 = vpop.f32.mrb[0].mxu0
        %v999 = vpop.f32.mrb[0].mxu0
        %v1000 = vadd.f32 %v849, %v999
        %v1001 = vpop.f32.mrb[0].mxu0
        %1002 = vmatprep.mubr.bf16.mxu0 0
        %1003 = vmatmul.mubr.bf16.gmra.mrb[0].mxu0 %v883
        %v1004 = vpop.f32.mrb[0].mxu0
        %v1005 = vadd.f32 %v849, %v1004
        %v1006 = vpop.f32.mrb[0].mxu0
        %v1007 = vpop.f32.mrb[0].mxu0
        %v1008 = vadd.f32 %v849, %v1007
        %v1009 = vpop.f32.mrb[0].mxu0
        %1010 = vmatprep.mubr.bf16.mxu0 0
        %1011 = vmatmul.mubr.bf16.gmra.mrb[0].mxu0 %v886
        %v1012 = vpop.f32.mrb[0].mxu0
        %v1013 = vadd.f32 %v849, %v1012
        %v1014 = vpop.f32.mrb[0].mxu0
        %v1015 = vpop.f32.mrb[0].mxu0
        %v1016 = vadd.f32 %v849, %v1015
        %v1017 = vpop.f32.mrb[0].mxu0
        %1018 = vmatprep.mubr.bf16.mxu0 0
        %1019 = vmatmul.mubr.bf16.gmra.mrb[0].mxu0 %v889
        %v1020 = vpop.f32.mrb[0].mxu0
        %v1021 = vadd.f32 %v849, %v1020
        %v1022 = vpop.f32.mrb[0].mxu0
        %v1023 = vpop.f32.mrb[0].mxu0
        %v1024 = vadd.f32 %v849, %v1023
        %v1025 = vpop.f32.mrb[0].mxu0
        %1026 = vmatprep.mubr.bf16.mxu0 0
        %1027 = vmatmul.mubr.bf16.gmra.mrb[0].mxu0 %v892
        %v1028 = vpop.f32.mrb[0].mxu0
        %v1029 = vadd.f32 %v849, %v1028
        %v1030 = vpop.f32.mrb[0].mxu0
        %v1031 = vpop.f32.mrb[0].mxu0
        %v1032 = vadd.f32 %v849, %v1031
        %v1033 = vpop.f32.mrb[0].mxu0
        %1034 = vmatprep.mubr.bf16.mxu0 0
        %1035 = vmatmul.mubr.bf16.gmra.mrb[0].mxu0 %v895
        %v1036 = vpop.f32.mrb[0].mxu0
        %v1037 = vadd.f32 %v849, %v1036
        %v1038 = vpop.f32.mrb[0].mxu0
        %v1039 = vpop.f32.mrb[0].mxu0
        %v1040 = vadd.f32 %v849, %v1039
        %v1041 = vpop.f32.mrb[0].mxu0
        %1042 = vmatprep.mubr.bf16.mxu0 0
        %1043 = vmatmul.mubr.bf16.gmra.mrb[0].mxu0 %v898
        %v1044 = vpop.f32.mrb[0].mxu0
        %v1045 = vadd.f32 %v849, %v1044
        %v1046 = vpop.f32.mrb[0].mxu0
        %v1047 = vpop.f32.mrb[0].mxu0
        %v1048 = vadd.f32 %v849, %v1047
        %v1049 = vpop.f32.mrb[0].mxu0
        %1050 = vmatprep.mubr.bf16.mxu0 0
        %1051 = vmatmul.mubr.bf16.gmra.mrb[0].mxu0 %v901
        %v1052 = vpop.f32.mrb[0].mxu0
        %v1053 = vadd.f32 %v849, %v1052
        %v1054 = vpop.f32.mrb[0].mxu0
        %v1055 = vpop.f32.mrb[0].mxu0
        %v1056 = vadd.f32 %v849, %v1055
        %v1057 = vpop.f32.mrb[0].mxu0
        %1058 = vmatprep.mubr.bf16.mxu0 0
        %1059 = vmatmul.mubr.bf16.gmra.mrb[0].mxu0 %v904
        %v1060 = vpop.f32.mrb[0].mxu0
        %v1061 = vadd.f32 %v849, %v1060
        %v1062 = vpop.f32.mrb[0].mxu0
        %v1063 = vpop.f32.mrb[0].mxu0
        %v1064 = vadd.f32 %v849, %v1063
        %v1065 = vpop.f32.mrb[0].mxu0
        %1066 = vdwg.mxu0
        %v1067 = vtanh.pop %v941
        %v1068 = vtanh.pop %v944
        %v1069 = vtanh.pop %v949
        %v1070 = vtanh.pop %v952
        %v1071 = vtanh.pop %v957
        %v1072 = vtanh.pop %v960
        %v1073 = vtanh.pop %v965
        %v1074 = vtanh.pop %v968
        %v1075 = vtanh.pop %v973
        %v1076 = vtanh.pop %v976
        %v1077 = vtanh.pop %v981
        %v1078 = vtanh.pop %v984
        %v1079 = vtanh.pop %v989
        %v1080 = vtanh.pop %v992
        %v1081 = vtanh.pop %v997
        %v1082 = vtanh.pop %v1000
        %v1083 = vtanh.pop %v1005
        %v1084 = vtanh.pop %v1008
        %v1085 = vtanh.pop %v1013
        %v1086 = vtanh.pop %v1016
        %v1087 = vtanh.pop %v1021
        %v1088 = vtanh.pop %v1024
        %v1089 = vtanh.pop %v1029
        %v1090 = vtanh.pop %v1032
        %v1091 = vtanh.pop %v1037
        %v1092 = vtanh.pop %v1040
        %v1093 = vtanh.pop %v1045
        %v1094 = vtanh.pop %v1048
        %v1095 = vtanh.pop %v1053
        %v1096 = vtanh.pop %v1056
        %v1097 = vtanh.pop %v1061
        %v1098 = vtanh.pop %v1064
        %1131 = vrot.lane.b32.xlu0 %v1067, 8
        %v1132 = vpop.permute.xlu0 %1131
        %1133 = vrot.lane.b32.xlu0 %v1068, 8
        %v1134 = vpop.permute.xlu0 %1133
        %1135 = vrot.lane.b32.xlu0 %v1069, 8
        %v1136 = vpop.permute.xlu0 %1135
        %1137 = vrot.lane.b32.xlu0 %v1070, 8
        %v1138 = vpop.permute.xlu0 %1137
        %1139 = vrot.lane.b32.xlu0 %v1071, 8
        %v1140 = vpop.permute.xlu0 %1139
        %1141 = vrot.lane.b32.xlu0 %v1072, 8
        %v1142 = vpop.permute.xlu0 %1141
        %1143 = vrot.lane.b32.xlu0 %v1073, 8
        %v1144 = vpop.permute.xlu0 %1143
        %1145 = vrot.lane.b32.xlu0 %v1074, 8
        %v1146 = vpop.permute.xlu0 %1145
        %1147 = vrot.lane.b32.xlu0 %v1075, 8
        %v1148 = vpop.permute.xlu0 %1147
        %1149 = vrot.lane.b32.xlu0 %v1076, 8
        %v1150 = vpop.permute.xlu0 %1149
        %1151 = vrot.lane.b32.xlu0 %v1077, 8
        %v1152 = vpop.permute.xlu0 %1151
        %1153 = vrot.lane.b32.xlu0 %v1078, 8
        %v1154 = vpop.permute.xlu0 %1153
        %1155 = vrot.lane.b32.xlu0 %v1079, 8
        %v1156 = vpop.permute.xlu0 %1155
        %1157 = vrot.lane.b32.xlu0 %v1080, 8
        %v1158 = vpop.permute.xlu0 %1157
        %1159 = vrot.lane.b32.xlu0 %v1081, 8
        %v1160 = vpop.permute.xlu0 %1159
        %1161 = vrot.lane.b32.xlu0 %v1082, 8
        %v1162 = vpop.permute.xlu0 %1161
        %1163 = vrot.lane.b32.xlu0 %v1083, 8
        %v1164 = vpop.permute.xlu0 %1163
        %1165 = vrot.lane.b32.xlu0 %v1084, 8
        %v1166 = vpop.permute.xlu0 %1165
        %1167 = vrot.lane.b32.xlu0 %v1085, 8
        %v1168 = vpop.permute.xlu0 %1167
        %1169 = vrot.lane.b32.xlu0 %v1086, 8
        %v1170 = vpop.permute.xlu0 %1169
        %1171 = vrot.lane.b32.xlu0 %v1087, 8
        %v1172 = vpop.permute.xlu0 %1171
        %1173 = vrot.lane.b32.xlu0 %v1088, 8
        %v1174 = vpop.permute.xlu0 %1173
        %1175 = vrot.lane.b32.xlu0 %v1089, 8
        %v1176 = vpop.permute.xlu0 %1175
        %1177 = vrot.lane.b32.xlu0 %v1090, 8
        %v1178 = vpop.permute.xlu0 %1177
        %1179 = vrot.lane.b32.xlu0 %v1091, 8
        %v1180 = vpop.permute.xlu0 %1179
        %1181 = vrot.lane.b32.xlu0 %v1092, 8
        %v1182 = vpop.permute.xlu0 %1181
        %1183 = vrot.lane.b32.xlu0 %v1093, 8
        %v1184 = vpop.permute.xlu0 %1183
        %1185 = vrot.lane.b32.xlu0 %v1094, 8
        %v1186 = vpop.permute.xlu0 %1185
        %1187 = vrot.lane.b32.xlu0 %v1095, 8
        %v1188 = vpop.permute.xlu0 %1187
        %1189 = vrot.lane.b32.xlu0 %v1096, 8
        %v1190 = vpop.permute.xlu0 %1189
        %1191 = vrot.lane.b32.xlu0 %v1097, 8
        %v1192 = vpop.permute.xlu0 %1191
        %1193 = vrot.lane.b32.xlu0 %v1098, 8
        %v1194 = vpop.permute.xlu0 %1193
        %vm1227 = vcmask 130112
        %1228 = vst.msk [vmem:[#allocation2] sm:$0xff] %vm1227, %v1132
        %1229 = vst.msk [vmem:[#allocation2 + $0x8] sm:$0xff] %vm1227, %v1134
        %1230 = vst.msk [vmem:[#allocation2 + $0x10] sm:$0xff] %vm1227, %v1136
        %1231 = vst.msk [vmem:[#allocation2 + $0x18] sm:$0xff] %vm1227, %v1138
        %1232 = vst.msk [vmem:[#allocation2 + $0x20] sm:$0xff] %vm1227, %v1140
        %1233 = vst.msk [vmem:[#allocation2 + $0x28] sm:$0xff] %vm1227, %v1142
        %1234 = vst.msk [vmem:[#allocation2 + $0x30] sm:$0xff] %vm1227, %v1144
        %1235 = vst.msk [vmem:[#allocation2 + $0x38] sm:$0xff] %vm1227, %v1146
        %1236 = vst.msk [vmem:[#allocation2 + $0x40] sm:$0xff] %vm1227, %v1148
        %1237 = vst.msk [vmem:[#allocation2 + $0x48] sm:$0xff] %vm1227, %v1150
        %1238 = vst.msk [vmem:[#allocation2 + $0x50] sm:$0xff] %vm1227, %v1152
        %1239 = vst.msk [vmem:[#allocation2 + $0x58] sm:$0xff] %vm1227, %v1154
        %1240 = vst.msk [vmem:[#allocation2 + $0x60] sm:$0xff] %vm1227, %v1156
        %1241 = vst.msk [vmem:[#allocation2 + $0x68] sm:$0xff] %vm1227, %v1158
        %1242 = vst.msk [vmem:[#allocation2 + $0x70] sm:$0xff] %vm1227, %v1160
        %1243 = vst.msk [vmem:[#allocation2 + $0x78] sm:$0xff] %vm1227, %v1162
        %1244 = vst.msk [vmem:[#allocation2 + $0x80] sm:$0xff] %vm1227, %v1164
        %1245 = vst.msk [vmem:[#allocation2 + $0x88] sm:$0xff] %vm1227, %v1166
        %1246 = vst.msk [vmem:[#allocation2 + $0x90] sm:$0xff] %vm1227, %v1168
        %1247 = vst.msk [vmem:[#allocation2 + $0x98] sm:$0xff] %vm1227, %v1170
        %1248 = vst.msk [vmem:[#allocation2 + $0xa0] sm:$0xff] %vm1227, %v1172
        %1249 = vst.msk [vmem:[#allocation2 + $0xa8] sm:$0xff] %vm1227, %v1174
        %1250 = vst.msk [vmem:[#allocation2 + $0xb0] sm:$0xff] %vm1227, %v1176
        %1251 = vst.msk [vmem:[#allocation2 + $0xb8] sm:$0xff] %vm1227, %v1178
        %1252 = vst.msk [vmem:[#allocation2 + $0xc0] sm:$0xff] %vm1227, %v1180
        %1253 = vst.msk [vmem:[#allocation2 + $0xc8] sm:$0xff] %vm1227, %v1182
        %1254 = vst.msk [vmem:[#allocation2 + $0xd0] sm:$0xff] %vm1227, %v1184
        %1255 = vst.msk [vmem:[#allocation2 + $0xd8] sm:$0xff] %vm1227, %v1186
        %1256 = vst.msk [vmem:[#allocation2 + $0xe0] sm:$0xff] %vm1227, %v1188
        %1257 = vst.msk [vmem:[#allocation2 + $0xe8] sm:$0xff] %vm1227, %v1190
        %1258 = vst.msk [vmem:[#allocation2 + $0xf0] sm:$0xff] %vm1227, %v1192
        %1259 = vst.msk [vmem:[#allocation2 + $0xf8] sm:$0xff] %vm1227, %v1194
        %p1260 = scmp.eq.s32.totalorder %s26, 2
        // Predicated region
        $region65: #{forward.3} parent=47 // pred_check
          %p1261 = pneg %p1260
        $region66: #{forward.3} parent=47 // pred_check_branch
          %1263 = sbr.rel (%p1261) target = $region68
        $region67: #{forward.3} parent=47 // pred_region
          %v1264 = vpack.c.bf16 %v1068, %v1067
          %v1265 = vpack.c.bf16 %v1070, %v1069
          %v1266 = vpack.c.bf16 %v1072, %v1071
          %v1267 = vpack.c.bf16 %v1074, %v1073
          %v1268 = vpack.c.bf16 %v1076, %v1075
          %v1269 = vpack.c.bf16 %v1078, %v1077
          %v1270 = vpack.c.bf16 %v1080, %v1079
          %v1271 = vpack.c.bf16 %v1082, %v1081
          %v1272 = vpack.c.bf16 %v1084, %v1083
          %v1273 = vpack.c.bf16 %v1086, %v1085
          %v1274 = vpack.c.bf16 %v1088, %v1087
          %v1275 = vpack.c.bf16 %v1090, %v1089
          %v1276 = vpack.c.bf16 %v1092, %v1091
          %v1277 = vpack.c.bf16 %v1094, %v1093
          %v1278 = vpack.c.bf16 %v1096, %v1095
          %v1279 = vpack.c.bf16 %v1098, %v1097
          %v1280 = vld [vmem:[%s5] sm:$0xf]
          %v1282 = vsel %vm761, %v1264, 0
          %v1285 = vsel %vm761, %v1265, 0
          %v1288 = vsel %vm761, %v1266, 0
          %v1291 = vsel %vm761, %v1267, 0
          %v1294 = vsel %vm761, %v1268, 0
          %v1297 = vsel %vm761, %v1269, 0
          %v1300 = vsel %vm761, %v1270, 0
          %v1303 = vsel %vm761, %v1271, 0
          %v1306 = vsel %vm761, %v1272, 0
          %v1309 = vsel %vm761, %v1273, 0
          %v1312 = vsel %vm761, %v1274, 0
          %v1315 = vsel %vm761, %v1275, 0
          %v1318 = vsel %vm761, %v1276, 0
          %v1321 = vsel %vm761, %v1277, 0
          %v1324 = vsel %vm761, %v1278, 0
          %v1327 = vsel %vm761, %v1279, 0
          %v1330 = vsel %vm561, %v1280, 0
          %1332 = vmatprep.subr.bf16.mxu0 0
          %1333 = vmatpush1.bf16.msra.mxu0 %v1330
          %1334 = vmatprep.subr.bf16.mxu0 0
          %1335 = vmatpush1.bf16.msra.mxu0 0
          %1336 = vmatprep.subr.bf16.mxu0 0
          %1337 = vmatpush1.bf16.msra.mxu0 0
          %1338 = vmatprep.subr.bf16.mxu0 0
          %1339 = vmatpush1.bf16.msra.mxu0 0
          %1340 = vmatprep.subr.bf16.mxu0 0
          %1341 = vmatpush1.bf16.msra.mxu0 0
          %1342 = vmatprep.subr.bf16.mxu0 0
          %1343 = vmatpush1.bf16.msra.mxu0 0
          %1344 = vmatprep.subr.bf16.mxu0 0
          %1345 = vmatpush1.bf16.msra.mxu0 0
          %1346 = vmatprep.subr.bf16.mxu0 0
          %1347 = vmatpush1.bf16.msra.mxu0 0
          %1348 = vmatprep.subr.bf16.mxu0 0
          %1349 = vmatpush1.bf16.msra.mxu0 0
          %1350 = vmatprep.subr.bf16.mxu0 0
          %1351 = vmatpush1.bf16.msra.mxu0 0
          %1352 = vmatprep.subr.bf16.mxu0 0
          %1353 = vmatpush1.bf16.msra.mxu0 0
          %1354 = vmatprep.subr.bf16.mxu0 0
          %1355 = vmatpush1.bf16.msra.mxu0 0
          %1356 = vmatprep.subr.bf16.mxu0 0
          %1357 = vmatpush1.bf16.msra.mxu0 0
          %1358 = vmatprep.subr.bf16.mxu0 0
          %1359 = vmatpush1.bf16.msra.mxu0 0
          %1360 = vmatprep.subr.bf16.mxu0 0
          %1361 = vmatpush1.bf16.msra.mxu0 0
          %1362 = vmatprep.subr.bf16.mxu0 0
          %1363 = vmatpush1.bf16.msra.mxu0 0
          %1364 = vmatprep.mubr.bf16.mxu0 0
          %1365 = vmatmul.mubr.bf16.gmra.mrb[0].mxu0 %v1282
          %v1366 = vpop.f32.mrb[0].mxu0
          %v1367 = vadd.f32 0.0, %v1366
          %v1368 = vpop.f32.mrb[0].mxu0
          %v1369 = vpop.f32.mrb[0].mxu0
          %v1370 = vadd.f32 0.0, %v1369
          %v1371 = vpop.f32.mrb[0].mxu0
          %1372 = vmatprep.mubr.bf16.mxu0 0
          %1373 = vmatmul.mubr.bf16.gmra.mrb[0].mxu0 %v1285
          %v1374 = vpop.f32.mrb[0].mxu0
          %v1375 = vadd.f32 0.0, %v1374
          %v1376 = vpop.f32.mrb[0].mxu0
          %v1377 = vpop.f32.mrb[0].mxu0
          %v1378 = vadd.f32 0.0, %v1377
          %v1379 = vpop.f32.mrb[0].mxu0
          %1380 = vmatprep.mubr.bf16.mxu0 0
          %1381 = vmatmul.mubr.bf16.gmra.mrb[0].mxu0 %v1288
          %v1382 = vpop.f32.mrb[0].mxu0
          %v1383 = vadd.f32 0.0, %v1382
          %v1384 = vpop.f32.mrb[0].mxu0
          %v1385 = vpop.f32.mrb[0].mxu0
          %v1386 = vadd.f32 0.0, %v1385
          %v1387 = vpop.f32.mrb[0].mxu0
          %1388 = vmatprep.mubr.bf16.mxu0 0
          %1389 = vmatmul.mubr.bf16.gmra.mrb[0].mxu0 %v1291
          %v1390 = vpop.f32.mrb[0].mxu0
          %v1391 = vadd.f32 0.0, %v1390
          %v1392 = vpop.f32.mrb[0].mxu0
          %v1393 = vpop.f32.mrb[0].mxu0
          %v1394 = vadd.f32 0.0, %v1393
          %v1395 = vpop.f32.mrb[0].mxu0
          %1396 = vmatprep.mubr.bf16.mxu0 0
          %1397 = vmatmul.mubr.bf16.gmra.mrb[0].mxu0 %v1294
          %v1398 = vpop.f32.mrb[0].mxu0
          %v1399 = vadd.f32 0.0, %v1398
          %v1400 = vpop.f32.mrb[0].mxu0
          %v1401 = vpop.f32.mrb[0].mxu0
          %v1402 = vadd.f32 0.0, %v1401
          %v1403 = vpop.f32.mrb[0].mxu0
          %1404 = vmatprep.mubr.bf16.mxu0 0
          %1405 = vmatmul.mubr.bf16.gmra.mrb[0].mxu0 %v1297
          %v1406 = vpop.f32.mrb[0].mxu0
          %v1407 = vadd.f32 0.0, %v1406
          %v1408 = vpop.f32.mrb[0].mxu0
          %v1409 = vpop.f32.mrb[0].mxu0
          %v1410 = vadd.f32 0.0, %v1409
          %v1411 = vpop.f32.mrb[0].mxu0
          %1412 = vmatprep.mubr.bf16.mxu0 0
          %1413 = vmatmul.mubr.bf16.gmra.mrb[0].mxu0 %v1300
          %v1414 = vpop.f32.mrb[0].mxu0
          %v1415 = vadd.f32 0.0, %v1414
          %v1416 = vpop.f32.mrb[0].mxu0
          %v1417 = vpop.f32.mrb[0].mxu0
          %v1418 = vadd.f32 0.0, %v1417
          %v1419 = vpop.f32.mrb[0].mxu0
          %1420 = vmatprep.mubr.bf16.mxu0 0
          %1421 = vmatmul.mubr.bf16.gmra.mrb[0].mxu0 %v1303
          %v1422 = vpop.f32.mrb[0].mxu0
          %v1423 = vadd.f32 0.0, %v1422
          %v1424 = vpop.f32.mrb[0].mxu0
          %v1425 = vpop.f32.mrb[0].mxu0
          %v1426 = vadd.f32 0.0, %v1425
          %v1427 = vpop.f32.mrb[0].mxu0
          %1428 = vmatprep.mubr.bf16.mxu0 0
          %1429 = vmatmul.mubr.bf16.gmra.mrb[0].mxu0 %v1306
          %v1430 = vpop.f32.mrb[0].mxu0
          %v1431 = vadd.f32 0.0, %v1430
          %v1432 = vpop.f32.mrb[0].mxu0
          %v1433 = vpop.f32.mrb[0].mxu0
          %v1434 = vadd.f32 0.0, %v1433
          %v1435 = vpop.f32.mrb[0].mxu0
          %1436 = vmatprep.mubr.bf16.mxu0 0
          %1437 = vmatmul.mubr.bf16.gmra.mrb[0].mxu0 %v1309
          %v1438 = vpop.f32.mrb[0].mxu0
          %v1439 = vadd.f32 0.0, %v1438
          %v1440 = vpop.f32.mrb[0].mxu0
          %v1441 = vpop.f32.mrb[0].mxu0
          %v1442 = vadd.f32 0.0, %v1441
          %v1443 = vpop.f32.mrb[0].mxu0
          %1444 = vmatprep.mubr.bf16.mxu0 0
          %1445 = vmatmul.mubr.bf16.gmra.mrb[0].mxu0 %v1312
          %v1446 = vpop.f32.mrb[0].mxu0
          %v1447 = vadd.f32 0.0, %v1446
          %v1448 = vpop.f32.mrb[0].mxu0
          %v1449 = vpop.f32.mrb[0].mxu0
          %v1450 = vadd.f32 0.0, %v1449
          %v1451 = vpop.f32.mrb[0].mxu0
          %1452 = vmatprep.mubr.bf16.mxu0 0
          %1453 = vmatmul.mubr.bf16.gmra.mrb[0].mxu0 %v1315
          %v1454 = vpop.f32.mrb[0].mxu0
          %v1455 = vadd.f32 0.0, %v1454
          %v1456 = vpop.f32.mrb[0].mxu0
          %v1457 = vpop.f32.mrb[0].mxu0
          %v1458 = vadd.f32 0.0, %v1457
          %v1459 = vpop.f32.mrb[0].mxu0
          %1460 = vmatprep.mubr.bf16.mxu0 0
          %1461 = vmatmul.mubr.bf16.gmra.mrb[0].mxu0 %v1318
          %v1462 = vpop.f32.mrb[0].mxu0
          %v1463 = vadd.f32 0.0, %v1462
          %v1464 = vpop.f32.mrb[0].mxu0
          %v1465 = vpop.f32.mrb[0].mxu0
          %v1466 = vadd.f32 0.0, %v1465
          %v1467 = vpop.f32.mrb[0].mxu0
          %1468 = vmatprep.mubr.bf16.mxu0 0
          %1469 = vmatmul.mubr.bf16.gmra.mrb[0].mxu0 %v1321
          %v1470 = vpop.f32.mrb[0].mxu0
          %v1471 = vadd.f32 0.0, %v1470
          %v1472 = vpop.f32.mrb[0].mxu0
          %v1473 = vpop.f32.mrb[0].mxu0
          %v1474 = vadd.f32 0.0, %v1473
          %v1475 = vpop.f32.mrb[0].mxu0
          %1476 = vmatprep.mubr.bf16.mxu0 0
          %1477 = vmatmul.mubr.bf16.gmra.mrb[0].mxu0 %v1324
          %v1478 = vpop.f32.mrb[0].mxu0
          %v1479 = vadd.f32 0.0, %v1478
          %v1480 = vpop.f32.mrb[0].mxu0
          %v1481 = vpop.f32.mrb[0].mxu0
          %v1482 = vadd.f32 0.0, %v1481
          %v1483 = vpop.f32.mrb[0].mxu0
          %1484 = vmatprep.mubr.bf16.mxu0 0
          %1485 = vmatmul.mubr.bf16.gmra.mrb[0].mxu0 %v1327
          %v1486 = vpop.f32.mrb[0].mxu0
          %v1487 = vadd.f32 0.0, %v1486
          %v1488 = vpop.f32.mrb[0].mxu0
          %v1489 = vpop.f32.mrb[0].mxu0
          %v1490 = vadd.f32 0.0, %v1489
          %v1491 = vpop.f32.mrb[0].mxu0
          %1492 = vdwg.mxu0
          %s1493 = sld [smem:[#allocation8]]
          %v1494 = vstv %s1493
          %v1495 = vmul.f32 %v1367, %v1494
          %v1496 = vmul.f32 %v1370, %v1494
          %v1497 = vmul.f32 %v1375, %v1494
          %v1498 = vmul.f32 %v1378, %v1494
          %v1499 = vmul.f32 %v1383, %v1494
          %v1500 = vmul.f32 %v1386, %v1494
          %v1501 = vmul.f32 %v1391, %v1494
          %v1502 = vmul.f32 %v1394, %v1494
          %v1503 = vmul.f32 %v1399, %v1494
          %v1504 = vmul.f32 %v1402, %v1494
          %v1505 = vmul.f32 %v1407, %v1494
          %v1506 = vmul.f32 %v1410, %v1494
          %v1507 = vmul.f32 %v1415, %v1494
          %v1508 = vmul.f32 %v1418, %v1494
          %v1509 = vmul.f32 %v1423, %v1494
          %v1510 = vmul.f32 %v1426, %v1494
          %v1511 = vmul.f32 %v1431, %v1494
          %v1512 = vmul.f32 %v1434, %v1494
          %v1513 = vmul.f32 %v1439, %v1494
          %v1514 = vmul.f32 %v1442, %v1494
          %v1515 = vmul.f32 %v1447, %v1494
          %v1516 = vmul.f32 %v1450, %v1494
          %v1517 = vmul.f32 %v1455, %v1494
          %v1518 = vmul.f32 %v1458, %v1494
          %v1519 = vmul.f32 %v1463, %v1494
          %v1520 = vmul.f32 %v1466, %v1494
          %v1521 = vmul.f32 %v1471, %v1494
          %v1522 = vmul.f32 %v1474, %v1494
          %v1523 = vmul.f32 %v1479, %v1494
          %v1524 = vmul.f32 %v1482, %v1494
          %v1525 = vmul.f32 %v1487, %v1494
          %v1526 = vmul.f32 %v1490, %v1494
          %s1527 = sld [smem:[#allocation8 + $0x1]]
          %v1528 = vstv %s1527
          %v1529 = vadd.f32 %v1495, %v1528
          %v1530 = vadd.f32 %v1496, %v1528
          %v1531 = vadd.f32 %v1497, %v1528
          %v1532 = vadd.f32 %v1498, %v1528
          %v1533 = vadd.f32 %v1499, %v1528
          %v1534 = vadd.f32 %v1500, %v1528
          %v1535 = vadd.f32 %v1501, %v1528
          %v1536 = vadd.f32 %v1502, %v1528
          %v1537 = vadd.f32 %v1503, %v1528
          %v1538 = vadd.f32 %v1504, %v1528
          %v1539 = vadd.f32 %v1505, %v1528
          %v1540 = vadd.f32 %v1506, %v1528
          %v1541 = vadd.f32 %v1507, %v1528
          %v1542 = vadd.f32 %v1508, %v1528
          %v1543 = vadd.f32 %v1509, %v1528
          %v1544 = vadd.f32 %v1510, %v1528
          %v1545 = vadd.f32 %v1511, %v1528
          %v1546 = vadd.f32 %v1512, %v1528
          %v1547 = vadd.f32 %v1513, %v1528
          %v1548 = vadd.f32 %v1514, %v1528
          %v1549 = vadd.f32 %v1515, %v1528
          %v1550 = vadd.f32 %v1516, %v1528
          %v1551 = vadd.f32 %v1517, %v1528
          %v1552 = vadd.f32 %v1518, %v1528
          %v1553 = vadd.f32 %v1519, %v1528
          %v1554 = vadd.f32 %v1520, %v1528
          %v1555 = vadd.f32 %v1521, %v1528
          %v1556 = vadd.f32 %v1522, %v1528
          %v1557 = vadd.f32 %v1523, %v1528
          %v1558 = vadd.f32 %v1524, %v1528
          %v1559 = vadd.f32 %v1525, %v1528
          %v1560 = vadd.f32 %v1526, %v1528
          %v1561 = vtanh.pop %v1529
          %v1562 = vtanh.pop %v1530
          %v1563 = vtanh.pop %v1531
          %v1564 = vtanh.pop %v1532
          %v1565 = vtanh.pop %v1533
          %v1566 = vtanh.pop %v1534
          %v1567 = vtanh.pop %v1535
          %v1568 = vtanh.pop %v1536
          %v1569 = vtanh.pop %v1537
          %v1570 = vtanh.pop %v1538
          %v1571 = vtanh.pop %v1539
          %v1572 = vtanh.pop %v1540
          %v1573 = vtanh.pop %v1541
          %v1574 = vtanh.pop %v1542
          %v1575 = vtanh.pop %v1543
          %v1576 = vtanh.pop %v1544
          %v1577 = vtanh.pop %v1545
          %v1578 = vtanh.pop %v1546
          %v1579 = vtanh.pop %v1547
          %v1580 = vtanh.pop %v1548
          %v1581 = vtanh.pop %v1549
          %v1582 = vtanh.pop %v1550
          %v1583 = vtanh.pop %v1551
          %v1584 = vtanh.pop %v1552
          %v1585 = vtanh.pop %v1553
          %v1586 = vtanh.pop %v1554
          %v1587 = vtanh.pop %v1555
          %v1588 = vtanh.pop %v1556
          %v1589 = vtanh.pop %v1557
          %v1590 = vtanh.pop %v1558
          %v1591 = vtanh.pop %v1559
          %v1592 = vtanh.pop %v1560
          %s1593 = sld [smem:[#allocation8 + $0x2]]
          %v1594 = vstv %s1593
          %v1595 = vsub.f32 %v1561, %v1594
          %v1596 = vsub.f32 %v1562, %v1594
          %v1597 = vsub.f32 %v1563, %v1594
          %v1598 = vsub.f32 %v1564, %v1594
          %v1599 = vsub.f32 %v1565, %v1594
          %v1600 = vsub.f32 %v1566, %v1594
          %v1601 = vsub.f32 %v1567, %v1594
          %v1602 = vsub.f32 %v1568, %v1594
          %v1603 = vsub.f32 %v1569, %v1594
          %v1604 = vsub.f32 %v1570, %v1594
          %v1605 = vsub.f32 %v1571, %v1594
          %v1606 = vsub.f32 %v1572, %v1594
          %v1607 = vsub.f32 %v1573, %v1594
          %v1608 = vsub.f32 %v1574, %v1594
          %v1609 = vsub.f32 %v1575, %v1594
          %v1610 = vsub.f32 %v1576, %v1594
          %v1611 = vsub.f32 %v1577, %v1594
          %v1612 = vsub.f32 %v1578, %v1594
          %v1613 = vsub.f32 %v1579, %v1594
          %v1614 = vsub.f32 %v1580, %v1594
          %v1615 = vsub.f32 %v1581, %v1594
          %v1616 = vsub.f32 %v1582, %v1594
          %v1617 = vsub.f32 %v1583, %v1594
          %v1618 = vsub.f32 %v1584, %v1594
          %v1619 = vsub.f32 %v1585, %v1594
          %v1620 = vsub.f32 %v1586, %v1594
          %v1621 = vsub.f32 %v1587, %v1594
          %v1622 = vsub.f32 %v1588, %v1594
          %v1623 = vsub.f32 %v1589, %v1594
          %v1624 = vsub.f32 %v1590, %v1594
          %v1625 = vsub.f32 %v1591, %v1594
          %v1626 = vsub.f32 %v1592, %v1594
          %vm1627 = vcmask 7168
          %1628 = vst.msk [vmem:[%s346] sm:$0xff] %vm1627, %v1595
          %1629 = vst.msk [vmem:[%s346 + $0x8] sm:$0xff] %vm1627, %v1596
          %1630 = vst.msk [vmem:[%s346 + $0x10] sm:$0xff] %vm1627, %v1597
          %1631 = vst.msk [vmem:[%s346 + $0x18] sm:$0xff] %vm1627, %v1598
          %1632 = vst.msk [vmem:[%s346 + $0x20] sm:$0xff] %vm1627, %v1599
          %1633 = vst.msk [vmem:[%s346 + $0x28] sm:$0xff] %vm1627, %v1600
          %1634 = vst.msk [vmem:[%s346 + $0x30] sm:$0xff] %vm1627, %v1601
          %1635 = vst.msk [vmem:[%s346 + $0x38] sm:$0xff] %vm1627, %v1602
          %1636 = vst.msk [vmem:[%s346 + $0x40] sm:$0xff] %vm1627, %v1603
          %1637 = vst.msk [vmem:[%s346 + $0x48] sm:$0xff] %vm1627, %v1604
          %1638 = vst.msk [vmem:[%s346 + $0x50] sm:$0xff] %vm1627, %v1605
          %1639 = vst.msk [vmem:[%s346 + $0x58] sm:$0xff] %vm1627, %v1606
          %1640 = vst.msk [vmem:[%s346 + $0x60] sm:$0xff] %vm1627, %v1607
          %1641 = vst.msk [vmem:[%s346 + $0x68] sm:$0xff] %vm1627, %v1608
          %1642 = vst.msk [vmem:[%s346 + $0x70] sm:$0xff] %vm1627, %v1609
          %1643 = vst.msk [vmem:[%s346 + $0x78] sm:$0xff] %vm1627, %v1610
          %1644 = vst.msk [vmem:[%s346 + $0x80] sm:$0xff] %vm1627, %v1611
          %1645 = vst.msk [vmem:[%s346 + $0x88] sm:$0xff] %vm1627, %v1612
          %1646 = vst.msk [vmem:[%s346 + $0x90] sm:$0xff] %vm1627, %v1613
          %1647 = vst.msk [vmem:[%s346 + $0x98] sm:$0xff] %vm1627, %v1614
          %1648 = vst.msk [vmem:[%s346 + $0xa0] sm:$0xff] %vm1627, %v1615
          %1649 = vst.msk [vmem:[%s346 + $0xa8] sm:$0xff] %vm1627, %v1616
          %1650 = vst.msk [vmem:[%s346 + $0xb0] sm:$0xff] %vm1627, %v1617
          %1651 = vst.msk [vmem:[%s346 + $0xb8] sm:$0xff] %vm1627, %v1618
          %1652 = vst.msk [vmem:[%s346 + $0xc0] sm:$0xff] %vm1627, %v1619
          %1653 = vst.msk [vmem:[%s346 + $0xc8] sm:$0xff] %vm1627, %v1620
          %1654 = vst.msk [vmem:[%s346 + $0xd0] sm:$0xff] %vm1627, %v1621
          %1655 = vst.msk [vmem:[%s346 + $0xd8] sm:$0xff] %vm1627, %v1622
          %1656 = vst.msk [vmem:[%s346 + $0xe0] sm:$0xff] %vm1627, %v1623
          %1657 = vst.msk [vmem:[%s346 + $0xe8] sm:$0xff] %vm1627, %v1624
          %1658 = vst.msk [vmem:[%s346 + $0xf0] sm:$0xff] %vm1627, %v1625
          %1659 = vst.msk [vmem:[%s346 + $0xf8] sm:$0xff] %vm1627, %v1626
        $region68: #{forward.3} parent=47 // pred_fallthru
          _
        %s1660 = smul.u32 32, %s25
        %p1661 = scmp.lt.s32.totalorder %s1660, 63
        %s1662 = scalar_select %p1661, %s1660, 63
        %s1663 = smul.addr %s1662, 8
        %s1664 = scalar_lea.vmem %s7, %s1663
        // Predicated region
        $region69: #{forward.3} parent=47 // pred_check
          %p1665 = pneg %p205
        $region70: #{forward.3} parent=47 // pred_check_branch
          %1667 = sbr.rel (%p1665) target = $region72
        $region71: #{forward.3} parent=47 // pred_region
          %s1668 = smul.u32 32, %s25
        $region72: #{forward.3} parent=47 // pred_fallthru
          _
      $region48: #{forward.3} parent=5 // pred_fallthru
        _
      %p1669 = scmp.le.s32.totalorder 2, %s16
      // Predicated region
      $region73: #{forward.3} parent=5 // pred_check
        %p1670 = pneg %p1669
      $region74: #{forward.3} parent=5 // pred_check_branch
        %1672 = sbr.rel (%p1670) target = $region76
      $region75: #{forward.3} parent=5 // pred_region
        %s1673 = ssub.s32 %s16, 2
        // Predicated region
        $region77: #{forward.3} parent=75 // pred_check
          %p1674 = pneg %p211
        $region78: #{forward.3} parent=75 // pred_check_branch
          %1676 = sbr.rel (%p1674) target = $region80
        $region79: #{forward.3} parent=75 // pred_region
          %s1677 = smul.u32 32, %s27
          %p1678 = scmp.lt.s32.totalorder %s1677, 63
          %s1679 = scalar_select %p1678, %s1677, 63
          %s1680 = smul.addr %s1679, 8
          %s1681 = scalar_lea.vmem %s7, %s1680
        $region80: #{forward.3} parent=75 // pred_fallthru
          _
      $region76: #{forward.3} parent=5 // pred_fallthru
        _
    $region6: #{forward.3} parent=1 // loop_footer
      %s20 = sadd.s32 1, %s16
    $region7: #{forward.3} parent=1 // loop_footer_branch
      %15 = sbr.rel target = $region3
    $region8: #{forward.3} parent=1 // loop_exit
      _
    %1682 = vsyncpa [#allocation4], 1
    %s1683 = scalar_lea.sflag [#allocation4], 1
    %1684 = vsyncpa %s1683, 1
    %1685 = vsyncpa [#allocation7], 1
    %1686 = vsyncpa [#allocation5], 1
    %s1687 = scalar_lea.sflag [#allocation5], 1
    %1688 = vsyncpa %s1687, 1

// kernel: forward.4
$region0: #{forward.4}
  #allocation0 [shape = 'u32[]', space=smem, size = 0x4, offset = 0x4, fixed_abs, tag = 'smem constant byte address 0x4 - core index']
  #allocation1 [shape = 'u32[144,128]{1,0:T(1,128)}', space=vmem, size = 0x12000, scoped, tag = 'internal scratch']
  %s0 = inlined_call_operand.vmem [shape: bf16[512,25], index: 0, kind: input, shape index: {}]
  %s1 = inlined_call_operand.vmem [shape: bf16[25,16], index: 1, kind: input, shape index: {}]
  %s2 = inlined_call_operand.vmem [shape: f32[1,16], index: 2, kind: input, shape index: {}]
  %s3 = inlined_call_operand.vmem [shape: bf16[512,16], index: 3, kind: output, shape index: {}]
  %s4 = sld [smem:[#allocation0]]
  $region45: #{forward.4} parent=0
    _
  %s6 = ssub.s32 1, %s4
  %s7 = scalar_select 0, %s6, %s4
  loop: start=0, step=1, limit=4
  $region2: #{forward.4} parent=0 // loop_pre_header
    _
  $region3: #{forward.4} parent=0 // loop_header
    %s9 = sphi 0, %s13
    %p10 = scmp.ge.s32.totalorder %s9, 4
    %s19 = sphi 0, %s21
    %s22 = sphi 0, %s19
    %s23 = sphi 0, %s22
    %s39 = sphi 0, %s23
    %s43 = sphi 0, %s43
    %s45 = sphi 0, %s43
    %s46 = sphi 0, %s45
    %s60 = sphi 0, %s46
    %s64 = sphi 0, %s64
    %s66 = sphi 0, %s64
    %s67 = sphi 0, %s66
    %s81 = sphi 0, %s67
    %s87 = sphi 0, %s89
    %s90 = sphi 0, %s87
    %s91 = sphi 0, %s90
    %s107 = sphi 0, %s91
  $region4: #{forward.4} parent=0 // loop_header_branch
    %12 = sbr.rel (%p10) target = $region8
  $region5: #{forward.4} parent=0 // loop_body
    %s14 = ssub.s32 %s9, 1
    %s15 = ssub.s32 %s9, 2
    %s16 = sadd.s32 %s9, 1
    %s17 = ssub.s32 %s9, %s16
    %p18 = scmp.eq.s32.totalorder %s17, 0
    %s20 = sadd.s32 %s19, 1
    %s21 = scalar_select %p18, %s19, %s20
    %p24 = pneg %p18
    %p25 = scmp.eq.s32.totalorder %s9, 1
    %p26 = por %p24, %p25
    %p27 = scmp.ne.s32.totalorder %s19, %s22
    %p28 = scmp.eq.s32.totalorder %s9, 0
    %p29 = por %p27, %p28
    %p30 = scmp.ne.s32.totalorder %s19, %s22
    %p31 = scmp.eq.s32.totalorder %s14, 1
    %p32 = por %p30, %p31
    %p33 = scmp.ne.s32.totalorder %s22, %s23
    %p34 = scmp.eq.s32.totalorder %s14, 0
    %p35 = por %p33, %p34
    %p36 = scmp.ne.s32.totalorder %s22, %s23
    %p37 = scmp.eq.s32.totalorder %s15, 1
    %p38 = por %p36, %p37
    %p40 = scmp.ne.s32.totalorder %s23, %s39
    %p41 = scmp.eq.s32.totalorder %s15, 0
    %p42 = por %p40, %p41
    %s44 = sadd.s32 %s43, 1
    %p47 = scmp.eq.s32.totalorder %s9, 1
    %p48 = scmp.ne.s32.totalorder %s43, %s45
    %p49 = scmp.eq.s32.totalorder %s9, 0
    %p50 = por %p48, %p49
    %p51 = scmp.ne.s32.totalorder %s43, %s45
    %p52 = scmp.eq.s32.totalorder %s14, 1
    %p53 = por %p51, %p52
    %p54 = scmp.ne.s32.totalorder %s45, %s46
    %p55 = scmp.eq.s32.totalorder %s14, 0
    %p56 = por %p54, %p55
    %p57 = scmp.ne.s32.totalorder %s45, %s46
    %p58 = scmp.eq.s32.totalorder %s15, 1
    %p59 = por %p57, %p58
    %p61 = scmp.ne.s32.totalorder %s46, %s60
    %p62 = scmp.eq.s32.totalorder %s15, 0
    %p63 = por %p61, %p62
    %s65 = sadd.s32 %s64, 1
    %p68 = scmp.eq.s32.totalorder %s9, 1
    %p69 = scmp.ne.s32.totalorder %s64, %s66
    %p70 = scmp.eq.s32.totalorder %s9, 0
    %p71 = por %p69, %p70
    %p72 = scmp.ne.s32.totalorder %s64, %s66
    %p73 = scmp.eq.s32.totalorder %s14, 1
    %p74 = por %p72, %p73
    %p75 = scmp.ne.s32.totalorder %s66, %s67
    %p76 = scmp.eq.s32.totalorder %s14, 0
    %p77 = por %p75, %p76
    %p78 = scmp.ne.s32.totalorder %s66, %s67
    %p79 = scmp.eq.s32.totalorder %s15, 1
    %p80 = por %p78, %p79
    %p82 = scmp.ne.s32.totalorder %s67, %s81
    %p83 = scmp.eq.s32.totalorder %s15, 0
    %p84 = por %p82, %p83
    %s85 = ssub.s32 %s9, %s16
    %p86 = scmp.eq.s32.totalorder %s85, 0
    %s88 = sadd.s32 %s87, 1
    %s89 = scalar_select %p86, %s87, %s88
    %p92 = pneg %p86
    %p93 = scmp.eq.s32.totalorder %s9, 1
    %p94 = por %p92, %p93
    %p95 = scmp.ne.s32.totalorder %s87, %s90
    %p96 = scmp.eq.s32.totalorder %s9, 0
    %p97 = por %p95, %p96
    %p98 = scmp.ne.s32.totalorder %s87, %s90
    %p99 = scmp.eq.s32.totalorder %s14, 1
    %p100 = por %p98, %p99
    %p101 = scmp.ne.s32.totalorder %s90, %s91
    %p102 = scmp.eq.s32.totalorder %s14, 0
    %p103 = por %p101, %p102
    %p104 = scmp.ne.s32.totalorder %s90, %s91
    %p105 = scmp.eq.s32.totalorder %s15, 1
    %p106 = por %p104, %p105
    %p108 = scmp.ne.s32.totalorder %s91, %s107
    %p109 = scmp.eq.s32.totalorder %s15, 0
    %p110 = por %p108, %p109
    %p111 = scmp.le.s32.totalorder 1, %s9
    %p112 = scmp.lt.s32.totalorder %s9, 3
    %p113 = pnand %p111, %p112
    %p114 = pneg %p113
    // Predicated region
    $region9: #{forward.4} parent=5 // pred_check
      _
    $region10: #{forward.4} parent=5 // pred_check_branch
      %116 = sbr.rel (%p113) target = $region12
    $region11: #{forward.4} parent=5 // pred_region
      %s117 = ssub.s32 %s9, 1
      // Predicated region
      $region13: #{forward.4} parent=11 // pred_check
        %p118 = pneg %p56
      $region14: #{forward.4} parent=11 // pred_check_branch
        %120 = sbr.rel (%p118) target = $region16
      $region15: #{forward.4} parent=11 // pred_region
        _
      $region16: #{forward.4} parent=11 // pred_fallthru
        _
      // Predicated region
      $region17: #{forward.4} parent=11 // pred_check
        %p121 = pneg %p77
      $region18: #{forward.4} parent=11 // pred_check_branch
        %123 = sbr.rel (%p121) target = $region20
      $region19: #{forward.4} parent=11 // pred_region
        _
      $region20: #{forward.4} parent=11 // pred_fallthru
        _
    $region12: #{forward.4} parent=5 // pred_fallthru
      _
    %p124 = scmp.lt.s32.totalorder %s9, 2
    // Predicated region
    $region21: #{forward.4} parent=5 // pred_check
      %p125 = pneg %p124
    $region22: #{forward.4} parent=5 // pred_check_branch
      %127 = sbr.rel (%p125) target = $region24
    $region23: #{forward.4} parent=5 // pred_region
      // Predicated region
      $region25: #{forward.4} parent=23 // pred_check
        %p128 = pneg %p29
      $region26: #{forward.4} parent=23 // pred_check_branch
        %130 = sbr.rel (%p128) target = $region28
      $region27: #{forward.4} parent=23 // pred_region
        %s131 = smul.u32 32, %s9
        %p132 = scmp.lt.s32.totalorder %s131, 63
        %s133 = scalar_select %p132, %s131, 63
        %s134 = smul.addr %s133, 4
        %s135 = scalar_lea.vmem %s0, %s134
        %s136 = smul.u32 32, %s9
      $region28: #{forward.4} parent=23 // pred_fallthru
        _
    $region24: #{forward.4} parent=5 // pred_fallthru
      _
    %p137 = scmp.le.s32.totalorder 1, %s9
    %p138 = scmp.lt.s32.totalorder %s9, 3
    %p139 = pnand %p137, %p138
    %p140 = pneg %p139
    // Predicated region
    $region29: #{forward.4} parent=5 // pred_check
      _
    $region30: #{forward.4} parent=5 // pred_check_branch
      %142 = sbr.rel (%p139) target = $region32
    $region31: #{forward.4} parent=5 // pred_region
      %s143 = ssub.s32 %s9, 1
      %s144 = smul.u32 32, %s14
      %p145 = scmp.lt.s32.totalorder %s144, 63
      %s146 = scalar_select %p145, %s144, 63
      %s147 = smul.addr %s146, 4
      %s148 = scalar_lea.vmem %s0, %s147
      %p149 = pneg %p35
      %p150 = pneg %p32
      %p151 = pneg %p56
      %p152 = pneg %p53
      %p153 = pneg %p77
      %p154 = pneg %p74
      %p155 = pneg %p103
      %p156 = pneg %p100
      %s157 = smul.u32 32, %s14
      %p158 = scmp.lt.s32.totalorder %s157, 63
      %s159 = scalar_select %p158, %s157, 63
      %s160 = smul.addr %s159, 4
      %s161 = scalar_lea.vmem %s3, %s160
      %s162 = smul.u32 32, %s14
      %p163 = scmp.lt.s32.totalorder %s162, 63
      %s164 = scalar_select %p163, %s162, 63
      %s165 = smul.addr %s164, 4
      %s166 = scalar_lea.vmem %s0, %s165
      %s167 = smul.u32 32, %s14
      %s168 = smul.u32 32, %s14
      %p169 = scmp.lt.s32.totalorder %s168, 63
      %s170 = scalar_select %p169, %s168, 63
      %s171 = smul.addr %s170, 4
      %s172 = scalar_lea.vmem %s3, %s171
      %s173 = smul.u32 32, %s14
      %v175 = vld [vmem:[%s166] sm:$0xf]
      %v176 = vld [vmem:[%s166 + $0x4] sm:$0xf]
      %v177 = vld [vmem:[%s166 + $0x8] sm:$0xf]
      %v178 = vld [vmem:[%s166 + $0xc] sm:$0xf]
      %v179 = vld [vmem:[%s166 + $0x10] sm:$0xf]
      %v180 = vld [vmem:[%s166 + $0x14] sm:$0xf]
      %v181 = vld [vmem:[%s166 + $0x18] sm:$0xf]
      %v182 = vld [vmem:[%s166 + $0x1c] sm:$0xf]
      %v183 = vld [vmem:[%s166 + $0x20] sm:$0xf]
      %v184 = vld [vmem:[%s166 + $0x24] sm:$0xf]
      %v185 = vld [vmem:[%s166 + $0x28] sm:$0xf]
      %v186 = vld [vmem:[%s166 + $0x2c] sm:$0xf]
      %v187 = vld [vmem:[%s166 + $0x30] sm:$0xf]
      %v188 = vld [vmem:[%s166 + $0x34] sm:$0xf]
      %v189 = vld [vmem:[%s166 + $0x38] sm:$0xf]
      %v190 = vld [vmem:[%s166 + $0x3c] sm:$0xf]
      %v191 = vld [vmem:[%s166 + $0x40] sm:$0xf]
      %v192 = vld [vmem:[%s166 + $0x44] sm:$0xf]
      %v193 = vld [vmem:[%s166 + $0x48] sm:$0xf]
      %v194 = vld [vmem:[%s166 + $0x4c] sm:$0xf]
      %v195 = vld [vmem:[%s166 + $0x50] sm:$0xf]
      %v196 = vld [vmem:[%s166 + $0x54] sm:$0xf]
      %v197 = vld [vmem:[%s166 + $0x58] sm:$0xf]
      %v198 = vld [vmem:[%s166 + $0x5c] sm:$0xf]
      %v199 = vld [vmem:[%s166 + $0x60] sm:$0xf]
      %v200 = vld [vmem:[%s166 + $0x64] sm:$0xf]
      %v201 = vld [vmem:[%s166 + $0x68] sm:$0xf]
      %v202 = vld [vmem:[%s166 + $0x6c] sm:$0xf]
      %v203 = vld [vmem:[%s166 + $0x70] sm:$0xf]
      %v204 = vld [vmem:[%s166 + $0x74] sm:$0xf]
      %v205 = vld [vmem:[%s166 + $0x78] sm:$0xf]
      %v206 = vld [vmem:[%s166 + $0x7c] sm:$0xf]
      %v207 = vld [vmem:[%s1] sm:$0xf]
      %v208 = vld [vmem:[%s1 + $0x4] sm:$0xf]
      %v209 = vld [vmem:[%s1 + $0x8] sm:$0xf]
      %v210 = vld [vmem:[%s1 + $0xc] sm:$0x1]
      %v211 = vld [vmem:[%s2] sm:$0x1]
      %v213 = vlaneseq
      %v214 = vshrl.u32 %v213, 7
      %v215 = vsub.s32 0, %v214
      %v216 = vrot.slane %v211, %v215
      %v250 = vunpack.c.l.b16 %v175
      %v251 = vunpack.c.l.b16 %v176
      %v252 = vunpack.c.l.b16 %v177
      %v253 = vunpack.c.l.b16 %v178
      %v254 = vunpack.c.l.b16 %v179
      %v255 = vunpack.c.l.b16 %v180
      %v256 = vunpack.c.l.b16 %v181
      %v257 = vunpack.c.l.b16 %v182
      %v258 = vunpack.c.l.b16 %v183
      %v259 = vunpack.c.l.b16 %v184
      %v260 = vunpack.c.l.b16 %v185
      %v261 = vunpack.c.l.b16 %v186
      %v262 = vunpack.c.l.b16 %v187
      %v263 = vunpack.c.l.b16 %v188
      %v264 = vunpack.c.l.b16 %v189
      %v265 = vunpack.c.l.b16 %v190
      %v266 = vunpack.c.l.b16 %v191
      %v267 = vunpack.c.l.b16 %v192
      %v268 = vunpack.c.l.b16 %v193
      %v269 = vunpack.c.l.b16 %v194
      %v270 = vunpack.c.l.b16 %v195
      %v271 = vunpack.c.l.b16 %v196
      %v272 = vunpack.c.l.b16 %v197
      %v273 = vunpack.c.l.b16 %v198
      %v274 = vunpack.c.l.b16 %v199
      %v275 = vunpack.c.l.b16 %v200
      %v276 = vunpack.c.l.b16 %v201
      %v277 = vunpack.c.l.b16 %v202
      %v278 = vunpack.c.l.b16 %v203
      %v279 = vunpack.c.l.b16 %v204
      %v280 = vunpack.c.l.b16 %v205
      %v281 = vunpack.c.l.b16 %v206
      %v282 = vpack.c.b16 %v251, %v250
      %v283 = vpack.c.b16 %v253, %v252
      %v284 = vpack.c.b16 %v255, %v254
      %v285 = vpack.c.b16 %v257, %v256
      %v286 = vpack.c.b16 %v259, %v258
      %v287 = vpack.c.b16 %v261, %v260
      %v288 = vpack.c.b16 %v263, %v262
      %v289 = vpack.c.b16 %v265, %v264
      %v290 = vpack.c.b16 %v267, %v266
      %v291 = vpack.c.b16 %v269, %v268
      %v292 = vpack.c.b16 %v271, %v270
      %v293 = vpack.c.b16 %v273, %v272
      %v294 = vpack.c.b16 %v275, %v274
      %v295 = vpack.c.b16 %v277, %v276
      %v296 = vpack.c.b16 %v279, %v278
      %v297 = vpack.c.b16 %v281, %v280
      %v302 = vunpack.c.l.b16 %v207
      %v303 = vunpack.c.l.b16 %v208
      %v304 = vunpack.c.l.b16 %v209
      %v305 = vunpack.c.l.b16 %v210
      %v306 = vpack.c.b16 %v303, %v302
      %v307 = vpack.c.b16 %v305, %v304
      %vm309 = vcmask 203776
      %v311 = vsel %vm309, %v282, 0
      %v314 = vsel %vm309, %v283, 0
      %v317 = vsel %vm309, %v284, 0
      %v320 = vsel %vm309, %v285, 0
      %v323 = vsel %vm309, %v286, 0
      %v326 = vsel %vm309, %v287, 0
      %v329 = vsel %vm309, %v288, 0
      %v332 = vsel %vm309, %v289, 0
      %v335 = vsel %vm309, %v290, 0
      %v338 = vsel %vm309, %v291, 0
      %v341 = vsel %vm309, %v292, 0
      %v344 = vsel %vm309, %v293, 0
      %v347 = vsel %vm309, %v294, 0
      %v350 = vsel %vm309, %v295, 0
      %v353 = vsel %vm309, %v296, 0
      %v356 = vsel %vm309, %v297, 0
      %vm358 = vcmask 1043456
      %vm359 = vcmask 1044480
      %v360 = vsel %vm358, 4294967295, 65535
      %v361 = vsel %vm359, %v360, 0
      %v363 = vand.u32 %v307, %v361
      %365 = vmatprep.subr.bf16.mxu0 0
      %366 = vmatpush1.bf16.msra.mxu0 %v306
      %367 = vmatprep.subr.bf16.mxu0 0
      %368 = vmatpush1.bf16.msra.mxu0 %v363
      %369 = vmatprep.subr.bf16.mxu0 0
      %370 = vmatpush1.bf16.msra.mxu0 0
      %371 = vmatprep.subr.bf16.mxu0 0
      %372 = vmatpush1.bf16.msra.mxu0 0
      %373 = vmatprep.subr.bf16.mxu0 0
      %374 = vmatpush1.bf16.msra.mxu0 0
      %375 = vmatprep.subr.bf16.mxu0 0
      %376 = vmatpush1.bf16.msra.mxu0 0
      %377 = vmatprep.subr.bf16.mxu0 0
      %378 = vmatpush1.bf16.msra.mxu0 0
      %379 = vmatprep.subr.bf16.mxu0 0
      %380 = vmatpush1.bf16.msra.mxu0 0
      %381 = vmatprep.subr.bf16.mxu0 0
      %382 = vmatpush1.bf16.msra.mxu0 0
      %383 = vmatprep.subr.bf16.mxu0 0
      %384 = vmatpush1.bf16.msra.mxu0 0
      %385 = vmatprep.subr.bf16.mxu0 0
      %386 = vmatpush1.bf16.msra.mxu0 0
      %387 = vmatprep.subr.bf16.mxu0 0
      %388 = vmatpush1.bf16.msra.mxu0 0
      %389 = vmatprep.subr.bf16.mxu0 0
      %390 = vmatpush1.bf16.msra.mxu0 0
      %391 = vmatprep.subr.bf16.mxu0 0
      %392 = vmatpush1.bf16.msra.mxu0 0
      %393 = vmatprep.subr.bf16.mxu0 0
      %394 = vmatpush1.bf16.msra.mxu0 0
      %395 = vmatprep.subr.bf16.mxu0 0
      %396 = vmatpush1.bf16.msra.mxu0 0
      %397 = vmatprep.mubr.bf16.mxu0 0
      %398 = vmatmul.mubr.bf16.gmra.mrb[0].mxu0 %v311
      %v399 = vpop.f32.mrb[0].mxu0
      %v400 = vadd.f32 %v216, %v399
      %v401 = vpop.f32.mrb[0].mxu0
      %v402 = vpop.f32.mrb[0].mxu0
      %v403 = vadd.f32 %v216, %v402
      %v404 = vpop.f32.mrb[0].mxu0
      %405 = vmatprep.mubr.bf16.mxu0 0
      %406 = vmatmul.mubr.bf16.gmra.mrb[0].mxu0 %v314
      %v407 = vpop.f32.mrb[0].mxu0
      %v408 = vadd.f32 %v216, %v407
      %v409 = vpop.f32.mrb[0].mxu0
      %v410 = vpop.f32.mrb[0].mxu0
      %v411 = vadd.f32 %v216, %v410
      %v412 = vpop.f32.mrb[0].mxu0
      %413 = vmatprep.mubr.bf16.mxu0 0
      %414 = vmatmul.mubr.bf16.gmra.mrb[0].mxu0 %v317
      %v415 = vpop.f32.mrb[0].mxu0
      %v416 = vadd.f32 %v216, %v415
      %v417 = vpop.f32.mrb[0].mxu0
      %v418 = vpop.f32.mrb[0].mxu0
      %v419 = vadd.f32 %v216, %v418
      %v420 = vpop.f32.mrb[0].mxu0
      %421 = vmatprep.mubr.bf16.mxu0 0
      %422 = vmatmul.mubr.bf16.gmra.mrb[0].mxu0 %v320
      %v423 = vpop.f32.mrb[0].mxu0
      %v424 = vadd.f32 %v216, %v423
      %v425 = vpop.f32.mrb[0].mxu0
      %v426 = vpop.f32.mrb[0].mxu0
      %v427 = vadd.f32 %v216, %v426
      %v428 = vpop.f32.mrb[0].mxu0
      %429 = vmatprep.mubr.bf16.mxu0 0
      %430 = vmatmul.mubr.bf16.gmra.mrb[0].mxu0 %v323
      %v431 = vpop.f32.mrb[0].mxu0
      %v432 = vadd.f32 %v216, %v431
      %v433 = vpop.f32.mrb[0].mxu0
      %v434 = vpop.f32.mrb[0].mxu0
      %v435 = vadd.f32 %v216, %v434
      %v436 = vpop.f32.mrb[0].mxu0
      %437 = vmatprep.mubr.bf16.mxu0 0
      %438 = vmatmul.mubr.bf16.gmra.mrb[0].mxu0 %v326
      %v439 = vpop.f32.mrb[0].mxu0
      %v440 = vadd.f32 %v216, %v439
      %v441 = vpop.f32.mrb[0].mxu0
      %v442 = vpop.f32.mrb[0].mxu0
      %v443 = vadd.f32 %v216, %v442
      %v444 = vpop.f32.mrb[0].mxu0
      %445 = vmatprep.mubr.bf16.mxu0 0
      %446 = vmatmul.mubr.bf16.gmra.mrb[0].mxu0 %v329
      %v447 = vpop.f32.mrb[0].mxu0
      %v448 = vadd.f32 %v216, %v447
      %v449 = vpop.f32.mrb[0].mxu0
      %v450 = vpop.f32.mrb[0].mxu0
      %v451 = vadd.f32 %v216, %v450
      %v452 = vpop.f32.mrb[0].mxu0
      %453 = vmatprep.mubr.bf16.mxu0 0
      %454 = vmatmul.mubr.bf16.gmra.mrb[0].mxu0 %v332
      %v455 = vpop.f32.mrb[0].mxu0
      %v456 = vadd.f32 %v216, %v455
      %v457 = vpop.f32.mrb[0].mxu0
      %v458 = vpop.f32.mrb[0].mxu0
      %v459 = vadd.f32 %v216, %v458
      %v460 = vpop.f32.mrb[0].mxu0
      %461 = vmatprep.mubr.bf16.mxu0 0
      %462 = vmatmul.mubr.bf16.gmra.mrb[0].mxu0 %v335
      %v463 = vpop.f32.mrb[0].mxu0
      %v464 = vadd.f32 %v216, %v463
      %v465 = vpop.f32.mrb[0].mxu0
      %v466 = vpop.f32.mrb[0].mxu0
      %v467 = vadd.f32 %v216, %v466
      %v468 = vpop.f32.mrb[0].mxu0
      %469 = vmatprep.mubr.bf16.mxu0 0
      %470 = vmatmul.mubr.bf16.gmra.mrb[0].mxu0 %v338
      %v471 = vpop.f32.mrb[0].mxu0
      %v472 = vadd.f32 %v216, %v471
      %v473 = vpop.f32.mrb[0].mxu0
      %v474 = vpop.f32.mrb[0].mxu0
      %v475 = vadd.f32 %v216, %v474
      %v476 = vpop.f32.mrb[0].mxu0
      %477 = vmatprep.mubr.bf16.mxu0 0
      %478 = vmatmul.mubr.bf16.gmra.mrb[0].mxu0 %v341
      %v479 = vpop.f32.mrb[0].mxu0
      %v480 = vadd.f32 %v216, %v479
      %v481 = vpop.f32.mrb[0].mxu0
      %v482 = vpop.f32.mrb[0].mxu0
      %v483 = vadd.f32 %v216, %v482
      %v484 = vpop.f32.mrb[0].mxu0
      %485 = vmatprep.mubr.bf16.mxu0 0
      %486 = vmatmul.mubr.bf16.gmra.mrb[0].mxu0 %v344
      %v487 = vpop.f32.mrb[0].mxu0
      %v488 = vadd.f32 %v216, %v487
      %v489 = vpop.f32.mrb[0].mxu0
      %v490 = vpop.f32.mrb[0].mxu0
      %v491 = vadd.f32 %v216, %v490
      %v492 = vpop.f32.mrb[0].mxu0
      %493 = vmatprep.mubr.bf16.mxu0 0
      %494 = vmatmul.mubr.bf16.gmra.mrb[0].mxu0 %v347
      %v495 = vpop.f32.mrb[0].mxu0
      %v496 = vadd.f32 %v216, %v495
      %v497 = vpop.f32.mrb[0].mxu0
      %v498 = vpop.f32.mrb[0].mxu0
      %v499 = vadd.f32 %v216, %v498
      %v500 = vpop.f32.mrb[0].mxu0
      %501 = vmatprep.mubr.bf16.mxu0 0
      %502 = vmatmul.mubr.bf16.gmra.mrb[0].mxu0 %v350
      %v503 = vpop.f32.mrb[0].mxu0
      %v504 = vadd.f32 %v216, %v503
      %v505 = vpop.f32.mrb[0].mxu0
      %v506 = vpop.f32.mrb[0].mxu0
      %v507 = vadd.f32 %v216, %v506
      %v508 = vpop.f32.mrb[0].mxu0
      %509 = vmatprep.mubr.bf16.mxu0 0
      %510 = vmatmul.mubr.bf16.gmra.mrb[0].mxu0 %v353
      %v511 = vpop.f32.mrb[0].mxu0
      %v512 = vadd.f32 %v216, %v511
      %v513 = vpop.f32.mrb[0].mxu0
      %v514 = vpop.f32.mrb[0].mxu0
      %v515 = vadd.f32 %v216, %v514
      %v516 = vpop.f32.mrb[0].mxu0
      %517 = vmatprep.mubr.bf16.mxu0 0
      %518 = vmatmul.mubr.bf16.gmra.mrb[0].mxu0 %v356
      %v519 = vpop.f32.mrb[0].mxu0
      %v520 = vadd.f32 %v216, %v519
      %v521 = vpop.f32.mrb[0].mxu0
      %v522 = vpop.f32.mrb[0].mxu0
      %v523 = vadd.f32 %v216, %v522
      %v524 = vpop.f32.mrb[0].mxu0
      %525 = vdwg.mxu0
      %v526 = vmax.f32 %v400, 0.0
      %v527 = vmax.f32 %v403, 0.0
      %v528 = vmax.f32 %v408, 0.0
      %v529 = vmax.f32 %v411, 0.0
      %v530 = vmax.f32 %v416, 0.0
      %v531 = vmax.f32 %v419, 0.0
      %v532 = vmax.f32 %v424, 0.0
      %v533 = vmax.f32 %v427, 0.0
      %v534 = vmax.f32 %v432, 0.0
      %v535 = vmax.f32 %v435, 0.0
      %v536 = vmax.f32 %v440, 0.0
      %v537 = vmax.f32 %v443, 0.0
      %v538 = vmax.f32 %v448, 0.0
      %v539 = vmax.f32 %v451, 0.0
      %v540 = vmax.f32 %v456, 0.0
      %v541 = vmax.f32 %v459, 0.0
      %v542 = vmax.f32 %v464, 0.0
      %v543 = vmax.f32 %v467, 0.0
      %v544 = vmax.f32 %v472, 0.0
      %v545 = vmax.f32 %v475, 0.0
      %v546 = vmax.f32 %v480, 0.0
      %v547 = vmax.f32 %v483, 0.0
      %v548 = vmax.f32 %v488, 0.0
      %v549 = vmax.f32 %v491, 0.0
      %v550 = vmax.f32 %v496, 0.0
      %v551 = vmax.f32 %v499, 0.0
      %v552 = vmax.f32 %v504, 0.0
      %v553 = vmax.f32 %v507, 0.0
      %v554 = vmax.f32 %v512, 0.0
      %v555 = vmax.f32 %v515, 0.0
      %v556 = vmax.f32 %v520, 0.0
      %v557 = vmax.f32 %v523, 0.0
      %v558 = vpack.c.bf16 %v527, %v526
      %v559 = vpack.c.bf16 %v529, %v528
      %v560 = vpack.c.bf16 %v531, %v530
      %v561 = vpack.c.bf16 %v533, %v532
      %v562 = vpack.c.bf16 %v535, %v534
      %v563 = vpack.c.bf16 %v537, %v536
      %v564 = vpack.c.bf16 %v539, %v538
      %v565 = vpack.c.bf16 %v541, %v540
      %v566 = vpack.c.bf16 %v543, %v542
      %v567 = vpack.c.bf16 %v545, %v544
      %v568 = vpack.c.bf16 %v547, %v546
      %v569 = vpack.c.bf16 %v549, %v548
      %v570 = vpack.c.bf16 %v551, %v550
      %v571 = vpack.c.bf16 %v553, %v552
      %v572 = vpack.c.bf16 %v555, %v554
      %v573 = vpack.c.bf16 %v557, %v556
      %v590 = vunpack.c.l.b16 %v558
      %v591 = vunpack.c.h.b16 %v558
      %v592 = vunpack.c.l.b16 %v559
      %v593 = vunpack.c.h.b16 %v559
      %v594 = vunpack.c.l.b16 %v560
      %v595 = vunpack.c.h.b16 %v560
      %v596 = vunpack.c.l.b16 %v561
      %v597 = vunpack.c.h.b16 %v561
      %v598 = vunpack.c.l.b16 %v562
      %v599 = vunpack.c.h.b16 %v562
      %v600 = vunpack.c.l.b16 %v563
      %v601 = vunpack.c.h.b16 %v563
      %v602 = vunpack.c.l.b16 %v564
      %v603 = vunpack.c.h.b16 %v564
      %v604 = vunpack.c.l.b16 %v565
      %v605 = vunpack.c.h.b16 %v565
      %v606 = vunpack.c.l.b16 %v566
      %v607 = vunpack.c.h.b16 %v566
      %v608 = vunpack.c.l.b16 %v567
      %v609 = vunpack.c.h.b16 %v567
      %v610 = vunpack.c.l.b16 %v568
      %v611 = vunpack.c.h.b16 %v568
      %v612 = vunpack.c.l.b16 %v569
      %v613 = vunpack.c.h.b16 %v569
      %v614 = vunpack.c.l.b16 %v570
      %v615 = vunpack.c.h.b16 %v570
      %v616 = vunpack.c.l.b16 %v571
      %v617 = vunpack.c.h.b16 %v571
      %v618 = vunpack.c.l.b16 %v572
      %v619 = vunpack.c.h.b16 %v572
      %v620 = vunpack.c.l.b16 %v573
      %v621 = vunpack.c.h.b16 %v573
      %v622 = vpack.c.b16 %v590, %v590
      %v623 = vpack.c.b16 %v591, %v591
      %v624 = vpack.c.b16 %v592, %v592
      %v625 = vpack.c.b16 %v593, %v593
      %v626 = vpack.c.b16 %v594, %v594
      %v627 = vpack.c.b16 %v595, %v595
      %v628 = vpack.c.b16 %v596, %v596
      %v629 = vpack.c.b16 %v597, %v597
      %v630 = vpack.c.b16 %v598, %v598
      %v631 = vpack.c.b16 %v599, %v599
      %v632 = vpack.c.b16 %v600, %v600
      %v633 = vpack.c.b16 %v601, %v601
      %v634 = vpack.c.b16 %v602, %v602
      %v635 = vpack.c.b16 %v603, %v603
      %v636 = vpack.c.b16 %v604, %v604
      %v637 = vpack.c.b16 %v605, %v605
      %v638 = vpack.c.b16 %v606, %v606
      %v639 = vpack.c.b16 %v607, %v607
      %v640 = vpack.c.b16 %v608, %v608
      %v641 = vpack.c.b16 %v609, %v609
      %v642 = vpack.c.b16 %v610, %v610
      %v643 = vpack.c.b16 %v611, %v611
      %v644 = vpack.c.b16 %v612, %v612
      %v645 = vpack.c.b16 %v613, %v613
      %v646 = vpack.c.b16 %v614, %v614
      %v647 = vpack.c.b16 %v615, %v615
      %v648 = vpack.c.b16 %v616, %v616
      %v649 = vpack.c.b16 %v617, %v617
      %v650 = vpack.c.b16 %v618, %v618
      %v651 = vpack.c.b16 %v619, %v619
      %v652 = vpack.c.b16 %v620, %v620
      %v653 = vpack.c.b16 %v621, %v621
      %vm686 = vcmask 125952
      %687 = vst.msk [vmem:[%s172] sm:$0xf] %vm686, %v622
      %688 = vst.msk [vmem:[%s172 + $0x4] sm:$0xf] %vm686, %v623
      %689 = vst.msk [vmem:[%s172 + $0x8] sm:$0xf] %vm686, %v624
      %690 = vst.msk [vmem:[%s172 + $0xc] sm:$0xf] %vm686, %v625
      %691 = vst.msk [vmem:[%s172 + $0x10] sm:$0xf] %vm686, %v626
      %692 = vst.msk [vmem:[%s172 + $0x14] sm:$0xf] %vm686, %v627
      %693 = vst.msk [vmem:[%s172 + $0x18] sm:$0xf] %vm686, %v628
      %694 = vst.msk [vmem:[%s172 + $0x1c] sm:$0xf] %vm686, %v629
      %695 = vst.msk [vmem:[%s172 + $0x20] sm:$0xf] %vm686, %v630
      %696 = vst.msk [vmem:[%s172 + $0x24] sm:$0xf] %vm686, %v631
      %697 = vst.msk [vmem:[%s172 + $0x28] sm:$0xf] %vm686, %v632
      %698 = vst.msk [vmem:[%s172 + $0x2c] sm:$0xf] %vm686, %v633
      %699 = vst.msk [vmem:[%s172 + $0x30] sm:$0xf] %vm686, %v634
      %700 = vst.msk [vmem:[%s172 + $0x34] sm:$0xf] %vm686, %v635
      %701 = vst.msk [vmem:[%s172 + $0x38] sm:$0xf] %vm686, %v636
      %702 = vst.msk [vmem:[%s172 + $0x3c] sm:$0xf] %vm686, %v637
      %703 = vst.msk [vmem:[%s172 + $0x40] sm:$0xf] %vm686, %v638
      %704 = vst.msk [vmem:[%s172 + $0x44] sm:$0xf] %vm686, %v639
      %705 = vst.msk [vmem:[%s172 + $0x48] sm:$0xf] %vm686, %v640
      %706 = vst.msk [vmem:[%s172 + $0x4c] sm:$0xf] %vm686, %v641
      %707 = vst.msk [vmem:[%s172 + $0x50] sm:$0xf] %vm686, %v642
      %708 = vst.msk [vmem:[%s172 + $0x54] sm:$0xf] %vm686, %v643
      %709 = vst.msk [vmem:[%s172 + $0x58] sm:$0xf] %vm686, %v644
      %710 = vst.msk [vmem:[%s172 + $0x5c] sm:$0xf] %vm686, %v645
      %711 = vst.msk [vmem:[%s172 + $0x60] sm:$0xf] %vm686, %v646
      %712 = vst.msk [vmem:[%s172 + $0x64] sm:$0xf] %vm686, %v647
      %713 = vst.msk [vmem:[%s172 + $0x68] sm:$0xf] %vm686, %v648
      %714 = vst.msk [vmem:[%s172 + $0x6c] sm:$0xf] %vm686, %v649
      %715 = vst.msk [vmem:[%s172 + $0x70] sm:$0xf] %vm686, %v650
      %716 = vst.msk [vmem:[%s172 + $0x74] sm:$0xf] %vm686, %v651
      %717 = vst.msk [vmem:[%s172 + $0x78] sm:$0xf] %vm686, %v652
      %718 = vst.msk [vmem:[%s172 + $0x7c] sm:$0xf] %vm686, %v653
      %s719 = smul.u32 32, %s14
      %p720 = scmp.lt.s32.totalorder %s719, 63
      %s721 = scalar_select %p720, %s719, 63
      %s722 = smul.addr %s721, 4
      %s723 = scalar_lea.vmem %s3, %s722
      // Predicated region
      $region33: #{forward.4} parent=31 // pred_check
        %p724 = pneg %p100
      $region34: #{forward.4} parent=31 // pred_check_branch
        %726 = sbr.rel (%p724) target = $region36
      $region35: #{forward.4} parent=31 // pred_region
        %s727 = smul.u32 32, %s14
      $region36: #{forward.4} parent=31 // pred_fallthru
        _
    $region32: #{forward.4} parent=5 // pred_fallthru
      _
    %p728 = scmp.le.s32.totalorder 2, %s9
    // Predicated region
    $region37: #{forward.4} parent=5 // pred_check
      %p729 = pneg %p728
    $region38: #{forward.4} parent=5 // pred_check_branch
      %731 = sbr.rel (%p729) target = $region40
    $region39: #{forward.4} parent=5 // pred_region
      %s732 = ssub.s32 %s9, 2
      // Predicated region
      $region41: #{forward.4} parent=39 // pred_check
        %p733 = pneg %p106
      $region42: #{forward.4} parent=39 // pred_check_branch
        %735 = sbr.rel (%p733) target = $region44
      $region43: #{forward.4} parent=39 // pred_region
        %s736 = smul.u32 32, %s15
        %p737 = scmp.lt.s32.totalorder %s736, 63
        %s738 = scalar_select %p737, %s736, 63
        %s739 = smul.addr %s738, 4
        %s740 = scalar_lea.vmem %s3, %s739
      $region44: #{forward.4} parent=39 // pred_fallthru
        _
    $region40: #{forward.4} parent=5 // pred_fallthru
      _
  $region6: #{forward.4} parent=0 // loop_footer
    %s13 = sadd.s32 1, %s9
  $region7: #{forward.4} parent=0 // loop_footer_branch
    %8 = sbr.rel target = $region3
  $region8: #{forward.4} parent=0 // loop_exit
    _

// kernel: forward.5
$region0: #{forward.5}
  #allocation0 [shape = 'u32[]', space=smem, size = 0x4, offset = 0x4, fixed_abs, tag = 'smem constant byte address 0x4 - core index']
  #allocation1 [shape = 'u32[144,128]{1,0:T(1,128)}', space=vmem, size = 0x12000, scoped, tag = 'internal scratch']
  #allocation2 [shape = 'f32[1,1]{1,0:T(1,128)S(1)}', space=vmem, size = 0x200, scoped, tag = 'scoped memory for forward.5']
  %s0 = inlined_call_operand.vmem [shape: bf16[2,256,400], index: 0, kind: input, shape index: {}]
  %s1 = inlined_call_operand.vmem [shape: bf16[400,1], index: 1, kind: input, shape index: {}]
  %s2 = inlined_call_operand.<no memory space> [shape: f32[1,1], index: 2, kind: input, shape index: {}]
  %s3 = inlined_call_operand.vmem [shape: f32[256,10], index: 3, kind: input, shape index: {}]
  %s4 = inlined_call_operand.vmem [shape: f32[1,10], index: 4, kind: input, shape index: {}]
  %s5 = inlined_call_operand.hbm [shape: f32[2,1,10], index: 5, kind: output, shape index: {}]
  %s6 = sld [smem:[#allocation0]]
  $region53: #{forward.5} parent=0
    _
  %s8 = ssub.s32 1, %s6
  %s9 = scalar_select 0, %s8, %s6
  %v10 = vstv %s2
  %11 = vst [vmem:[#allocation2] sm:$0x1] %v10
  $region1: #{forward.5} parent=0
    #allocation3 [shape = 'u8[1024]{0}', space=vmem, size = 0x400, scoped, tag = 'output window, operand 0']
    #allocation4 [shape = 's32[2]{0}', space=sflag, size = 0x8, scoped, tag = 'scoped memory for forward.5']
    %12 = vsyncpa [#allocation4], 0
    %s13 = scalar_lea.sflag [#allocation4], 1
    %14 = vsyncpa %s13, 0
    loop: start=0, step=1, limit=4
    $region2: #{forward.5} parent=1 // loop_pre_header
      _
    $region3: #{forward.5} parent=1 // loop_header
      %s16 = sphi 0, %s20
      %p17 = scmp.ge.s32.totalorder %s16, 4
      %s26 = sphi 0, %s28
      %s29 = sphi 0, %s26
      %s30 = sphi 0, %s29
      %s46 = sphi 0, %s30
      %s50 = sphi 0, %s50
      %s52 = sphi 0, %s50
      %s53 = sphi 0, %s52
      %s67 = sphi 0, %s53
      %s71 = sphi 0, %s71
      %s73 = sphi 0, %s71
      %s74 = sphi 0, %s73
      %s88 = sphi 0, %s74
      %s92 = sphi 0, %s92
      %s94 = sphi 0, %s92
      %s95 = sphi 0, %s94
      %s109 = sphi 0, %s95
      %s113 = sphi 0, %s113
      %s115 = sphi 0, %s113
      %s116 = sphi 0, %s115
      %s130 = sphi 0, %s116
      %s136 = sphi 0, %s138
      %s139 = sphi 0, %s136
      %s140 = sphi 0, %s139
      %s156 = sphi 0, %s140
    $region4: #{forward.5} parent=1 // loop_header_branch
      %19 = sbr.rel (%p17) target = $region8
    $region5: #{forward.5} parent=1 // loop_body
      %s21 = ssub.s32 %s16, 1
      %s22 = ssub.s32 %s16, 2
      %s23 = sadd.s32 %s16, 1
      %s24 = ssub.s32 %s16, %s23
      %p25 = scmp.eq.s32.totalorder %s24, 0
      %s27 = sadd.s32 %s26, 1
      %s28 = scalar_select %p25, %s26, %s27
      %p31 = pneg %p25
      %p32 = scmp.eq.s32.totalorder %s16, 1
      %p33 = por %p31, %p32
      %p34 = scmp.ne.s32.totalorder %s26, %s29
      %p35 = scmp.eq.s32.totalorder %s16, 0
      %p36 = por %p34, %p35
      %p37 = scmp.ne.s32.totalorder %s26, %s29
      %p38 = scmp.eq.s32.totalorder %s21, 1
      %p39 = por %p37, %p38
      %p40 = scmp.ne.s32.totalorder %s29, %s30
      %p41 = scmp.eq.s32.totalorder %s21, 0
      %p42 = por %p40, %p41
      %p43 = scmp.ne.s32.totalorder %s29, %s30
      %p44 = scmp.eq.s32.totalorder %s22, 1
      %p45 = por %p43, %p44
      %p47 = scmp.ne.s32.totalorder %s30, %s46
      %p48 = scmp.eq.s32.totalorder %s22, 0
      %p49 = por %p47, %p48
      %s51 = sadd.s32 %s50, 1
      %p54 = scmp.eq.s32.totalorder %s16, 1
      %p55 = scmp.ne.s32.totalorder %s50, %s52
      %p56 = scmp.eq.s32.totalorder %s16, 0
      %p57 = por %p55, %p56
      %p58 = scmp.ne.s32.totalorder %s50, %s52
      %p59 = scmp.eq.s32.totalorder %s21, 1
      %p60 = por %p58, %p59
      %p61 = scmp.ne.s32.totalorder %s52, %s53
      %p62 = scmp.eq.s32.totalorder %s21, 0
      %p63 = por %p61, %p62
      %p64 = scmp.ne.s32.totalorder %s52, %s53
      %p65 = scmp.eq.s32.totalorder %s22, 1
      %p66 = por %p64, %p65
      %p68 = scmp.ne.s32.totalorder %s53, %s67
      %p69 = scmp.eq.s32.totalorder %s22, 0
      %p70 = por %p68, %p69
      %s72 = sadd.s32 %s71, 1
      %p75 = scmp.eq.s32.totalorder %s16, 1
      %p76 = scmp.ne.s32.totalorder %s71, %s73
      %p77 = scmp.eq.s32.totalorder %s16, 0
      %p78 = por %p76, %p77
      %p79 = scmp.ne.s32.totalorder %s71, %s73
      %p80 = scmp.eq.s32.totalorder %s21, 1
      %p81 = por %p79, %p80
      %p82 = scmp.ne.s32.totalorder %s73, %s74
      %p83 = scmp.eq.s32.totalorder %s21, 0
      %p84 = por %p82, %p83
      %p85 = scmp.ne.s32.totalorder %s73, %s74
      %p86 = scmp.eq.s32.totalorder %s22, 1
      %p87 = por %p85, %p86
      %p89 = scmp.ne.s32.totalorder %s74, %s88
      %p90 = scmp.eq.s32.totalorder %s22, 0
      %p91 = por %p89, %p90
      %s93 = sadd.s32 %s92, 1
      %p96 = scmp.eq.s32.totalorder %s16, 1
      %p97 = scmp.ne.s32.totalorder %s92, %s94
      %p98 = scmp.eq.s32.totalorder %s16, 0
      %p99 = por %p97, %p98
      %p100 = scmp.ne.s32.totalorder %s92, %s94
      %p101 = scmp.eq.s32.totalorder %s21, 1
      %p102 = por %p100, %p101
      %p103 = scmp.ne.s32.totalorder %s94, %s95
      %p104 = scmp.eq.s32.totalorder %s21, 0
      %p105 = por %p103, %p104
      %p106 = scmp.ne.s32.totalorder %s94, %s95
      %p107 = scmp.eq.s32.totalorder %s22, 1
      %p108 = por %p106, %p107
      %p110 = scmp.ne.s32.totalorder %s95, %s109
      %p111 = scmp.eq.s32.totalorder %s22, 0
      %p112 = por %p110, %p111
      %s114 = sadd.s32 %s113, 1
      %p117 = scmp.eq.s32.totalorder %s16, 1
      %p118 = scmp.ne.s32.totalorder %s113, %s115
      %p119 = scmp.eq.s32.totalorder %s16, 0
      %p120 = por %p118, %p119
      %p121 = scmp.ne.s32.totalorder %s113, %s115
      %p122 = scmp.eq.s32.totalorder %s21, 1
      %p123 = por %p121, %p122
      %p124 = scmp.ne.s32.totalorder %s115, %s116
      %p125 = scmp.eq.s32.totalorder %s21, 0
      %p126 = por %p124, %p125
      %p127 = scmp.ne.s32.totalorder %s115, %s116
      %p128 = scmp.eq.s32.totalorder %s22, 1
      %p129 = por %p127, %p128
      %p131 = scmp.ne.s32.totalorder %s116, %s130
      %p132 = scmp.eq.s32.totalorder %s22, 0
      %p133 = por %p131, %p132
      %s134 = ssub.s32 %s16, %s23
      %p135 = scmp.eq.s32.totalorder %s134, 0
      %s137 = sadd.s32 %s136, 1
      %s138 = scalar_select %p135, %s136, %s137
      %p141 = pneg %p135
      %p142 = scmp.eq.s32.totalorder %s16, 1
      %p143 = por %p141, %p142
      %p144 = scmp.ne.s32.totalorder %s136, %s139
      %p145 = scmp.eq.s32.totalorder %s16, 0
      %p146 = por %p144, %p145
      %p147 = scmp.ne.s32.totalorder %s136, %s139
      %p148 = scmp.eq.s32.totalorder %s21, 1
      %p149 = por %p147, %p148
      %p150 = scmp.ne.s32.totalorder %s139, %s140
      %p151 = scmp.eq.s32.totalorder %s21, 0
      %p152 = por %p150, %p151
      %p153 = scmp.ne.s32.totalorder %s139, %s140
      %p154 = scmp.eq.s32.totalorder %s22, 1
      %p155 = por %p153, %p154
      %p157 = scmp.ne.s32.totalorder %s140, %s156
      %p158 = scmp.eq.s32.totalorder %s22, 0
      %p159 = por %p157, %p158
      %p160 = scmp.le.s32.totalorder 1, %s16
      %p161 = scmp.lt.s32.totalorder %s16, 3
      %p162 = pnand %p160, %p161
      %p163 = pneg %p162
      // Predicated region
      $region9: #{forward.5} parent=5 // pred_check
        _
      $region10: #{forward.5} parent=5 // pred_check_branch
        %165 = sbr.rel (%p162) target = $region12
      $region11: #{forward.5} parent=5 // pred_region
        %s166 = ssub.s32 %s16, 1
        // Predicated region
        $region13: #{forward.5} parent=11 // pred_check
          %p167 = pneg %p63
        $region14: #{forward.5} parent=11 // pred_check_branch
          %169 = sbr.rel (%p167) target = $region16
        $region15: #{forward.5} parent=11 // pred_region
          _
        $region16: #{forward.5} parent=11 // pred_fallthru
          _
        // Predicated region
        $region17: #{forward.5} parent=11 // pred_check
          %p170 = pneg %p84
        $region18: #{forward.5} parent=11 // pred_check_branch
          %172 = sbr.rel (%p170) target = $region20
        $region19: #{forward.5} parent=11 // pred_region
          _
        $region20: #{forward.5} parent=11 // pred_fallthru
          _
        // Predicated region
        $region21: #{forward.5} parent=11 // pred_check
          %p173 = pneg %p105
        $region22: #{forward.5} parent=11 // pred_check_branch
          %175 = sbr.rel (%p173) target = $region24
        $region23: #{forward.5} parent=11 // pred_region
          _
        $region24: #{forward.5} parent=11 // pred_fallthru
          _
        // Predicated region
        $region25: #{forward.5} parent=11 // pred_check
          %p176 = pneg %p126
        $region26: #{forward.5} parent=11 // pred_check_branch
          %178 = sbr.rel (%p176) target = $region28
        $region27: #{forward.5} parent=11 // pred_region
          _
        $region28: #{forward.5} parent=11 // pred_fallthru
          _
      $region12: #{forward.5} parent=5 // pred_fallthru
        _
      %p179 = scmp.lt.s32.totalorder %s16, 2
      // Predicated region
      $region29: #{forward.5} parent=5 // pred_check
        %p180 = pneg %p179
      $region30: #{forward.5} parent=5 // pred_check_branch
        %182 = sbr.rel (%p180) target = $region32
      $region31: #{forward.5} parent=5 // pred_region
        // Predicated region
        $region33: #{forward.5} parent=31 // pred_check
          %p183 = pneg %p36
        $region34: #{forward.5} parent=31 // pred_check_branch
          %185 = sbr.rel (%p183) target = $region36
        $region35: #{forward.5} parent=31 // pred_region
          %p186 = scmp.lt.s32.totalorder %s16, 1
          %s187 = scalar_select %p186, %s16, 1
          %s188 = smul.addr %s187, 128
          %s189 = smul.addr %s188, 4
          %s190 = scalar_lea.vmem %s0, %s189
        $region36: #{forward.5} parent=31 // pred_fallthru
          _
      $region32: #{forward.5} parent=5 // pred_fallthru
        _
      %p191 = scmp.le.s32.totalorder 1, %s16
      %p192 = scmp.lt.s32.totalorder %s16, 3
      %p193 = pnand %p191, %p192
      %p194 = pneg %p193
      // Predicated region
      $region37: #{forward.5} parent=5 // pred_check
        _
      $region38: #{forward.5} parent=5 // pred_check_branch
        %196 = sbr.rel (%p193) target = $region40
      $region39: #{forward.5} parent=5 // pred_region
        %s197 = ssub.s32 %s16, 1
        %p198 = scmp.lt.s32.totalorder %s21, 1
        %s199 = scalar_select %p198, %s21, 1
        %s200 = smul.addr %s199, 128
        %s201 = smul.addr %s200, 4
        %s202 = scalar_lea.vmem %s0, %s201
        %p203 = pneg %p42
        %p204 = pneg %p39
        %p205 = pneg %p63
        %p206 = pneg %p60
        %p207 = pneg %p84
        %p208 = pneg %p81
        %p209 = pneg %p105
        %p210 = pneg %p102
        %p211 = pneg %p126
        %p212 = pneg %p123
        %p213 = pneg %p152
        %p214 = pneg %p149
        %s215 = sand.u32 %s139, 1
        %s216 = scalar_lea.sflag [#allocation4], %s215
        %s217 = sand.u32 %s139, 1
        %s218 = scalar_lea.vmem [#allocation3], %s217
        %p219 = scmp.lt.s32.totalorder %s21, 1
        %s220 = scalar_select %p219, %s21, 1
        %s221 = smul.addr %s220, 128
        %s222 = smul.addr %s221, 4
        %s223 = scalar_lea.vmem %s0, %s222
        %v225 = vld [vmem:[%s223] sm:$0xff]
        %v226 = vld [vmem:[%s223 + $0x8] sm:$0xff]
        %v227 = vld [vmem:[%s223 + $0x10] sm:$0xff]
        %v228 = vld [vmem:[%s223 + $0x18] sm:$0xff]
        %v229 = vld [vmem:[%s223 + $0x20] sm:$0xff]
        %v230 = vld [vmem:[%s223 + $0x28] sm:$0xff]
        %v231 = vld [vmem:[%s223 + $0x30] sm:$0xff]
        %v232 = vld [vmem:[%s223 + $0x38] sm:$0xff]
        %v233 = vld [vmem:[%s223 + $0x40] sm:$0xff]
        %v234 = vld [vmem:[%s223 + $0x48] sm:$0xff]
        %v235 = vld [vmem:[%s223 + $0x50] sm:$0xff]
        %v236 = vld [vmem:[%s223 + $0x58] sm:$0xff]
        %v237 = vld [vmem:[%s223 + $0x60] sm:$0xff]
        %v238 = vld [vmem:[%s223 + $0x68] sm:$0xff]
        %v239 = vld [vmem:[%s223 + $0x70] sm:$0xff]
        %v240 = vld [vmem:[%s223 + $0x78] sm:$0xff]
        %v241 = vld [vmem:[%s223 + $0x80] sm:$0xff]
        %v242 = vld [vmem:[%s223 + $0x88] sm:$0xff]
        %v243 = vld [vmem:[%s223 + $0x90] sm:$0xff]
        %v244 = vld [vmem:[%s223 + $0x98] sm:$0xff]
        %v245 = vld [vmem:[%s223 + $0xa0] sm:$0xff]
        %v246 = vld [vmem:[%s223 + $0xa8] sm:$0xff]
        %v247 = vld [vmem:[%s223 + $0xb0] sm:$0xff]
        %v248 = vld [vmem:[%s223 + $0xb8] sm:$0xff]
        %v249 = vld [vmem:[%s223 + $0xc0] sm:$0xff]
        %v250 = vld [vmem:[%s223 + $0xc8] sm:$0xff]
        %v251 = vld [vmem:[%s223 + $0xd0] sm:$0xff]
        %v252 = vld [vmem:[%s223 + $0xd8] sm:$0xff]
        %v253 = vld [vmem:[%s223 + $0xe0] sm:$0xff]
        %v254 = vld [vmem:[%s223 + $0xe8] sm:$0xff]
        %v255 = vld [vmem:[%s223 + $0xf0] sm:$0xff]
        %v256 = vld [vmem:[%s223 + $0xf8] sm:$0xff]
        %v257 = vld [vmem:[%s223 + $0x100] sm:$0xff]
        %v258 = vld [vmem:[%s223 + $0x108] sm:$0xff]
        %v259 = vld [vmem:[%s223 + $0x110] sm:$0xff]
        %v260 = vld [vmem:[%s223 + $0x118] sm:$0xff]
        %v261 = vld [vmem:[%s223 + $0x120] sm:$0xff]
        %v262 = vld [vmem:[%s223 + $0x128] sm:$0xff]
        %v263 = vld [vmem:[%s223 + $0x130] sm:$0xff]
        %v264 = vld [vmem:[%s223 + $0x138] sm:$0xff]
        %v265 = vld [vmem:[%s223 + $0x140] sm:$0xff]
        %v266 = vld [vmem:[%s223 + $0x148] sm:$0xff]
        %v267 = vld [vmem:[%s223 + $0x150] sm:$0xff]
        %v268 = vld [vmem:[%s223 + $0x158] sm:$0xff]
        %v269 = vld [vmem:[%s223 + $0x160] sm:$0xff]
        %v270 = vld [vmem:[%s223 + $0x168] sm:$0xff]
        %v271 = vld [vmem:[%s223 + $0x170] sm:$0xff]
        %v272 = vld [vmem:[%s223 + $0x178] sm:$0xff]
        %v273 = vld [vmem:[%s223 + $0x180] sm:$0xff]
        %v274 = vld [vmem:[%s223 + $0x188] sm:$0xff]
        %v275 = vld [vmem:[%s223 + $0x190] sm:$0xff]
        %v276 = vld [vmem:[%s223 + $0x198] sm:$0xff]
        %v277 = vld [vmem:[%s223 + $0x1a0] sm:$0xff]
        %v278 = vld [vmem:[%s223 + $0x1a8] sm:$0xff]
        %v279 = vld [vmem:[%s223 + $0x1b0] sm:$0xff]
        %v280 = vld [vmem:[%s223 + $0x1b8] sm:$0xff]
        %v281 = vld [vmem:[%s223 + $0x1c0] sm:$0xff]
        %v282 = vld [vmem:[%s223 + $0x1c8] sm:$0xff]
        %v283 = vld [vmem:[%s223 + $0x1d0] sm:$0xff]
        %v284 = vld [vmem:[%s223 + $0x1d8] sm:$0xff]
        %v285 = vld [vmem:[%s223 + $0x1e0] sm:$0xff]
        %v286 = vld [vmem:[%s223 + $0x1e8] sm:$0xff]
        %v287 = vld [vmem:[%s223 + $0x1f0] sm:$0xff]
        %v288 = vld [vmem:[%s223 + $0x1f8] sm:$0xff]
        %v289 = vld [vmem:[%s1] sm:$0xf]
        %v290 = vld [vmem:[%s1 + $0x4] sm:$0xf]
        %v291 = vld [vmem:[%s1 + $0x8] sm:$0xf]
        %v292 = vld [vmem:[%s1 + $0xc] sm:$0xf]
        %v293 = vld [vmem:[%s1 + $0x10] sm:$0xf]
        %v294 = vld [vmem:[%s1 + $0x14] sm:$0xf]
        %v295 = vld [vmem:[%s1 + $0x18] sm:$0xf]
        %v296 = vld [vmem:[%s1 + $0x1c] sm:$0xf]
        %v297 = vld [vmem:[%s1 + $0x20] sm:$0xf]
        %v298 = vld [vmem:[%s1 + $0x24] sm:$0xf]
        %v299 = vld [vmem:[%s1 + $0x28] sm:$0xf]
        %v300 = vld [vmem:[%s1 + $0x2c] sm:$0xf]
        %v301 = vld [vmem:[%s1 + $0x30] sm:$0xf]
        %v302 = vld [vmem:[%s1 + $0x34] sm:$0xf]
        %v303 = vld [vmem:[%s1 + $0x38] sm:$0xf]
        %v304 = vld [vmem:[%s1 + $0x3c] sm:$0xf]
        %v305 = vld [vmem:[%s1 + $0x40] sm:$0xf]
        %v306 = vld [vmem:[%s1 + $0x44] sm:$0xf]
        %v307 = vld [vmem:[%s1 + $0x48] sm:$0xf]
        %v308 = vld [vmem:[%s1 + $0x4c] sm:$0xf]
        %v309 = vld [vmem:[%s1 + $0x50] sm:$0xf]
        %v310 = vld [vmem:[%s1 + $0x54] sm:$0xf]
        %v311 = vld [vmem:[%s1 + $0x58] sm:$0xf]
        %v312 = vld [vmem:[%s1 + $0x5c] sm:$0xf]
        %v313 = vld [vmem:[%s1 + $0x60] sm:$0xf]
        %v314 = vld [vmem:[%s1 + $0x64] sm:$0xf]
        %v315 = vld [vmem:[%s1 + $0x68] sm:$0xf]
        %v316 = vld [vmem:[%s1 + $0x6c] sm:$0xf]
        %v317 = vld [vmem:[%s1 + $0x70] sm:$0xf]
        %v318 = vld [vmem:[%s1 + $0x74] sm:$0xf]
        %v319 = vld [vmem:[%s1 + $0x78] sm:$0xf]
        %v320 = vld [vmem:[%s1 + $0x7c] sm:$0xf]
        %v321 = vld [vmem:[%s1 + $0x80] sm:$0xf]
        %v322 = vld [vmem:[%s1 + $0x84] sm:$0xf]
        %v323 = vld [vmem:[%s1 + $0x88] sm:$0xf]
        %v324 = vld [vmem:[%s1 + $0x8c] sm:$0xf]
        %v325 = vld [vmem:[%s1 + $0x90] sm:$0xf]
        %v326 = vld [vmem:[%s1 + $0x94] sm:$0xf]
        %v327 = vld [vmem:[%s1 + $0x98] sm:$0xf]
        %v328 = vld [vmem:[%s1 + $0x9c] sm:$0xf]
        %v329 = vld [vmem:[%s1 + $0xa0] sm:$0xf]
        %v330 = vld [vmem:[%s1 + $0xa4] sm:$0xf]
        %v331 = vld [vmem:[%s1 + $0xa8] sm:$0xf]
        %v332 = vld [vmem:[%s1 + $0xac] sm:$0xf]
        %v333 = vld [vmem:[%s1 + $0xb0] sm:$0xf]
        %v334 = vld [vmem:[%s1 + $0xb4] sm:$0xf]
        %v335 = vld [vmem:[%s1 + $0xb8] sm:$0xf]
        %v336 = vld [vmem:[%s1 + $0xbc] sm:$0xf]
        %v337 = vld [vmem:[%s1 + $0xc0] sm:$0xf]
        %v338 = vld [vmem:[%s1 + $0xc4] sm:$0xf]
        %v339 = vld [vmem:[#allocation2] sm:$0x1]
        %v341 = vlaneseq
        %v342 = vshrl.u32 %v341, 7
        %v343 = vsub.s32 0, %v342
        %v344 = vrot.slane %v339, %v343
        %v410 = vunpack.c.l.b16 %v225
        %v411 = vunpack.c.h.b16 %v225
        %v412 = vunpack.c.l.b16 %v226
        %v413 = vunpack.c.h.b16 %v226
        %v414 = vunpack.c.l.b16 %v227
        %v415 = vunpack.c.h.b16 %v227
        %v416 = vunpack.c.l.b16 %v228
        %v417 = vunpack.c.h.b16 %v228
        %v418 = vunpack.c.l.b16 %v229
        %v419 = vunpack.c.h.b16 %v229
        %v420 = vunpack.c.l.b16 %v230
        %v421 = vunpack.c.h.b16 %v230
        %v422 = vunpack.c.l.b16 %v231
        %v423 = vunpack.c.h.b16 %v231
        %v424 = vunpack.c.l.b16 %v232
        %v425 = vunpack.c.h.b16 %v232
        %v426 = vunpack.c.l.b16 %v233
        %v427 = vunpack.c.h.b16 %v233
        %v428 = vunpack.c.l.b16 %v234
        %v429 = vunpack.c.h.b16 %v234
        %v430 = vunpack.c.l.b16 %v235
        %v431 = vunpack.c.h.b16 %v235
        %v432 = vunpack.c.l.b16 %v236
        %v433 = vunpack.c.h.b16 %v236
        %v434 = vunpack.c.l.b16 %v237
        %v435 = vunpack.c.h.b16 %v237
        %v436 = vunpack.c.l.b16 %v238
        %v437 = vunpack.c.h.b16 %v238
        %v438 = vunpack.c.l.b16 %v239
        %v439 = vunpack.c.h.b16 %v239
        %v440 = vunpack.c.l.b16 %v240
        %v441 = vunpack.c.h.b16 %v240
        %v442 = vunpack.c.l.b16 %v241
        %v443 = vunpack.c.h.b16 %v241
        %v444 = vunpack.c.l.b16 %v242
        %v445 = vunpack.c.h.b16 %v242
        %v446 = vunpack.c.l.b16 %v243
        %v447 = vunpack.c.h.b16 %v243
        %v448 = vunpack.c.l.b16 %v244
        %v449 = vunpack.c.h.b16 %v244
        %v450 = vunpack.c.l.b16 %v245
        %v451 = vunpack.c.h.b16 %v245
        %v452 = vunpack.c.l.b16 %v246
        %v453 = vunpack.c.h.b16 %v246
        %v454 = vunpack.c.l.b16 %v247
        %v455 = vunpack.c.h.b16 %v247
        %v456 = vunpack.c.l.b16 %v248
        %v457 = vunpack.c.h.b16 %v248
        %v458 = vunpack.c.l.b16 %v249
        %v459 = vunpack.c.h.b16 %v249
        %v460 = vunpack.c.l.b16 %v250
        %v461 = vunpack.c.h.b16 %v250
        %v462 = vunpack.c.l.b16 %v251
        %v463 = vunpack.c.h.b16 %v251
        %v464 = vunpack.c.l.b16 %v252
        %v465 = vunpack.c.h.b16 %v252
        %v466 = vunpack.c.l.b16 %v253
        %v467 = vunpack.c.h.b16 %v253
        %v468 = vunpack.c.l.b16 %v254
        %v469 = vunpack.c.h.b16 %v254
        %v470 = vunpack.c.l.b16 %v255
        %v471 = vunpack.c.h.b16 %v255
        %v472 = vunpack.c.l.b16 %v256
        %v473 = vunpack.c.h.b16 %v256
        %v474 = vunpack.c.l.b16 %v257
        %v475 = vunpack.c.h.b16 %v257
        %v476 = vunpack.c.l.b16 %v258
        %v477 = vunpack.c.h.b16 %v258
        %v478 = vunpack.c.l.b16 %v259
        %v479 = vunpack.c.h.b16 %v259
        %v480 = vunpack.c.l.b16 %v260
        %v481 = vunpack.c.h.b16 %v260
        %v482 = vunpack.c.l.b16 %v261
        %v483 = vunpack.c.h.b16 %v261
        %v484 = vunpack.c.l.b16 %v262
        %v485 = vunpack.c.h.b16 %v262
        %v486 = vunpack.c.l.b16 %v263
        %v487 = vunpack.c.h.b16 %v263
        %v488 = vunpack.c.l.b16 %v264
        %v489 = vunpack.c.h.b16 %v264
        %v490 = vunpack.c.l.b16 %v265
        %v491 = vunpack.c.h.b16 %v265
        %v492 = vunpack.c.l.b16 %v266
        %v493 = vunpack.c.h.b16 %v266
        %v494 = vunpack.c.l.b16 %v267
        %v495 = vunpack.c.h.b16 %v267
        %v496 = vunpack.c.l.b16 %v268
        %v497 = vunpack.c.h.b16 %v268
        %v498 = vunpack.c.l.b16 %v269
        %v499 = vunpack.c.h.b16 %v269
        %v500 = vunpack.c.l.b16 %v270
        %v501 = vunpack.c.h.b16 %v270
        %v502 = vunpack.c.l.b16 %v271
        %v503 = vunpack.c.h.b16 %v271
        %v504 = vunpack.c.l.b16 %v272
        %v505 = vunpack.c.h.b16 %v272
        %v506 = vunpack.c.l.b16 %v273
        %v507 = vunpack.c.h.b16 %v273
        %v508 = vunpack.c.l.b16 %v274
        %v509 = vunpack.c.h.b16 %v274
        %v510 = vunpack.c.l.b16 %v275
        %v511 = vunpack.c.h.b16 %v275
        %v512 = vunpack.c.l.b16 %v276
        %v513 = vunpack.c.h.b16 %v276
        %v514 = vunpack.c.l.b16 %v277
        %v515 = vunpack.c.h.b16 %v277
        %v516 = vunpack.c.l.b16 %v278
        %v517 = vunpack.c.h.b16 %v278
        %v518 = vunpack.c.l.b16 %v279
        %v519 = vunpack.c.h.b16 %v279
        %v520 = vunpack.c.l.b16 %v280
        %v521 = vunpack.c.h.b16 %v280
        %v522 = vunpack.c.l.b16 %v281
        %v523 = vunpack.c.h.b16 %v281
        %v524 = vunpack.c.l.b16 %v282
        %v525 = vunpack.c.h.b16 %v282
        %v526 = vunpack.c.l.b16 %v283
        %v527 = vunpack.c.h.b16 %v283
        %v528 = vunpack.c.l.b16 %v284
        %v529 = vunpack.c.h.b16 %v284
        %v530 = vunpack.c.l.b16 %v285
        %v531 = vunpack.c.h.b16 %v285
        %v532 = vunpack.c.l.b16 %v286
        %v533 = vunpack.c.h.b16 %v286
        %v534 = vunpack.c.l.b16 %v287
        %v535 = vunpack.c.h.b16 %v287
        %v536 = vunpack.c.l.b16 %v288
        %v537 = vunpack.c.h.b16 %v288
        %v538 = vpack.c.b16 %v414, %v410
        %v539 = vpack.c.b16 %v415, %v411
        %v540 = vpack.c.b16 %v416, %v412
        %v541 = vpack.c.b16 %v417, %v413
        %v542 = vpack.c.b16 %v422, %v418
        %v543 = vpack.c.b16 %v423, %v419
        %v544 = vpack.c.b16 %v424, %v420
        %v545 = vpack.c.b16 %v425, %v421
        %v546 = vpack.c.b16 %v430, %v426
        %v547 = vpack.c.b16 %v431, %v427
        %v548 = vpack.c.b16 %v432, %v428
        %v549 = vpack.c.b16 %v433, %v429
        %v550 = vpack.c.b16 %v438, %v434
        %v551 = vpack.c.b16 %v439, %v435
        %v552 = vpack.c.b16 %v440, %v436
        %v553 = vpack.c.b16 %v441, %v437
        %v554 = vpack.c.b16 %v446, %v442
        %v555 = vpack.c.b16 %v447, %v443
        %v556 = vpack.c.b16 %v448, %v444
        %v557 = vpack.c.b16 %v449, %v445
        %v558 = vpack.c.b16 %v454, %v450
        %v559 = vpack.c.b16 %v455, %v451
        %v560 = vpack.c.b16 %v456, %v452
        %v561 = vpack.c.b16 %v457, %v453
        %v562 = vpack.c.b16 %v462, %v458
        %v563 = vpack.c.b16 %v463, %v459
        %v564 = vpack.c.b16 %v464, %v460
        %v565 = vpack.c.b16 %v465, %v461
        %v566 = vpack.c.b16 %v470, %v466
        %v567 = vpack.c.b16 %v471, %v467
        %v568 = vpack.c.b16 %v472, %v468
        %v569 = vpack.c.b16 %v473, %v469
        %v570 = vpack.c.b16 %v478, %v474
        %v571 = vpack.c.b16 %v479, %v475
        %v572 = vpack.c.b16 %v480, %v476
        %v573 = vpack.c.b16 %v481, %v477
        %v574 = vpack.c.b16 %v486, %v482
        %v575 = vpack.c.b16 %v487, %v483
        %v576 = vpack.c.b16 %v488, %v484
        %v577 = vpack.c.b16 %v489, %v485
        %v578 = vpack.c.b16 %v494, %v490
        %v579 = vpack.c.b16 %v495, %v491
        %v580 = vpack.c.b16 %v496, %v492
        %v581 = vpack.c.b16 %v497, %v493
        %v582 = vpack.c.b16 %v502, %v498
        %v583 = vpack.c.b16 %v503, %v499
        %v584 = vpack.c.b16 %v504, %v500
        %v585 = vpack.c.b16 %v505, %v501
        %v586 = vpack.c.b16 %v510, %v506
        %v587 = vpack.c.b16 %v511, %v507
        %v588 = vpack.c.b16 %v512, %v508
        %v589 = vpack.c.b16 %v513, %v509
        %v590 = vpack.c.b16 %v518, %v514
        %v591 = vpack.c.b16 %v519, %v515
        %v592 = vpack.c.b16 %v520, %v516
        %v593 = vpack.c.b16 %v521, %v517
        %v594 = vpack.c.b16 %v526, %v522
        %v595 = vpack.c.b16 %v527, %v523
        %v596 = vpack.c.b16 %v528, %v524
        %v597 = vpack.c.b16 %v529, %v525
        %v598 = vpack.c.b16 %v534, %v530
        %v599 = vpack.c.b16 %v535, %v531
        %v600 = vpack.c.b16 %v536, %v532
        %v601 = vpack.c.b16 %v537, %v533
        %v700 = vunpack.c.l.b16 %v289
        %v701 = vunpack.c.l.b16 %v290
        %v702 = vunpack.c.l.b16 %v291
        %v703 = vunpack.c.l.b16 %v292
        %v704 = vunpack.c.l.b16 %v293
        %v705 = vunpack.c.l.b16 %v294
        %v706 = vunpack.c.l.b16 %v295
        %v707 = vunpack.c.l.b16 %v296
        %v708 = vunpack.c.l.b16 %v297
        %v709 = vunpack.c.l.b16 %v298
        %v710 = vunpack.c.l.b16 %v299
        %v711 = vunpack.c.l.b16 %v300
        %v712 = vunpack.c.l.b16 %v301
        %v713 = vunpack.c.l.b16 %v302
        %v714 = vunpack.c.l.b16 %v303
        %v715 = vunpack.c.l.b16 %v304
        %v716 = vunpack.c.l.b16 %v305
        %v717 = vunpack.c.l.b16 %v306
        %v718 = vunpack.c.l.b16 %v307
        %v719 = vunpack.c.l.b16 %v308
        %v720 = vunpack.c.l.b16 %v309
        %v721 = vunpack.c.l.b16 %v310
        %v722 = vunpack.c.l.b16 %v311
        %v723 = vunpack.c.l.b16 %v312
        %v724 = vunpack.c.l.b16 %v313
        %v725 = vunpack.c.l.b16 %v314
        %v726 = vunpack.c.l.b16 %v315
        %v727 = vunpack.c.l.b16 %v316
        %v728 = vunpack.c.l.b16 %v317
        %v729 = vunpack.c.l.b16 %v318
        %v730 = vunpack.c.l.b16 %v319
        %v731 = vunpack.c.l.b16 %v320
        %v732 = vunpack.c.l.b16 %v321
        %v733 = vunpack.c.l.b16 %v322
        %v734 = vunpack.c.l.b16 %v323
        %v735 = vunpack.c.l.b16 %v324
        %v736 = vunpack.c.l.b16 %v325
        %v737 = vunpack.c.l.b16 %v326
        %v738 = vunpack.c.l.b16 %v327
        %v739 = vunpack.c.l.b16 %v328
        %v740 = vunpack.c.l.b16 %v329
        %v741 = vunpack.c.l.b16 %v330
        %v742 = vunpack.c.l.b16 %v331
        %v743 = vunpack.c.l.b16 %v332
        %v744 = vunpack.c.l.b16 %v333
        %v745 = vunpack.c.l.b16 %v334
        %v746 = vunpack.c.l.b16 %v335
        %v747 = vunpack.c.l.b16 %v336
        %v748 = vunpack.c.l.b16 %v337
        %v749 = vunpack.c.l.b16 %v338
        %v750 = vpack.c.b16 %v701, %v700
        %v751 = vpack.c.b16 %v703, %v702
        %v752 = vpack.c.b16 %v705, %v704
        %v753 = vpack.c.b16 %v707, %v706
        %v754 = vpack.c.b16 %v709, %v708
        %v755 = vpack.c.b16 %v711, %v710
        %v756 = vpack.c.b16 %v713, %v712
        %v757 = vpack.c.b16 %v715, %v714
        %v758 = vpack.c.b16 %v717, %v716
        %v759 = vpack.c.b16 %v719, %v718
        %v760 = vpack.c.b16 %v721, %v720
        %v761 = vpack.c.b16 %v723, %v722
        %v762 = vpack.c.b16 %v725, %v724
        %v763 = vpack.c.b16 %v727, %v726
        %v764 = vpack.c.b16 %v729, %v728
        %v765 = vpack.c.b16 %v731, %v730
        %v766 = vpack.c.b16 %v733, %v732
        %v767 = vpack.c.b16 %v735, %v734
        %v768 = vpack.c.b16 %v737, %v736
        %v769 = vpack.c.b16 %v739, %v738
        %v770 = vpack.c.b16 %v741, %v740
        %v771 = vpack.c.b16 %v743, %v742
        %v772 = vpack.c.b16 %v745, %v744
        %v773 = vpack.c.b16 %v747, %v746
        %v774 = vpack.c.b16 %v749, %v748
        %vm800 = vcmask 130048
        %v802 = vsel %vm800, %v541, 0
        %v805 = vsel %vm800, %v545, 0
        %v808 = vsel %vm800, %v549, 0
        %v811 = vsel %vm800, %v553, 0
        %v814 = vsel %vm800, %v557, 0
        %v817 = vsel %vm800, %v561, 0
        %v820 = vsel %vm800, %v565, 0
        %v823 = vsel %vm800, %v569, 0
        %v826 = vsel %vm800, %v573, 0
        %v829 = vsel %vm800, %v577, 0
        %v832 = vsel %vm800, %v581, 0
        %v835 = vsel %vm800, %v585, 0
        %v838 = vsel %vm800, %v589, 0
        %v841 = vsel %vm800, %v593, 0
        %v844 = vsel %vm800, %v597, 0
        %v847 = vsel %vm800, %v601, 0
        %849 = vmatprep.subr.bf16.mxu0 0
        %850 = vmatpush1.bf16.msra.mxu0 %v750
        %851 = vmatprep.subr.bf16.mxu0 0
        %852 = vmatpush1.bf16.msra.mxu0 %v751
        %853 = vmatprep.subr.bf16.mxu0 0
        %854 = vmatpush1.bf16.msra.mxu0 %v752
        %855 = vmatprep.subr.bf16.mxu0 0
        %856 = vmatpush1.bf16.msra.mxu0 %v753
        %857 = vmatprep.subr.bf16.mxu0 0
        %858 = vmatpush1.bf16.msra.mxu0 %v754
        %859 = vmatprep.subr.bf16.mxu0 0
        %860 = vmatpush1.bf16.msra.mxu0 %v755
        %861 = vmatprep.subr.bf16.mxu0 0
        %862 = vmatpush1.bf16.msra.mxu0 %v756
        %863 = vmatprep.subr.bf16.mxu0 0
        %864 = vmatpush1.bf16.msra.mxu0 %v757
        %865 = vmatprep.subr.bf16.mxu0 0
        %866 = vmatpush1.bf16.msra.mxu0 %v758
        %867 = vmatprep.subr.bf16.mxu0 0
        %868 = vmatpush1.bf16.msra.mxu0 %v759
        %869 = vmatprep.subr.bf16.mxu0 0
        %870 = vmatpush1.bf16.msra.mxu0 %v760
        %871 = vmatprep.subr.bf16.mxu0 0
        %872 = vmatpush1.bf16.msra.mxu0 %v761
        %873 = vmatprep.subr.bf16.mxu0 0
        %874 = vmatpush1.bf16.msra.mxu0 %v762
        %875 = vmatprep.subr.bf16.mxu0 0
        %876 = vmatpush1.bf16.msra.mxu0 %v763
        %877 = vmatprep.subr.bf16.mxu0 0
        %878 = vmatpush1.bf16.msra.mxu0 %v764
        %879 = vmatprep.subr.bf16.mxu0 0
        %880 = vmatpush1.bf16.msra.mxu0 %v765
        %881 = vmatprep.mubr.bf16.mxu0 %v539
        %882 = vmatmul.mubr.bf16.gmra.mrb[0].mxu0 %v538
        %v883 = vpop.f32.mrb[0].mxu0
        %v884 = vadd.f32 %v344, %v883
        %v885 = vpop.f32.mrb[0].mxu0
        %v886 = vpop.f32.mrb[0].mxu0
        %v887 = vadd.f32 %v344, %v886
        %v888 = vpop.f32.mrb[0].mxu0
        %889 = vmatprep.mubr.bf16.mxu0 %v543
        %890 = vmatmul.mubr.bf16.gmra.mrb[0].mxu0 %v542
        %v891 = vpop.f32.mrb[0].mxu0
        %v892 = vadd.f32 %v344, %v891
        %v893 = vpop.f32.mrb[0].mxu0
        %v894 = vpop.f32.mrb[0].mxu0
        %v895 = vadd.f32 %v344, %v894
        %v896 = vpop.f32.mrb[0].mxu0
        %897 = vmatprep.mubr.bf16.mxu0 %v547
        %898 = vmatmul.mubr.bf16.gmra.mrb[0].mxu0 %v546
        %v899 = vpop.f32.mrb[0].mxu0
        %v900 = vadd.f32 %v344, %v899
        %v901 = vpop.f32.mrb[0].mxu0
        %v902 = vpop.f32.mrb[0].mxu0
        %v903 = vadd.f32 %v344, %v902
        %v904 = vpop.f32.mrb[0].mxu0
        %905 = vmatprep.mubr.bf16.mxu0 %v551
        %906 = vmatmul.mubr.bf16.gmra.mrb[0].mxu0 %v550
        %v907 = vpop.f32.mrb[0].mxu0
        %v908 = vadd.f32 %v344, %v907
        %v909 = vpop.f32.mrb[0].mxu0
        %v910 = vpop.f32.mrb[0].mxu0
        %v911 = vadd.f32 %v344, %v910
        %v912 = vpop.f32.mrb[0].mxu0
        %913 = vmatprep.mubr.bf16.mxu0 %v555
        %914 = vmatmul.mubr.bf16.gmra.mrb[0].mxu0 %v554
        %v915 = vpop.f32.mrb[0].mxu0
        %v916 = vadd.f32 %v344, %v915
        %v917 = vpop.f32.mrb[0].mxu0
        %v918 = vpop.f32.mrb[0].mxu0
        %v919 = vadd.f32 %v344, %v918
        %v920 = vpop.f32.mrb[0].mxu0
        %921 = vmatprep.mubr.bf16.mxu0 %v559
        %922 = vmatmul.mubr.bf16.gmra.mrb[0].mxu0 %v558
        %v923 = vpop.f32.mrb[0].mxu0
        %v924 = vadd.f32 %v344, %v923
        %v925 = vpop.f32.mrb[0].mxu0
        %v926 = vpop.f32.mrb[0].mxu0
        %v927 = vadd.f32 %v344, %v926
        %v928 = vpop.f32.mrb[0].mxu0
        %929 = vmatprep.mubr.bf16.mxu0 %v563
        %930 = vmatmul.mubr.bf16.gmra.mrb[0].mxu0 %v562
        %v931 = vpop.f32.mrb[0].mxu0
        %v932 = vadd.f32 %v344, %v931
        %v933 = vpop.f32.mrb[0].mxu0
        %v934 = vpop.f32.mrb[0].mxu0
        %v935 = vadd.f32 %v344, %v934
        %v936 = vpop.f32.mrb[0].mxu0
        %937 = vmatprep.mubr.bf16.mxu0 %v567
        %938 = vmatmul.mubr.bf16.gmra.mrb[0].mxu0 %v566
        %v939 = vpop.f32.mrb[0].mxu0
        %v940 = vadd.f32 %v344, %v939
        %v941 = vpop.f32.mrb[0].mxu0
        %v942 = vpop.f32.mrb[0].mxu0
        %v943 = vadd.f32 %v344, %v942
        %v944 = vpop.f32.mrb[0].mxu0
        %945 = vmatprep.mubr.bf16.mxu0 %v571
        %946 = vmatmul.mubr.bf16.gmra.mrb[0].mxu0 %v570
        %v947 = vpop.f32.mrb[0].mxu0
        %v948 = vadd.f32 %v344, %v947
        %v949 = vpop.f32.mrb[0].mxu0
        %v950 = vpop.f32.mrb[0].mxu0
        %v951 = vadd.f32 %v344, %v950
        %v952 = vpop.f32.mrb[0].mxu0
        %953 = vmatprep.mubr.bf16.mxu0 %v575
        %954 = vmatmul.mubr.bf16.gmra.mrb[0].mxu0 %v574
        %v955 = vpop.f32.mrb[0].mxu0
        %v956 = vadd.f32 %v344, %v955
        %v957 = vpop.f32.mrb[0].mxu0
        %v958 = vpop.f32.mrb[0].mxu0
        %v959 = vadd.f32 %v344, %v958
        %v960 = vpop.f32.mrb[0].mxu0
        %961 = vmatprep.mubr.bf16.mxu0 %v579
        %962 = vmatmul.mubr.bf16.gmra.mrb[0].mxu0 %v578
        %v963 = vpop.f32.mrb[0].mxu0
        %v964 = vadd.f32 %v344, %v963
        %v965 = vpop.f32.mrb[0].mxu0
        %v966 = vpop.f32.mrb[0].mxu0
        %v967 = vadd.f32 %v344, %v966
        %v968 = vpop.f32.mrb[0].mxu0
        %969 = vmatprep.mubr.bf16.mxu0 %v583
        %970 = vmatmul.mubr.bf16.gmra.mrb[0].mxu0 %v582
        %v971 = vpop.f32.mrb[0].mxu0
        %v972 = vadd.f32 %v344, %v971
        %v973 = vpop.f32.mrb[0].mxu0
        %v974 = vpop.f32.mrb[0].mxu0
        %v975 = vadd.f32 %v344, %v974
        %v976 = vpop.f32.mrb[0].mxu0
        %977 = vmatprep.mubr.bf16.mxu0 %v587
        %978 = vmatmul.mubr.bf16.gmra.mrb[0].mxu0 %v586
        %v979 = vpop.f32.mrb[0].mxu0
        %v980 = vadd.f32 %v344, %v979
        %v981 = vpop.f32.mrb[0].mxu0
        %v982 = vpop.f32.mrb[0].mxu0
        %v983 = vadd.f32 %v344, %v982
        %v984 = vpop.f32.mrb[0].mxu0
        %985 = vmatprep.mubr.bf16.mxu0 %v591
        %986 = vmatmul.mubr.bf16.gmra.mrb[0].mxu0 %v590
        %v987 = vpop.f32.mrb[0].mxu0
        %v988 = vadd.f32 %v344, %v987
        %v989 = vpop.f32.mrb[0].mxu0
        %v990 = vpop.f32.mrb[0].mxu0
        %v991 = vadd.f32 %v344, %v990
        %v992 = vpop.f32.mrb[0].mxu0
        %993 = vmatprep.mubr.bf16.mxu0 %v595
        %994 = vmatmul.mubr.bf16.gmra.mrb[0].mxu0 %v594
        %v995 = vpop.f32.mrb[0].mxu0
        %v996 = vadd.f32 %v344, %v995
        %v997 = vpop.f32.mrb[0].mxu0
        %v998 = vpop.f32.mrb[0].mxu0
        %v999 = vadd.f32 %v344, %v998
        %v1000 = vpop.f32.mrb[0].mxu0
        %1001 = vmatprep.mubr.bf16.mxu0 %v599
        %1002 = vmatmul.mubr.bf16.gmra.mrb[0].mxu0 %v598
        %v1003 = vpop.f32.mrb[0].mxu0
        %v1004 = vadd.f32 %v344, %v1003
        %v1005 = vpop.f32.mrb[0].mxu0
        %v1006 = vpop.f32.mrb[0].mxu0
        %v1007 = vadd.f32 %v344, %v1006
        %v1008 = vpop.f32.mrb[0].mxu0
        %1009 = vdwg.mxu0
        %1010 = vmatprep.subr.bf16.mxu0 0
        %1011 = vmatpush1.bf16.msra.mxu0 %v766
        %1012 = vmatprep.subr.bf16.mxu0 0
        %1013 = vmatpush1.bf16.msra.mxu0 %v767
        %1014 = vmatprep.subr.bf16.mxu0 0
        %1015 = vmatpush1.bf16.msra.mxu0 %v768
        %1016 = vmatprep.subr.bf16.mxu0 0
        %1017 = vmatpush1.bf16.msra.mxu0 %v769
        %1018 = vmatprep.subr.bf16.mxu0 0
        %1019 = vmatpush1.bf16.msra.mxu0 %v770
        %1020 = vmatprep.subr.bf16.mxu0 0
        %1021 = vmatpush1.bf16.msra.mxu0 %v771
        %1022 = vmatprep.subr.bf16.mxu0 0
        %1023 = vmatpush1.bf16.msra.mxu0 %v772
        %1024 = vmatprep.subr.bf16.mxu0 0
        %1025 = vmatpush1.bf16.msra.mxu0 %v773
        %1026 = vmatprep.subr.bf16.mxu0 0
        %1027 = vmatpush1.bf16.msra.mxu0 %v774
        %1028 = vmatprep.subr.bf16.mxu0 0
        %1029 = vmatpush1.bf16.msra.mxu0 0
        %1030 = vmatprep.subr.bf16.mxu0 0
        %1031 = vmatpush1.bf16.msra.mxu0 0
        %1032 = vmatprep.subr.bf16.mxu0 0
        %1033 = vmatpush1.bf16.msra.mxu0 0
        %1034 = vmatprep.subr.bf16.mxu0 0
        %1035 = vmatpush1.bf16.msra.mxu0 0
        %1036 = vmatprep.subr.bf16.mxu0 0
        %1037 = vmatpush1.bf16.msra.mxu0 0
        %1038 = vmatprep.subr.bf16.mxu0 0
        %1039 = vmatpush1.bf16.msra.mxu0 0
        %1040 = vmatprep.subr.bf16.mxu0 0
        %1041 = vmatpush1.bf16.msra.mxu0 0
        %1042 = vmatprep.mubr.bf16.mxu0 %v802
        %1043 = vmatmul.mubr.bf16.gmra.mrb[0].mxu0 %v540
        %v1044 = vpop.f32.mrb[0].mxu0
        %v1045 = vadd.f32 %v884, %v1044
        %v1046 = vpop.f32.mrb[0].mxu0
        %v1047 = vpop.f32.mrb[0].mxu0
        %v1048 = vadd.f32 %v887, %v1047
        %v1049 = vpop.f32.mrb[0].mxu0
        %1050 = vmatprep.mubr.bf16.mxu0 %v805
        %1051 = vmatmul.mubr.bf16.gmra.mrb[0].mxu0 %v544
        %v1052 = vpop.f32.mrb[0].mxu0
        %v1053 = vadd.f32 %v892, %v1052
        %v1054 = vpop.f32.mrb[0].mxu0
        %v1055 = vpop.f32.mrb[0].mxu0
        %v1056 = vadd.f32 %v895, %v1055
        %v1057 = vpop.f32.mrb[0].mxu0
        %1058 = vmatprep.mubr.bf16.mxu0 %v808
        %1059 = vmatmul.mubr.bf16.gmra.mrb[0].mxu0 %v548
        %v1060 = vpop.f32.mrb[0].mxu0
        %v1061 = vadd.f32 %v900, %v1060
        %v1062 = vpop.f32.mrb[0].mxu0
        %v1063 = vpop.f32.mrb[0].mxu0
        %v1064 = vadd.f32 %v903, %v1063
        %v1065 = vpop.f32.mrb[0].mxu0
        %1066 = vmatprep.mubr.bf16.mxu0 %v811
        %1067 = vmatmul.mubr.bf16.gmra.mrb[0].mxu0 %v552
        %v1068 = vpop.f32.mrb[0].mxu0
        %v1069 = vadd.f32 %v908, %v1068
        %v1070 = vpop.f32.mrb[0].mxu0
        %v1071 = vpop.f32.mrb[0].mxu0
        %v1072 = vadd.f32 %v911, %v1071
        %v1073 = vpop.f32.mrb[0].mxu0
        %1074 = vmatprep.mubr.bf16.mxu0 %v814
        %1075 = vmatmul.mubr.bf16.gmra.mrb[0].mxu0 %v556
        %v1076 = vpop.f32.mrb[0].mxu0
        %v1077 = vadd.f32 %v916, %v1076
        %v1078 = vpop.f32.mrb[0].mxu0
        %v1079 = vpop.f32.mrb[0].mxu0
        %v1080 = vadd.f32 %v919, %v1079
        %v1081 = vpop.f32.mrb[0].mxu0
        %1082 = vmatprep.mubr.bf16.mxu0 %v817
        %1083 = vmatmul.mubr.bf16.gmra.mrb[0].mxu0 %v560
        %v1084 = vpop.f32.mrb[0].mxu0
        %v1085 = vadd.f32 %v924, %v1084
        %v1086 = vpop.f32.mrb[0].mxu0
        %v1087 = vpop.f32.mrb[0].mxu0
        %v1088 = vadd.f32 %v927, %v1087
        %v1089 = vpop.f32.mrb[0].mxu0
        %1090 = vmatprep.mubr.bf16.mxu0 %v820
        %1091 = vmatmul.mubr.bf16.gmra.mrb[0].mxu0 %v564
        %v1092 = vpop.f32.mrb[0].mxu0
        %v1093 = vadd.f32 %v932, %v1092
        %v1094 = vpop.f32.mrb[0].mxu0
        %v1095 = vpop.f32.mrb[0].mxu0
        %v1096 = vadd.f32 %v935, %v1095
        %v1097 = vpop.f32.mrb[0].mxu0
        %1098 = vmatprep.mubr.bf16.mxu0 %v823
        %1099 = vmatmul.mubr.bf16.gmra.mrb[0].mxu0 %v568
        %v1100 = vpop.f32.mrb[0].mxu0
        %v1101 = vadd.f32 %v940, %v1100
        %v1102 = vpop.f32.mrb[0].mxu0
        %v1103 = vpop.f32.mrb[0].mxu0
        %v1104 = vadd.f32 %v943, %v1103
        %v1105 = vpop.f32.mrb[0].mxu0
        %1106 = vmatprep.mubr.bf16.mxu0 %v826
        %1107 = vmatmul.mubr.bf16.gmra.mrb[0].mxu0 %v572
        %v1108 = vpop.f32.mrb[0].mxu0
        %v1109 = vadd.f32 %v948, %v1108
        %v1110 = vpop.f32.mrb[0].mxu0
        %v1111 = vpop.f32.mrb[0].mxu0
        %v1112 = vadd.f32 %v951, %v1111
        %v1113 = vpop.f32.mrb[0].mxu0
        %1114 = vmatprep.mubr.bf16.mxu0 %v829
        %1115 = vmatmul.mubr.bf16.gmra.mrb[0].mxu0 %v576
        %v1116 = vpop.f32.mrb[0].mxu0
        %v1117 = vadd.f32 %v956, %v1116
        %v1118 = vpop.f32.mrb[0].mxu0
        %v1119 = vpop.f32.mrb[0].mxu0
        %v1120 = vadd.f32 %v959, %v1119
        %v1121 = vpop.f32.mrb[0].mxu0
        %1122 = vmatprep.mubr.bf16.mxu0 %v832
        %1123 = vmatmul.mubr.bf16.gmra.mrb[0].mxu0 %v580
        %v1124 = vpop.f32.mrb[0].mxu0
        %v1125 = vadd.f32 %v964, %v1124
        %v1126 = vpop.f32.mrb[0].mxu0
        %v1127 = vpop.f32.mrb[0].mxu0
        %v1128 = vadd.f32 %v967, %v1127
        %v1129 = vpop.f32.mrb[0].mxu0
        %1130 = vmatprep.mubr.bf16.mxu0 %v835
        %1131 = vmatmul.mubr.bf16.gmra.mrb[0].mxu0 %v584
        %v1132 = vpop.f32.mrb[0].mxu0
        %v1133 = vadd.f32 %v972, %v1132
        %v1134 = vpop.f32.mrb[0].mxu0
        %v1135 = vpop.f32.mrb[0].mxu0
        %v1136 = vadd.f32 %v975, %v1135
        %v1137 = vpop.f32.mrb[0].mxu0
        %1138 = vmatprep.mubr.bf16.mxu0 %v838
        %1139 = vmatmul.mubr.bf16.gmra.mrb[0].mxu0 %v588
        %v1140 = vpop.f32.mrb[0].mxu0
        %v1141 = vadd.f32 %v980, %v1140
        %v1142 = vpop.f32.mrb[0].mxu0
        %v1143 = vpop.f32.mrb[0].mxu0
        %v1144 = vadd.f32 %v983, %v1143
        %v1145 = vpop.f32.mrb[0].mxu0
        %1146 = vmatprep.mubr.bf16.mxu0 %v841
        %1147 = vmatmul.mubr.bf16.gmra.mrb[0].mxu0 %v592
        %v1148 = vpop.f32.mrb[0].mxu0
        %v1149 = vadd.f32 %v988, %v1148
        %v1150 = vpop.f32.mrb[0].mxu0
        %v1151 = vpop.f32.mrb[0].mxu0
        %v1152 = vadd.f32 %v991, %v1151
        %v1153 = vpop.f32.mrb[0].mxu0
        %1154 = vmatprep.mubr.bf16.mxu0 %v844
        %1155 = vmatmul.mubr.bf16.gmra.mrb[0].mxu0 %v596
        %v1156 = vpop.f32.mrb[0].mxu0
        %v1157 = vadd.f32 %v996, %v1156
        %v1158 = vpop.f32.mrb[0].mxu0
        %v1159 = vpop.f32.mrb[0].mxu0
        %v1160 = vadd.f32 %v999, %v1159
        %v1161 = vpop.f32.mrb[0].mxu0
        %1162 = vmatprep.mubr.bf16.mxu0 %v847
        %1163 = vmatmul.mubr.bf16.gmra.mrb[0].mxu0 %v600
        %v1164 = vpop.f32.mrb[0].mxu0
        %v1165 = vadd.f32 %v1004, %v1164
        %v1166 = vpop.f32.mrb[0].mxu0
        %v1167 = vpop.f32.mrb[0].mxu0
        %v1168 = vadd.f32 %v1007, %v1167
        %v1169 = vpop.f32.mrb[0].mxu0
        %1170 = vdwg.mxu0
        %v1171 = vmax.f32 %v1045, 0.0
        %v1172 = vmax.f32 %v1048, 0.0
        %v1173 = vmax.f32 %v1053, 0.0
        %v1174 = vmax.f32 %v1056, 0.0
        %v1175 = vmax.f32 %v1061, 0.0
        %v1176 = vmax.f32 %v1064, 0.0
        %v1177 = vmax.f32 %v1069, 0.0
        %v1178 = vmax.f32 %v1072, 0.0
        %v1179 = vmax.f32 %v1077, 0.0
        %v1180 = vmax.f32 %v1080, 0.0
        %v1181 = vmax.f32 %v1085, 0.0
        %v1182 = vmax.f32 %v1088, 0.0
        %v1183 = vmax.f32 %v1093, 0.0
        %v1184 = vmax.f32 %v1096, 0.0
        %v1185 = vmax.f32 %v1101, 0.0
        %v1186 = vmax.f32 %v1104, 0.0
        %v1187 = vmax.f32 %v1109, 0.0
        %v1188 = vmax.f32 %v1112, 0.0
        %v1189 = vmax.f32 %v1117, 0.0
        %v1190 = vmax.f32 %v1120, 0.0
        %v1191 = vmax.f32 %v1125, 0.0
        %v1192 = vmax.f32 %v1128, 0.0
        %v1193 = vmax.f32 %v1133, 0.0
        %v1194 = vmax.f32 %v1136, 0.0
        %v1195 = vmax.f32 %v1141, 0.0
        %v1196 = vmax.f32 %v1144, 0.0
        %v1197 = vmax.f32 %v1149, 0.0
        %v1198 = vmax.f32 %v1152, 0.0
        %v1199 = vmax.f32 %v1157, 0.0
        %v1200 = vmax.f32 %v1160, 0.0
        %v1201 = vmax.f32 %v1165, 0.0
        %v1202 = vmax.f32 %v1168, 0.0
        %v1203 = vld [vmem:[%s3] sm:$0xff]
        %v1204 = vld [vmem:[%s3 + $0x8] sm:$0xff]
        %v1205 = vld [vmem:[%s3 + $0x10] sm:$0xff]
        %v1206 = vld [vmem:[%s3 + $0x18] sm:$0xff]
        %v1207 = vld [vmem:[%s3 + $0x20] sm:$0xff]
        %v1208 = vld [vmem:[%s3 + $0x28] sm:$0xff]
        %v1209 = vld [vmem:[%s3 + $0x30] sm:$0xff]
        %v1210 = vld [vmem:[%s3 + $0x38] sm:$0xff]
        %v1211 = vld [vmem:[%s3 + $0x40] sm:$0xff]
        %v1212 = vld [vmem:[%s3 + $0x48] sm:$0xff]
        %v1213 = vld [vmem:[%s3 + $0x50] sm:$0xff]
        %v1214 = vld [vmem:[%s3 + $0x58] sm:$0xff]
        %v1215 = vld [vmem:[%s3 + $0x60] sm:$0xff]
        %v1216 = vld [vmem:[%s3 + $0x68] sm:$0xff]
        %v1217 = vld [vmem:[%s3 + $0x70] sm:$0xff]
        %v1218 = vld [vmem:[%s3 + $0x78] sm:$0xff]
        %v1219 = vld [vmem:[%s3 + $0x80] sm:$0xff]
        %v1220 = vld [vmem:[%s3 + $0x88] sm:$0xff]
        %v1221 = vld [vmem:[%s3 + $0x90] sm:$0xff]
        %v1222 = vld [vmem:[%s3 + $0x98] sm:$0xff]
        %v1223 = vld [vmem:[%s3 + $0xa0] sm:$0xff]
        %v1224 = vld [vmem:[%s3 + $0xa8] sm:$0xff]
        %v1225 = vld [vmem:[%s3 + $0xb0] sm:$0xff]
        %v1226 = vld [vmem:[%s3 + $0xb8] sm:$0xff]
        %v1227 = vld [vmem:[%s3 + $0xc0] sm:$0xff]
        %v1228 = vld [vmem:[%s3 + $0xc8] sm:$0xff]
        %v1229 = vld [vmem:[%s3 + $0xd0] sm:$0xff]
        %v1230 = vld [vmem:[%s3 + $0xd8] sm:$0xff]
        %v1231 = vld [vmem:[%s3 + $0xe0] sm:$0xff]
        %v1232 = vld [vmem:[%s3 + $0xe8] sm:$0xff]
        %v1233 = vld [vmem:[%s3 + $0xf0] sm:$0xff]
        %v1234 = vld [vmem:[%s3 + $0xf8] sm:$0xff]
        %1236 = vset.pattern.permute.xlu0 0
        %1237 = vperm.xlu0 %1236, %v1171
        %v1238 = vpop.permute.xlu0 %1237
        %1241 = vset.pattern.permute.xlu0 0
        %1242 = vperm.xlu0 %1241, %v1172
        %v1243 = vpop.permute.xlu0 %1242
        %1246 = vset.pattern.permute.xlu0 0
        %1247 = vperm.xlu0 %1246, %v1173
        %v1248 = vpop.permute.xlu0 %1247
        %1251 = vset.pattern.permute.xlu0 0
        %1252 = vperm.xlu0 %1251, %v1174
        %v1253 = vpop.permute.xlu0 %1252
        %1256 = vset.pattern.permute.xlu0 0
        %1257 = vperm.xlu0 %1256, %v1175
        %v1258 = vpop.permute.xlu0 %1257
        %1261 = vset.pattern.permute.xlu0 0
        %1262 = vperm.xlu0 %1261, %v1176
        %v1263 = vpop.permute.xlu0 %1262
        %1266 = vset.pattern.permute.xlu0 0
        %1267 = vperm.xlu0 %1266, %v1177
        %v1268 = vpop.permute.xlu0 %1267
        %1271 = vset.pattern.permute.xlu0 0
        %1272 = vperm.xlu0 %1271, %v1178
        %v1273 = vpop.permute.xlu0 %1272
        %1276 = vset.pattern.permute.xlu0 0
        %1277 = vperm.xlu0 %1276, %v1179
        %v1278 = vpop.permute.xlu0 %1277
        %1281 = vset.pattern.permute.xlu0 0
        %1282 = vperm.xlu0 %1281, %v1180
        %v1283 = vpop.permute.xlu0 %1282
        %1286 = vset.pattern.permute.xlu0 0
        %1287 = vperm.xlu0 %1286, %v1181
        %v1288 = vpop.permute.xlu0 %1287
        %1291 = vset.pattern.permute.xlu0 0
        %1292 = vperm.xlu0 %1291, %v1182
        %v1293 = vpop.permute.xlu0 %1292
        %1296 = vset.pattern.permute.xlu0 0
        %1297 = vperm.xlu0 %1296, %v1183
        %v1298 = vpop.permute.xlu0 %1297
        %1301 = vset.pattern.permute.xlu0 0
        %1302 = vperm.xlu0 %1301, %v1184
        %v1303 = vpop.permute.xlu0 %1302
        %1306 = vset.pattern.permute.xlu0 0
        %1307 = vperm.xlu0 %1306, %v1185
        %v1308 = vpop.permute.xlu0 %1307
        %1311 = vset.pattern.permute.xlu0 0
        %1312 = vperm.xlu0 %1311, %v1186
        %v1313 = vpop.permute.xlu0 %1312
        %1316 = vset.pattern.permute.xlu0 0
        %1317 = vperm.xlu0 %1316, %v1187
        %v1318 = vpop.permute.xlu0 %1317
        %1321 = vset.pattern.permute.xlu0 0
        %1322 = vperm.xlu0 %1321, %v1188
        %v1323 = vpop.permute.xlu0 %1322
        %1326 = vset.pattern.permute.xlu0 0
        %1327 = vperm.xlu0 %1326, %v1189
        %v1328 = vpop.permute.xlu0 %1327
        %1331 = vset.pattern.permute.xlu0 0
        %1332 = vperm.xlu0 %1331, %v1190
        %v1333 = vpop.permute.xlu0 %1332
        %1336 = vset.pattern.permute.xlu0 0
        %1337 = vperm.xlu0 %1336, %v1191
        %v1338 = vpop.permute.xlu0 %1337
        %1341 = vset.pattern.permute.xlu0 0
        %1342 = vperm.xlu0 %1341, %v1192
        %v1343 = vpop.permute.xlu0 %1342
        %1346 = vset.pattern.permute.xlu0 0
        %1347 = vperm.xlu0 %1346, %v1193
        %v1348 = vpop.permute.xlu0 %1347
        %1351 = vset.pattern.permute.xlu0 0
        %1352 = vperm.xlu0 %1351, %v1194
        %v1353 = vpop.permute.xlu0 %1352
        %1356 = vset.pattern.permute.xlu0 0
        %1357 = vperm.xlu0 %1356, %v1195
        %v1358 = vpop.permute.xlu0 %1357
        %1361 = vset.pattern.permute.xlu0 0
        %1362 = vperm.xlu0 %1361, %v1196
        %v1363 = vpop.permute.xlu0 %1362
        %1366 = vset.pattern.permute.xlu0 0
        %1367 = vperm.xlu0 %1366, %v1197
        %v1368 = vpop.permute.xlu0 %1367
        %1371 = vset.pattern.permute.xlu0 0
        %1372 = vperm.xlu0 %1371, %v1198
        %v1373 = vpop.permute.xlu0 %1372
        %1376 = vset.pattern.permute.xlu0 0
        %1377 = vperm.xlu0 %1376, %v1199
        %v1378 = vpop.permute.xlu0 %1377
        %1381 = vset.pattern.permute.xlu0 0
        %1382 = vperm.xlu0 %1381, %v1200
        %v1383 = vpop.permute.xlu0 %1382
        %1386 = vset.pattern.permute.xlu0 0
        %1387 = vperm.xlu0 %1386, %v1201
        %v1388 = vpop.permute.xlu0 %1387
        %1391 = vset.pattern.permute.xlu0 0
        %1392 = vperm.xlu0 %1391, %v1202
        %v1393 = vpop.permute.xlu0 %1392
        %v1395 = vmul.f32 %v1238, %v1203
        %v1396 = vmul.f32 %v1243, %v1204
        %v1397 = vmul.f32 %v1248, %v1205
        %v1398 = vmul.f32 %v1253, %v1206
        %v1399 = vmul.f32 %v1258, %v1207
        %v1400 = vmul.f32 %v1263, %v1208
        %v1401 = vmul.f32 %v1268, %v1209
        %v1402 = vmul.f32 %v1273, %v1210
        %v1403 = vmul.f32 %v1278, %v1211
        %v1404 = vmul.f32 %v1283, %v1212
        %v1405 = vmul.f32 %v1288, %v1213
        %v1406 = vmul.f32 %v1293, %v1214
        %v1407 = vmul.f32 %v1298, %v1215
        %v1408 = vmul.f32 %v1303, %v1216
        %v1409 = vmul.f32 %v1308, %v1217
        %v1410 = vmul.f32 %v1313, %v1218
        %v1411 = vmul.f32 %v1318, %v1219
        %v1412 = vmul.f32 %v1323, %v1220
        %v1413 = vmul.f32 %v1328, %v1221
        %v1414 = vmul.f32 %v1333, %v1222
        %v1415 = vmul.f32 %v1338, %v1223
        %v1416 = vmul.f32 %v1343, %v1224
        %v1417 = vmul.f32 %v1348, %v1225
        %v1418 = vmul.f32 %v1353, %v1226
        %v1419 = vmul.f32 %v1358, %v1227
        %v1420 = vmul.f32 %v1363, %v1228
        %v1421 = vmul.f32 %v1368, %v1229
        %v1422 = vmul.f32 %v1373, %v1230
        %v1423 = vmul.f32 %v1378, %v1231
        %v1424 = vmul.f32 %v1383, %v1232
        %v1425 = vmul.f32 %v1388, %v1233
        %v1426 = vmul.f32 %v1393, %v1234
        %vm1427 = vcmask 80896
        %v1428 = vsel %vm1427, %v1395, 0.0
        %v1429 = vsel %vm1427, %v1396, 0.0
        %v1430 = vadd.f32 %v1428, %v1429
        %v1431 = vsel %vm1427, %v1397, 0.0
        %v1432 = vadd.f32 %v1430, %v1431
        %v1433 = vsel %vm1427, %v1398, 0.0
        %v1434 = vadd.f32 %v1432, %v1433
        %v1435 = vsel %vm1427, %v1399, 0.0
        %v1436 = vadd.f32 %v1434, %v1435
        %v1437 = vsel %vm1427, %v1400, 0.0
        %v1438 = vadd.f32 %v1436, %v1437
        %v1439 = vsel %vm1427, %v1401, 0.0
        %v1440 = vadd.f32 %v1438, %v1439
        %v1441 = vsel %vm1427, %v1402, 0.0
        %v1442 = vadd.f32 %v1440, %v1441
        %v1443 = vsel %vm1427, %v1403, 0.0
        %v1444 = vadd.f32 %v1442, %v1443
        %v1445 = vsel %vm1427, %v1404, 0.0
        %v1446 = vadd.f32 %v1444, %v1445
        %v1447 = vsel %vm1427, %v1405, 0.0
        %v1448 = vadd.f32 %v1446, %v1447
        %v1449 = vsel %vm1427, %v1406, 0.0
        %v1450 = vadd.f32 %v1448, %v1449
        %v1451 = vsel %vm1427, %v1407, 0.0
        %v1452 = vadd.f32 %v1450, %v1451
        %v1453 = vsel %vm1427, %v1408, 0.0
        %v1454 = vadd.f32 %v1452, %v1453
        %v1455 = vsel %vm1427, %v1409, 0.0
        %v1456 = vadd.f32 %v1454, %v1455
        %v1457 = vsel %vm1427, %v1410, 0.0
        %v1458 = vadd.f32 %v1456, %v1457
        %v1459 = vsel %vm1427, %v1411, 0.0
        %v1460 = vadd.f32 %v1458, %v1459
        %v1461 = vsel %vm1427, %v1412, 0.0
        %v1462 = vadd.f32 %v1460, %v1461
        %v1463 = vsel %vm1427, %v1413, 0.0
        %v1464 = vadd.f32 %v1462, %v1463
        %v1465 = vsel %vm1427, %v1414, 0.0
        %v1466 = vadd.f32 %v1464, %v1465
        %v1467 = vsel %vm1427, %v1415, 0.0
        %v1468 = vadd.f32 %v1466, %v1467
        %v1469 = vsel %vm1427, %v1416, 0.0
        %v1470 = vadd.f32 %v1468, %v1469
        %v1471 = vsel %vm1427, %v1417, 0.0
        %v1472 = vadd.f32 %v1470, %v1471
        %v1473 = vsel %vm1427, %v1418, 0.0
        %v1474 = vadd.f32 %v1472, %v1473
        %v1475 = vsel %vm1427, %v1419, 0.0
        %v1476 = vadd.f32 %v1474, %v1475
        %v1477 = vsel %vm1427, %v1420, 0.0
        %v1478 = vadd.f32 %v1476, %v1477
        %v1479 = vsel %vm1427, %v1421, 0.0
        %v1480 = vadd.f32 %v1478, %v1479
        %v1481 = vsel %vm1427, %v1422, 0.0
        %v1482 = vadd.f32 %v1480, %v1481
        %v1483 = vsel %vm1427, %v1423, 0.0
        %v1484 = vadd.f32 %v1482, %v1483
        %v1485 = vsel %vm1427, %v1424, 0.0
        %v1486 = vadd.f32 %v1484, %v1485
        %v1487 = vsel %vm1427, %v1425, 0.0
        %v1488 = vadd.f32 %v1486, %v1487
        %v1489 = vsel %vm1427, %v1426, 0.0
        %v1490 = vadd.f32 %v1488, %v1489
        %v1491 = vrot.slane %v1490, 4
        %v1492 = vadd.f32 %v1490, %v1491
        %v1493 = vrot.slane %v1492, 2
        %v1494 = vadd.f32 %v1492, %v1493
        %v1495 = vrot.slane %v1494, 1
        %v1496 = vadd.f32 %v1494, %v1495
        %v1497 = vld [vmem:[%s4] sm:$0x1]
        %v1498 = vadd.f32 %v1496, %v1497
        %vm1499 = vcmask 73728
        %1500 = vst.msk [vmem:[%s218] sm:$0x1] %vm1499, %v1498
        %s1501 = sand.u32 %s139, 1
        %s1502 = scalar_lea.sflag [#allocation4], %s1501
        %s1503 = sand.u32 %s139, 1
        %s1504 = scalar_lea.vmem [#allocation3], %s1503
        // Predicated region
        $region41: #{forward.5} parent=39 // pred_check
          %p1505 = pneg %p149
        $region42: #{forward.5} parent=39 // pred_check_branch
          %1507 = sbr.rel (%p1505) target = $region44
        $region43: #{forward.5} parent=39 // pred_region
          %s1509 = ssub.s32 16, 16
          %1510 = vsyncadd %s1502, %s1509
          %s1511 = smul.addr %s21, 16
          %s1512 = scalar_lea.hbm %s5, %s1511
          %s1514 = sshll.u32 %s1504, 4
          %s1515 = int_to_ptr.vmem [resolvable:$true] %s1514
          %1517 = dma.vmem_to_hbm [thread:$0]  %s1515, 16, %s1512, %s1502
        $region44: #{forward.5} parent=39 // pred_fallthru
          _
      $region40: #{forward.5} parent=5 // pred_fallthru
        _
      %p1518 = scmp.le.s32.totalorder 2, %s16
      // Predicated region
      $region45: #{forward.5} parent=5 // pred_check
        %p1519 = pneg %p1518
      $region46: #{forward.5} parent=5 // pred_check_branch
        %1521 = sbr.rel (%p1519) target = $region48
      $region47: #{forward.5} parent=5 // pred_region
        %s1522 = ssub.s32 %s16, 2
        // Predicated region
        $region49: #{forward.5} parent=47 // pred_check
          %p1523 = pneg %p155
        $region50: #{forward.5} parent=47 // pred_check_branch
          %1525 = sbr.rel (%p1523) target = $region52
        $region51: #{forward.5} parent=47 // pred_region
          %s1526 = sand.u32 %s140, 1
          %s1527 = scalar_lea.sflag [#allocation4], %s1526
          %s1528 = sand.u32 %s140, 1
          %s1529 = scalar_lea.vmem [#allocation3], %s1528
          %1530 = dma.done %s1527, 16
        $region52: #{forward.5} parent=47 // pred_fallthru
          _
      $region48: #{forward.5} parent=5 // pred_fallthru
        _
    $region6: #{forward.5} parent=1 // loop_footer
      %s20 = sadd.s32 1, %s16
    $region7: #{forward.5} parent=1 // loop_footer_branch
      %15 = sbr.rel target = $region3
    $region8: #{forward.5} parent=1 // loop_exit
      _
    %1531 = vsyncpa [#allocation4], 1
    %s1532 = scalar_lea.sflag [#allocation4], 1
    %1533 = vsyncpa %s1532, 1

</llo_original>
